<compile_context>
chip_gen: v6e
topology: v6e:2x2x1
jax: 0.10.0
libtpu: 0.0.40
codegen_flags: <defaults>
</compile_context>

<pallas_src>
import jax
import jax.numpy as jnp
import numpy as np
from jax.experimental import pallas as pl
from jax.experimental.pallas import tpu as pltpu

# ----------------------------- configuration (small shapes) -----------------------------
B = 1                                  # batch
INPUT_SHAPE = (1, 32, 32, 32)          # (C_in, H, W, D)
OUTPUT_SHAPE = (3, 32, 32, 32)         # (num_classes, H, W, D)
PATCH = (16, 16, 16)                   # patch_size
DOWN_RATE = (2, 2, 2)                  # down_size_rate
OVERLAP_R = 0.5
NUM_INFERENCE_PATCHES = 2              # num_infernce_patches (forward uses TEST mode)

NUM_CLASSES = OUTPUT_SHAPE[0]
FULL_SIZE = INPUT_SHAPE[1:]
GLOBAL_SIZE = tuple(int(s / r) for s, r in zip(INPUT_SHAPE[1:], DOWN_RATE))   # (16,16,16)
STRIDE = tuple(int(p * (1.0 - OVERLAP_R)) for p in PATCH)                     # (8,8,8)
PATCH_GRID = tuple((s - p) // st + 1 for s, p, st in zip(FULL_SIZE, PATCH, STRIDE))  # (3,3,3)

F1 = 8      # backbone hidden width
F2 = 8      # pre_score feature channels (feature_shapes[-2][0])
NGLOBAL_VOX = int(np.prod(GLOBAL_SIZE))   # 4096
NPATCH_VOX = int(np.prod(PATCH))          # 4096
LANE = 128


# ----------------------------- generation-aware grid sizing -----------------------------
def _tc_parallel_blocks():
    """2-way voxel split only on v7x (2 TensorCores / chip).  On v5e / v6e the grid is a
    serial loop on one TC, so one full-slab block is strictly faster."""
    try:
        kind = jax.devices()[0].device_kind.lower()
        if "v7" in kind or "7x" in kind:
            return 2
    except Exception:
        pass
    return 1


NBLK_HW = _tc_parallel_blocks()


def _pick_nblk(m):
    """Split the voxel-tile axis (length m, units of 128-lane rows) across TCs only when
    each block stays (8,128)-aligned."""
    if NBLK_HW > 1 and m % NBLK_HW == 0 and (m // NBLK_HW) % 8 == 0:
        return NBLK_HW
    return 1


_SMEM_SPEC = pl.BlockSpec(memory_space=pltpu.MemorySpace.SMEM)


# ----------------------------- Pallas kernels -----------------------------
def _mix(w_ref, b_ref, xs, cout, cin, relu):
    """Pointwise (1x1x1) channel mix on channel-major (m,128) slabs.
    Weights/biases live in SMEM -> scalar-broadcast FMAs on the VPU (no MXU)."""
    outs = []
    for co in range(cout):
        acc = xs[0] * w_ref[co, 0] + b_ref[co]
        for ci in range(1, cin):
            acc = acc + xs[ci] * w_ref[co, ci]
        if relu:
            acc = jnp.maximum(acc, 0.0)
        outs.append(acc)
    return outs


def _make_global_kernel(cin):
    def kernel(x_ref, w1_ref, b1_ref, w2_ref, b2_ref, w3_ref, b3_ref,
               pre_ref, logit_ref, bg_ref):
        """Fused global backbone: conv->relu, conv->relu, conv + background mask
        (argmax over channels == 0) in one pass over the voxel slab."""
        xs = [x_ref[ci] for ci in range(cin)]                     # cin x (m,128)
        h1 = _mix(w1_ref, b1_ref, xs, F1, cin, relu=True)
        h2 = _mix(w2_ref, b2_ref, h1, F2, F1, relu=True)          # = pre_score
        lg = _mix(w3_ref, b3_ref, h2, NUM_CLASSES, F2, relu=False)
        for c in range(F2):
            pre_ref[c] = h2[c]
        for c in range(NUM_CLASSES):
            logit_ref[c] = lg[c]
        # argmax == 0  <=>  channel-0 logit >= every other channel (first-index tie-break).
        # Pairwise VPU maxes over the 3 class slabs -- no cross-sublane XLU reduce.
        m_others = lg[1]
        for c in range(2, NUM_CLASSES):
            m_others = jnp.maximum(m_others, lg[c])
        bg_ref[0] = (lg[0] >= m_others).astype(jnp.float32)
    return kernel


def _make_local_kernel(cin):
    def kernel(xv_ref, cs_ref, w1_ref, b1_ref, w2_ref, b2_ref, w3_ref, b3_ref,
               wg_ref, wp_ref, ba_ref, plog_ref, fused_ref):
        """Fused local backbone + LearnablePatchAgg, all sampled patches flattened into
        the voxel/lane axis.  [canvas ; patch_logit] concat folded into split weights."""
        xs = [xv_ref[ci] for ci in range(cin)]
        h1 = _mix(w1_ref, b1_ref, xs, F1, cin, relu=True)
        h2 = _mix(w2_ref, b2_ref, h1, F2, F1, relu=True)
        lg = _mix(w3_ref, b3_ref, h2, NUM_CLASSES, F2, relu=False)
        cs = [cs_ref[c] for c in range(NUM_CLASSES)]
        for c in range(NUM_CLASSES):
            plog_ref[c] = lg[c]
        for co in range(NUM_CLASSES):
            acc = cs[0] * wg_ref[co, 0] + ba_ref[co]
            for j in range(1, NUM_CLASSES):
                acc = acc + cs[j] * wg_ref[co, j]
            for j in range(NUM_CLASSES):
                acc = acc + lg[j] * wp_ref[co, j]
            fused_ref[co] = acc
    return kernel


# ----------------------------- Pallas wrappers -----------------------------
def global_backbone_and_bgmask(params, global_vol):
    """global_vol: (B, Cin, Hg, Wg, Dg) -> pre_score (B,F2,...), logit (B,C,...), bg (B,1,...)."""
    bsz, cin = global_vol.shape[:2]
    n = bsz * NGLOBAL_VOX
    m = n // LANE
    # channel-major dense tiles: (C, m, 128) -- every load/store is a full vreg.
    x3 = jnp.transpose(global_vol, (1, 0, 2, 3, 4)).reshape(cin, m, LANE)
    nblk = _pick_nblk(m)
    mb = m // nblk
    w1, b1 = params["g1"]; w2, b2 = params["g2"]; w3, b3 = params["g3"]

    pre, logit, bg = pl.pallas_call(
        _make_global_kernel(cin),
        out_shape=(jax.ShapeDtypeStruct((F2, m, LANE), jnp.float32),
                   jax.ShapeDtypeStruct((NUM_CLASSES, m, LANE), jnp.float32),
                   jax.ShapeDtypeStruct((1, m, LANE), jnp.float32)),
        grid=(nblk,),
        in_specs=[
            pl.BlockSpec((cin, mb, LANE), lambda i: (0, i, 0)),
            _SMEM_SPEC, _SMEM_SPEC,      # w1, b1  (scalar-read weights in SMEM)
            _SMEM_SPEC, _SMEM_SPEC,      # w2, b2
            _SMEM_SPEC, _SMEM_SPEC,      # w3, b3
        ],
        out_specs=(
            pl.BlockSpec((F2, mb, LANE), lambda i: (0, i, 0)),
            pl.BlockSpec((NUM_CLASSES, mb, LANE), lambda i: (0, i, 0)),
            pl.BlockSpec((1, mb, LANE), lambda i: (0, i, 0)),
        ),
        compiler_params=pltpu.CompilerParams(dimension_semantics=("parallel",)),
    )(x3, w1, b1, w2, b2, w3, b3)

    def unflat(y, c):
        return jnp.transpose(y.reshape(c, bsz, *GLOBAL_SIZE), (1, 0, 2, 3, 4))

    return unflat(pre, F2), unflat(logit, NUM_CLASSES), unflat(bg, 1)


def local_backbone_and_agg(params, patch_vols, canvas_slices):
    """patch_vols: (P, Cin)+PATCH, canvas_slices: (P, C)+PATCH ->
       (patch_logits (P,C)+PATCH, fused_patches (P,C)+PATCH) in one launch; all P patches
       are flattened into the voxel/lane axis (no size-1 leading grid blocks)."""
    p, cin = patch_vols.shape[:2]
    n = p * NPATCH_VOX
    m = n // LANE
    xv = jnp.transpose(patch_vols, (1, 0, 2, 3, 4)).reshape(cin, m, LANE)
    cs = jnp.transpose(canvas_slices, (1, 0, 2, 3, 4)).reshape(NUM_CLASSES, m, LANE)
    nblk = _pick_nblk(m)
    mb = m // nblk
    w1, b1 = params["l1"]; w2, b2 = params["l2"]; w3, b3 = params["l3"]
    wa, ba = params["agg"]
    wg, wp = wa[:, :NUM_CLASSES], wa[:, NUM_CLASSES:]     # split fused-concat weight

    plog, fused = pl.pallas_call(
        _make_local_kernel(cin),
        out_shape=(jax.ShapeDtypeStruct((NUM_CLASSES, m, LANE), jnp.float32),
                   jax.ShapeDtypeStruct((NUM_CLASSES, m, LANE), jnp.float32)),
        grid=(nblk,),
        in_specs=[
            pl.BlockSpec((cin, mb, LANE), lambda i: (0, i, 0)),
            pl.BlockSpec((NUM_CLASSES, mb, LANE), lambda i: (0, i, 0)),
            _SMEM_SPEC, _SMEM_SPEC,      # w1, b1
            _SMEM_SPEC, _SMEM_SPEC,      # w2, b2
            _SMEM_SPEC, _SMEM_SPEC,      # w3, b3
            _SMEM_SPEC, _SMEM_SPEC,      # wg, wp
            _SMEM_SPEC,                  # ba
        ],
        out_specs=(
            pl.BlockSpec((NUM_CLASSES, mb, LANE), lambda i: (0, i, 0)),
            pl.BlockSpec((NUM_CLASSES, mb, LANE), lambda i: (0, i, 0)),
        ),
        compiler_params=pltpu.CompilerParams(dimension_semantics=("parallel",)),
    )(xv, cs, w1, b1, w2, b2, w3, b3, wg, wp, ba)

    def unflat(y):
        return jnp.transpose(y.reshape(NUM_CLASSES, p, *PATCH), (1, 0, 2, 3, 4))

    return unflat(plog), unflat(fused)


# ----------------------------- plain-JAX glue -----------------------------
def resize_trilinear(x, size):
    # TODO(synk): torch F.interpolate(trilinear, align_corners=False) and
    # jax.image.resize('linear') use slightly different boundary handling.
    return jax.image.resize(x, x.shape[:2] + tuple(size), method="linear")


def resize_nearest(x, size):
    return jax.image.resize(x.astype(jnp.float32), x.shape[:2] + tuple(size), method="nearest")


def feature_to_logit(params, pre_score):
    # Only 27 voxels (PATCH_GRID = 3x3x3): plain jnp -- a Pallas launch here would be
    # pure padding / launch overhead (per perf review).
    bsz = pre_score.shape[0]
    z = resize_trilinear(pre_score, PATCH_GRID)                 # (B, F2, 3,3,3)
    z2 = jnp.transpose(z, (0, 2, 3, 4, 1)).reshape(-1, F2)

    def lin(x, wb, relu=False):
        w, b = wb
        y = x @ w.T + b
        return jax.nn.relu(y) if relu else y

    z2 = lin(z2, params["s1"], relu=True)
    z2 = lin(z2, params["s2"], relu=True)
    z2 = lin(z2, params["s3"])
    z2 = jnp.minimum(lin(z2, params["s4"]), 70.0)               # torch.clip(..., max=70)
    return jnp.transpose(z2.reshape(bsz, *PATCH_GRID, 1), (0, 4, 1, 2, 3))


# ----------------------------- parameters (deterministic) -----------------------------
def _init_linear(key, cin, cout, scale=0.2):
    kw, kb = jax.random.split(key)
    w = scale * jax.random.normal(kw, (cout, cin), jnp.float32)   # (cout, cin): y = W @ X
    b = scale * jax.random.normal(kb, (cout,), jnp.float32)
    return w, b


def init_params(key):
    ks = jax.random.split(key, 12)
    p = {}
    # global backbone (FasterUNet stand-in: stack of 1x1x1 conv+ReLU channel mixers)
    # TODO(synk): the real FasterUNet is a multi-scale encoder/decoder with 3x3x3 convs;
    # only its channel-mixing hot path is modeled here.
    p["g1"] = _init_linear(ks[0], INPUT_SHAPE[0], F1)
    p["g2"] = _init_linear(ks[1], F1, F2)            # -> pre_score (feature_shapes[-2])
    p["g3"] = _init_linear(ks[2], F2, NUM_CLASSES)   # -> global segmentation logit
    # feature_to_logit: Interpolate -> ConvBnReLU(F2, F2//2, repeat=2, norm=None)
    #                               -> ConvBnReLU(F2//2, 1, repeat=2, act=None, norm=None)
    p["s1"] = _init_linear(ks[3], F2, F2 // 2)
    p["s2"] = _init_linear(ks[4], F2 // 2, F2 // 2)
    p["s3"] = _init_linear(ks[5], F2 // 2, 1)
    p["s4"] = _init_linear(ks[6], 1, 1)
    # local backbone (same stand-in structure)
    p["l1"] = _init_linear(ks[7], INPUT_SHAPE[0], F1)
    p["l2"] = _init_linear(ks[8], F1, F2)
    p["l3"] = _init_linear(ks[9], F2, NUM_CLASSES)
    # LearnablePatchAgg: learned 1x1x1 fusion of [canvas_slice ; patch_logit]
    # TODO(synk): real LearnablePatchAgg internals are not public; this models the
    # learned per-voxel patch/global fusion.
    p["agg"] = _init_linear(ks[10], 2 * NUM_CLASSES, NUM_CLASSES)
    return p


# ----------------------------- forward (TEST-mode common_step) -----------------------------
@jax.jit
def forward(params, vol, lab):
    # --- downsize_d: ResizeD(vol trilinear, lab nearest) to global_input_shape ---
    global_vol = resize_trilinear(vol, GLOBAL_SIZE)
    global_lab = resize_nearest(lab, GLOBAL_SIZE)

    # --- fused global backbone + background mask (one Pallas launch) ---
    pre_score, global_logit, bg = global_backbone_and_bgmask(params, global_vol)

    # --- feature_to_logit (objectness), clip max=70 ---
    objectness_logit = feature_to_logit(params, pre_score)       # (B, 1, *PATCH_GRID)

    # --- SampleTopKPatch (TEST mode): deterministic top-k, background suppressed ---
    # TODO(synk): TRAIN-mode Gumbel-softmax sampling of SampleTopKPatch is not modeled.
    bg_small = resize_nearest(bg, PATCH_GRID)                     # (B, 1, *PATCH_GRID)
    sample_logit = objectness_logit                               # returned as 'score'
    sel_score = (objectness_logit - 1e4 * bg_small).reshape(B, -1)
    _, topk_idx = jax.lax.top_k(sel_score, NUM_INFERENCE_PATCHES)

    # --- upsample global logit to full resolution as the aggregation canvas ---
    agg_canvas = resize_trilinear(global_logit, FULL_SIZE)        # (B, C, H, W, D)

    # --- gather patch volumes / labels / canvas slices: single vmapped dynamic_slice ---
    flat = topk_idx.reshape(-1)                                   # (B*K,)
    iz = flat // (PATCH_GRID[1] * PATCH_GRID[2])
    jz = (flat // PATCH_GRID[2]) % PATCH_GRID[1]
    kz = flat % PATCH_GRID[2]
    sh, sw, sd = iz * STRIDE[0], jz * STRIDE[1], kz * STRIDE[2]
    bidx = jnp.repeat(jnp.arange(B, dtype=flat.dtype), NUM_INFERENCE_PATCHES)

    def make_gather(src):
        csz = src.shape[1]

        def g(b, h, w, d):
            return jax.lax.dynamic_slice(src, (b, 0, h, w, d), (1, csz) + PATCH)[0]

        return jax.vmap(g)

    patch_vols = make_gather(vol)(bidx, sh, sw, sd)               # (B*K, Cin)+PATCH
    patch_labs = make_gather(lab)(bidx, sh, sw, sd)               # (B*K, 1)+PATCH
    canvas_slices = make_gather(agg_canvas)(bidx, sh, sw, sd)     # (B*K, C)+PATCH

    # --- fused local backbone + learnable patch aggregation (one batched launch) ---
    patch_logits, fused_patches = local_backbone_and_agg(params, patch_vols, canvas_slices)

    # --- paste fused patches back onto the canvas ---
    # TODO(synk): overlapping patches are pasted last-writer-wins from a shared
    # pre-fusion canvas; the reference LearnablePatchAgg overlap blending is not public.
    # TODO(synk): the K=2 paste writes could be fused into a single scatter / Pallas
    # paste kernel with scalar-prefetched starts + input_output_aliases.
    agg = agg_canvas
    for idx in range(B * NUM_INFERENCE_PATCHES):
        agg = jax.lax.dynamic_update_slice(
            agg, fused_patches[idx][None], (bidx[idx], 0, sh[idx], sw[idx], sd[idx]))

    return {
        "vol": vol,
        "lab": lab,
        "logit": agg,                                   # aggregated logit (B, C, H, W, D)
        "patch_vol": patch_vols,
        "patch_lab": patch_labs,
        "patch_logit": patch_logits,
        "global_vol": global_vol,
        "global_lab": global_lab,
        "global_logit": global_logit,
        "score": sample_logit,
    }


# ----------------------------- main -----------------------------
if __name__ == "__main__":
    key = jax.random.PRNGKey(0)
    kp, kv, kl = jax.random.split(key, 3)
    params = init_params(kp)

    vol = jax.random.normal(kv, (B,) + INPUT_SHAPE, jnp.float32)           # (1, 1, 32, 32, 32)
    lab = jax.random.randint(kl, (B, 1) + FULL_SIZE, 0, NUM_CLASSES).astype(jnp.float32)

    out = forward(params, vol, lab)
    jax.block_until_ready(out)

    assert out["logit"].shape == (B, NUM_CLASSES) + FULL_SIZE
    assert out["global_logit"].shape == (B, NUM_CLASSES) + GLOBAL_SIZE
    assert out["patch_logit"].shape == (B * NUM_INFERENCE_PATCHES, NUM_CLASSES) + PATCH
    assert out["score"].shape == (B, 1) + PATCH_GRID
    print("KERNEL_OK")
</pallas_src>

<mosaic_0001>
module attributes {stable_mosaic.version = 11 : i64} {
  func.func @kernel(%arg0: i32, %arg1: memref<1x32x128xf32, #tpu.memory_space<vmem>>, %arg2: memref<8x1xf32, #tpu.memory_space<smem>>, %arg3: memref<8xf32, #tpu.memory_space<smem>>, %arg4: memref<8x8xf32, #tpu.memory_space<smem>>, %arg5: memref<8xf32, #tpu.memory_space<smem>>, %arg6: memref<3x8xf32, #tpu.memory_space<smem>>, %arg7: memref<3xf32, #tpu.memory_space<smem>>, %arg8: memref<8x32x128xf32, #tpu.memory_space<vmem>>, %arg9: memref<3x32x128xf32, #tpu.memory_space<vmem>>, %arg10: memref<1x32x128xf32, #tpu.memory_space<vmem>>) attributes {dimension_semantics = [#tpu.dimension_semantics<parallel>], iteration_bounds = array<i64: 1>, scalar_prefetch = 0 : i64, scratch_operands = 0 : i64, tpu.core_type = #tpu.core_type<tc>, window_params = [{transform_indices = @transform_0, window_bounds = array<i64: 1, 32, 128>}, {transform_indices = @transform_1, window_bounds = array<i64: 8, 1>}, {transform_indices = @transform_2, window_bounds = array<i64: 8>}, {transform_indices = @transform_3, window_bounds = array<i64: 8, 8>}, {transform_indices = @transform_4, window_bounds = array<i64: 8>}, {transform_indices = @transform_5, window_bounds = array<i64: 3, 8>}, {transform_indices = @transform_6, window_bounds = array<i64: 3>}, {transform_indices = @transform_7, window_bounds = array<i64: 8, 32, 128>}, {transform_indices = @transform_8, window_bounds = array<i64: 3, 32, 128>}, {transform_indices = @transform_9, window_bounds = array<i64: 1, 32, 128>}]} {
    %c0 = arith.constant 0 : index
    %c0_0 = arith.constant 0 : index
    %c0_1 = arith.constant 0 : index
    %0 = vector.load %arg1[%c0, %c0_0, %c0_1] : memref<1x32x128xf32, #tpu.memory_space<vmem>>, vector<1x32x128xf32>
    %1 = vector.shape_cast %0 : vector<1x32x128xf32> to vector<32x128xf32>
    %c0_2 = arith.constant 0 : index
    %c0_3 = arith.constant 0 : index
    %2 = memref.load %arg2[%c0_2, %c0_3] : memref<8x1xf32, #tpu.memory_space<smem>>
    %3 = vector.broadcast %2 : f32 to vector<32x128xf32>
    %4 = arith.mulf %1, %3 : vector<32x128xf32>
    %c0_4 = arith.constant 0 : index
    %5 = memref.load %arg3[%c0_4] : memref<8xf32, #tpu.memory_space<smem>>
    %6 = vector.broadcast %5 : f32 to vector<32x128xf32>
    %7 = arith.addf %4, %6 : vector<32x128xf32>
    %cst = arith.constant 0.000000e+00 : f32
    %8 = vector.broadcast %cst : f32 to vector<32x128xf32>
    %9 = arith.maximumf %7, %8 : vector<32x128xf32>
    %c1 = arith.constant 1 : index
    %c0_5 = arith.constant 0 : index
    %10 = memref.load %arg2[%c1, %c0_5] : memref<8x1xf32, #tpu.memory_space<smem>>
    %11 = vector.broadcast %10 : f32 to vector<32x128xf32>
    %12 = arith.mulf %1, %11 : vector<32x128xf32>
    %c1_6 = arith.constant 1 : index
    %13 = memref.load %arg3[%c1_6] : memref<8xf32, #tpu.memory_space<smem>>
    %14 = vector.broadcast %13 : f32 to vector<32x128xf32>
    %15 = arith.addf %12, %14 : vector<32x128xf32>
    %cst_7 = arith.constant 0.000000e+00 : f32
    %16 = vector.broadcast %cst_7 : f32 to vector<32x128xf32>
    %17 = arith.maximumf %15, %16 : vector<32x128xf32>
    %c2 = arith.constant 2 : index
    %c0_8 = arith.constant 0 : index
    %18 = memref.load %arg2[%c2, %c0_8] : memref<8x1xf32, #tpu.memory_space<smem>>
    %19 = vector.broadcast %18 : f32 to vector<32x128xf32>
    %20 = arith.mulf %1, %19 : vector<32x128xf32>
    %c2_9 = arith.constant 2 : index
    %21 = memref.load %arg3[%c2_9] : memref<8xf32, #tpu.memory_space<smem>>
    %22 = vector.broadcast %21 : f32 to vector<32x128xf32>
    %23 = arith.addf %20, %22 : vector<32x128xf32>
    %cst_10 = arith.constant 0.000000e+00 : f32
    %24 = vector.broadcast %cst_10 : f32 to vector<32x128xf32>
    %25 = arith.maximumf %23, %24 : vector<32x128xf32>
    %c3 = arith.constant 3 : index
    %c0_11 = arith.constant 0 : index
    %26 = memref.load %arg2[%c3, %c0_11] : memref<8x1xf32, #tpu.memory_space<smem>>
    %27 = vector.broadcast %26 : f32 to vector<32x128xf32>
    %28 = arith.mulf %1, %27 : vector<32x128xf32>
    %c3_12 = arith.constant 3 : index
    %29 = memref.load %arg3[%c3_12] : memref<8xf32, #tpu.memory_space<smem>>
    %30 = vector.broadcast %29 : f32 to vector<32x128xf32>
    %31 = arith.addf %28, %30 : vector<32x128xf32>
    %cst_13 = arith.constant 0.000000e+00 : f32
    %32 = vector.broadcast %cst_13 : f32 to vector<32x128xf32>
    %33 = arith.maximumf %31, %32 : vector<32x128xf32>
    %c4 = arith.constant 4 : index
    %c0_14 = arith.constant 0 : index
    %34 = memref.load %arg2[%c4, %c0_14] : memref<8x1xf32, #tpu.memory_space<smem>>
    %35 = vector.broadcast %34 : f32 to vector<32x128xf32>
    %36 = arith.mulf %1, %35 : vector<32x128xf32>
    %c4_15 = arith.constant 4 : index
    %37 = memref.load %arg3[%c4_15] : memref<8xf32, #tpu.memory_space<smem>>
    %38 = vector.broadcast %37 : f32 to vector<32x128xf32>
    %39 = arith.addf %36, %38 : vector<32x128xf32>
    %cst_16 = arith.constant 0.000000e+00 : f32
    %40 = vector.broadcast %cst_16 : f32 to vector<32x128xf32>
    %41 = arith.maximumf %39, %40 : vector<32x128xf32>
    %c5 = arith.constant 5 : index
    %c0_17 = arith.constant 0 : index
    %42 = memref.load %arg2[%c5, %c0_17] : memref<8x1xf32, #tpu.memory_space<smem>>
    %43 = vector.broadcast %42 : f32 to vector<32x128xf32>
    %44 = arith.mulf %1, %43 : vector<32x128xf32>
    %c5_18 = arith.constant 5 : index
    %45 = memref.load %arg3[%c5_18] : memref<8xf32, #tpu.memory_space<smem>>
    %46 = vector.broadcast %45 : f32 to vector<32x128xf32>
    %47 = arith.addf %44, %46 : vector<32x128xf32>
    %cst_19 = arith.constant 0.000000e+00 : f32
    %48 = vector.broadcast %cst_19 : f32 to vector<32x128xf32>
    %49 = arith.maximumf %47, %48 : vector<32x128xf32>
    %c6 = arith.constant 6 : index
    %c0_20 = arith.constant 0 : index
    %50 = memref.load %arg2[%c6, %c0_20] : memref<8x1xf32, #tpu.memory_space<smem>>
    %51 = vector.broadcast %50 : f32 to vector<32x128xf32>
    %52 = arith.mulf %1, %51 : vector<32x128xf32>
    %c6_21 = arith.constant 6 : index
    %53 = memref.load %arg3[%c6_21] : memref<8xf32, #tpu.memory_space<smem>>
    %54 = vector.broadcast %53 : f32 to vector<32x128xf32>
    %55 = arith.addf %52, %54 : vector<32x128xf32>
    %cst_22 = arith.constant 0.000000e+00 : f32
    %56 = vector.broadcast %cst_22 : f32 to vector<32x128xf32>
    %57 = arith.maximumf %55, %56 : vector<32x128xf32>
    %c7 = arith.constant 7 : index
    %c0_23 = arith.constant 0 : index
    %58 = memref.load %arg2[%c7, %c0_23] : memref<8x1xf32, #tpu.memory_space<smem>>
    %59 = vector.broadcast %58 : f32 to vector<32x128xf32>
    %60 = arith.mulf %1, %59 : vector<32x128xf32>
    %c7_24 = arith.constant 7 : index
    %61 = memref.load %arg3[%c7_24] : memref<8xf32, #tpu.memory_space<smem>>
    %62 = vector.broadcast %61 : f32 to vector<32x128xf32>
    %63 = arith.addf %60, %62 : vector<32x128xf32>
    %cst_25 = arith.constant 0.000000e+00 : f32
    %64 = vector.broadcast %cst_25 : f32 to vector<32x128xf32>
    %65 = arith.maximumf %63, %64 : vector<32x128xf32>
    %c0_26 = arith.constant 0 : index
    %c0_27 = arith.constant 0 : index
    %66 = memref.load %arg4[%c0_26, %c0_27] : memref<8x8xf32, #tpu.memory_space<smem>>
    %67 = vector.broadcast %66 : f32 to vector<32x128xf32>
    %68 = arith.mulf %9, %67 : vector<32x128xf32>
    %c0_28 = arith.constant 0 : index
    %69 = memref.load %arg5[%c0_28] : memref<8xf32, #tpu.memory_space<smem>>
    %70 = vector.broadcast %69 : f32 to vector<32x128xf32>
    %71 = arith.addf %68, %70 : vector<32x128xf32>
    %c0_29 = arith.constant 0 : index
    %c1_30 = arith.constant 1 : index
    %72 = memref.load %arg4[%c0_29, %c1_30] : memref<8x8xf32, #tpu.memory_space<smem>>
    %73 = vector.broadcast %72 : f32 to vector<32x128xf32>
    %74 = arith.mulf %17, %73 : vector<32x128xf32>
    %75 = arith.addf %71, %74 : vector<32x128xf32>
    %c0_31 = arith.constant 0 : index
    %c2_32 = arith.constant 2 : index
    %76 = memref.load %arg4[%c0_31, %c2_32] : memref<8x8xf32, #tpu.memory_space<smem>>
    %77 = vector.broadcast %76 : f32 to vector<32x128xf32>
    %78 = arith.mulf %25, %77 : vector<32x128xf32>
    %79 = arith.addf %75, %78 : vector<32x128xf32>
    %c0_33 = arith.constant 0 : index
    %c3_34 = arith.constant 3 : index
    %80 = memref.load %arg4[%c0_33, %c3_34] : memref<8x8xf32, #tpu.memory_space<smem>>
    %81 = vector.broadcast %80 : f32 to vector<32x128xf32>
    %82 = arith.mulf %33, %81 : vector<32x128xf32>
    %83 = arith.addf %79, %82 : vector<32x128xf32>
    %c0_35 = arith.constant 0 : index
    %c4_36 = arith.constant 4 : index
    %84 = memref.load %arg4[%c0_35, %c4_36] : memref<8x8xf32, #tpu.memory_space<smem>>
    %85 = vector.broadcast %84 : f32 to vector<32x128xf32>
    %86 = arith.mulf %41, %85 : vector<32x128xf32>
    %87 = arith.addf %83, %86 : vector<32x128xf32>
    %c0_37 = arith.constant 0 : index
    %c5_38 = arith.constant 5 : index
    %88 = memref.load %arg4[%c0_37, %c5_38] : memref<8x8xf32, #tpu.memory_space<smem>>
    %89 = vector.broadcast %88 : f32 to vector<32x128xf32>
    %90 = arith.mulf %49, %89 : vector<32x128xf32>
    %91 = arith.addf %87, %90 : vector<32x128xf32>
    %c0_39 = arith.constant 0 : index
    %c6_40 = arith.constant 6 : index
    %92 = memref.load %arg4[%c0_39, %c6_40] : memref<8x8xf32, #tpu.memory_space<smem>>
    %93 = vector.broadcast %92 : f32 to vector<32x128xf32>
    %94 = arith.mulf %57, %93 : vector<32x128xf32>
    %95 = arith.addf %91, %94 : vector<32x128xf32>
    %c0_41 = arith.constant 0 : index
    %c7_42 = arith.constant 7 : index
    %96 = memref.load %arg4[%c0_41, %c7_42] : memref<8x8xf32, #tpu.memory_space<smem>>
    %97 = vector.broadcast %96 : f32 to vector<32x128xf32>
    %98 = arith.mulf %65, %97 : vector<32x128xf32>
    %99 = arith.addf %95, %98 : vector<32x128xf32>
    %cst_43 = arith.constant 0.000000e+00 : f32
    %100 = vector.broadcast %cst_43 : f32 to vector<32x128xf32>
    %101 = arith.maximumf %99, %100 : vector<32x128xf32>
    %c1_44 = arith.constant 1 : index
    %c0_45 = arith.constant 0 : index
    %102 = memref.load %arg4[%c1_44, %c0_45] : memref<8x8xf32, #tpu.memory_space<smem>>
    %103 = vector.broadcast %102 : f32 to vector<32x128xf32>
    %104 = arith.mulf %9, %103 : vector<32x128xf32>
    %c1_46 = arith.constant 1 : index
    %105 = memref.load %arg5[%c1_46] : memref<8xf32, #tpu.memory_space<smem>>
    %106 = vector.broadcast %105 : f32 to vector<32x128xf32>
    %107 = arith.addf %104, %106 : vector<32x128xf32>
    %c1_47 = arith.constant 1 : index
    %c1_48 = arith.constant 1 : index
    %108 = memref.load %arg4[%c1_47, %c1_48] : memref<8x8xf32, #tpu.memory_space<smem>>
    %109 = vector.broadcast %108 : f32 to vector<32x128xf32>
    %110 = arith.mulf %17, %109 : vector<32x128xf32>
    %111 = arith.addf %107, %110 : vector<32x128xf32>
    %c1_49 = arith.constant 1 : index
    %c2_50 = arith.constant 2 : index
    %112 = memref.load %arg4[%c1_49, %c2_50] : memref<8x8xf32, #tpu.memory_space<smem>>
    %113 = vector.broadcast %112 : f32 to vector<32x128xf32>
    %114 = arith.mulf %25, %113 : vector<32x128xf32>
    %115 = arith.addf %111, %114 : vector<32x128xf32>
    %c1_51 = arith.constant 1 : index
    %c3_52 = arith.constant 3 : index
    %116 = memref.load %arg4[%c1_51, %c3_52] : memref<8x8xf32, #tpu.memory_space<smem>>
    %117 = vector.broadcast %116 : f32 to vector<32x128xf32>
    %118 = arith.mulf %33, %117 : vector<32x128xf32>
    %119 = arith.addf %115, %118 : vector<32x128xf32>
    %c1_53 = arith.constant 1 : index
    %c4_54 = arith.constant 4 : index
    %120 = memref.load %arg4[%c1_53, %c4_54] : memref<8x8xf32, #tpu.memory_space<smem>>
    %121 = vector.broadcast %120 : f32 to vector<32x128xf32>
    %122 = arith.mulf %41, %121 : vector<32x128xf32>
    %123 = arith.addf %119, %122 : vector<32x128xf32>
    %c1_55 = arith.constant 1 : index
    %c5_56 = arith.constant 5 : index
    %124 = memref.load %arg4[%c1_55, %c5_56] : memref<8x8xf32, #tpu.memory_space<smem>>
    %125 = vector.broadcast %124 : f32 to vector<32x128xf32>
    %126 = arith.mulf %49, %125 : vector<32x128xf32>
    %127 = arith.addf %123, %126 : vector<32x128xf32>
    %c1_57 = arith.constant 1 : index
    %c6_58 = arith.constant 6 : index
    %128 = memref.load %arg4[%c1_57, %c6_58] : memref<8x8xf32, #tpu.memory_space<smem>>
    %129 = vector.broadcast %128 : f32 to vector<32x128xf32>
    %130 = arith.mulf %57, %129 : vector<32x128xf32>
    %131 = arith.addf %127, %130 : vector<32x128xf32>
    %c1_59 = arith.constant 1 : index
    %c7_60 = arith.constant 7 : index
    %132 = memref.load %arg4[%c1_59, %c7_60] : memref<8x8xf32, #tpu.memory_space<smem>>
    %133 = vector.broadcast %132 : f32 to vector<32x128xf32>
    %134 = arith.mulf %65, %133 : vector<32x128xf32>
    %135 = arith.addf %131, %134 : vector<32x128xf32>
    %cst_61 = arith.constant 0.000000e+00 : f32
    %136 = vector.broadcast %cst_61 : f32 to vector<32x128xf32>
    %137 = arith.maximumf %135, %136 : vector<32x128xf32>
    %c2_62 = arith.constant 2 : index
    %c0_63 = arith.constant 0 : index
    %138 = memref.load %arg4[%c2_62, %c0_63] : memref<8x8xf32, #tpu.memory_space<smem>>
    %139 = vector.broadcast %138 : f32 to vector<32x128xf32>
    %140 = arith.mulf %9, %139 : vector<32x128xf32>
    %c2_64 = arith.constant 2 : index
    %141 = memref.load %arg5[%c2_64] : memref<8xf32, #tpu.memory_space<smem>>
    %142 = vector.broadcast %141 : f32 to vector<32x128xf32>
    %143 = arith.addf %140, %142 : vector<32x128xf32>
    %c2_65 = arith.constant 2 : index
    %c1_66 = arith.constant 1 : index
    %144 = memref.load %arg4[%c2_65, %c1_66] : memref<8x8xf32, #tpu.memory_space<smem>>
    %145 = vector.broadcast %144 : f32 to vector<32x128xf32>
    %146 = arith.mulf %17, %145 : vector<32x128xf32>
    %147 = arith.addf %143, %146 : vector<32x128xf32>
    %c2_67 = arith.constant 2 : index
    %c2_68 = arith.constant 2 : index
    %148 = memref.load %arg4[%c2_67, %c2_68] : memref<8x8xf32, #tpu.memory_space<smem>>
    %149 = vector.broadcast %148 : f32 to vector<32x128xf32>
    %150 = arith.mulf %25, %149 : vector<32x128xf32>
    %151 = arith.addf %147, %150 : vector<32x128xf32>
    %c2_69 = arith.constant 2 : index
    %c3_70 = arith.constant 3 : index
    %152 = memref.load %arg4[%c2_69, %c3_70] : memref<8x8xf32, #tpu.memory_space<smem>>
    %153 = vector.broadcast %152 : f32 to vector<32x128xf32>
    %154 = arith.mulf %33, %153 : vector<32x128xf32>
    %155 = arith.addf %151, %154 : vector<32x128xf32>
    %c2_71 = arith.constant 2 : index
    %c4_72 = arith.constant 4 : index
    %156 = memref.load %arg4[%c2_71, %c4_72] : memref<8x8xf32, #tpu.memory_space<smem>>
    %157 = vector.broadcast %156 : f32 to vector<32x128xf32>
    %158 = arith.mulf %41, %157 : vector<32x128xf32>
    %159 = arith.addf %155, %158 : vector<32x128xf32>
    %c2_73 = arith.constant 2 : index
    %c5_74 = arith.constant 5 : index
    %160 = memref.load %arg4[%c2_73, %c5_74] : memref<8x8xf32, #tpu.memory_space<smem>>
    %161 = vector.broadcast %160 : f32 to vector<32x128xf32>
    %162 = arith.mulf %49, %161 : vector<32x128xf32>
    %163 = arith.addf %159, %162 : vector<32x128xf32>
    %c2_75 = arith.constant 2 : index
    %c6_76 = arith.constant 6 : index
    %164 = memref.load %arg4[%c2_75, %c6_76] : memref<8x8xf32, #tpu.memory_space<smem>>
    %165 = vector.broadcast %164 : f32 to vector<32x128xf32>
    %166 = arith.mulf %57, %165 : vector<32x128xf32>
    %167 = arith.addf %163, %166 : vector<32x128xf32>
    %c2_77 = arith.constant 2 : index
    %c7_78 = arith.constant 7 : index
    %168 = memref.load %arg4[%c2_77, %c7_78] : memref<8x8xf32, #tpu.memory_space<smem>>
    %169 = vector.broadcast %168 : f32 to vector<32x128xf32>
    %170 = arith.mulf %65, %169 : vector<32x128xf32>
    %171 = arith.addf %167, %170 : vector<32x128xf32>
    %cst_79 = arith.constant 0.000000e+00 : f32
    %172 = vector.broadcast %cst_79 : f32 to vector<32x128xf32>
    %173 = arith.maximumf %171, %172 : vector<32x128xf32>
    %c3_80 = arith.constant 3 : index
    %c0_81 = arith.constant 0 : index
    %174 = memref.load %arg4[%c3_80, %c0_81] : memref<8x8xf32, #tpu.memory_space<smem>>
    %175 = vector.broadcast %174 : f32 to vector<32x128xf32>
    %176 = arith.mulf %9, %175 : vector<32x128xf32>
    %c3_82 = arith.constant 3 : index
    %177 = memref.load %arg5[%c3_82] : memref<8xf32, #tpu.memory_space<smem>>
    %178 = vector.broadcast %177 : f32 to vector<32x128xf32>
    %179 = arith.addf %176, %178 : vector<32x128xf32>
    %c3_83 = arith.constant 3 : index
    %c1_84 = arith.constant 1 : index
    %180 = memref.load %arg4[%c3_83, %c1_84] : memref<8x8xf32, #tpu.memory_space<smem>>
    %181 = vector.broadcast %180 : f32 to vector<32x128xf32>
    %182 = arith.mulf %17, %181 : vector<32x128xf32>
    %183 = arith.addf %179, %182 : vector<32x128xf32>
    %c3_85 = arith.constant 3 : index
    %c2_86 = arith.constant 2 : index
    %184 = memref.load %arg4[%c3_85, %c2_86] : memref<8x8xf32, #tpu.memory_space<smem>>
    %185 = vector.broadcast %184 : f32 to vector<32x128xf32>
    %186 = arith.mulf %25, %185 : vector<32x128xf32>
    %187 = arith.addf %183, %186 : vector<32x128xf32>
    %c3_87 = arith.constant 3 : index
    %c3_88 = arith.constant 3 : index
    %188 = memref.load %arg4[%c3_87, %c3_88] : memref<8x8xf32, #tpu.memory_space<smem>>
    %189 = vector.broadcast %188 : f32 to vector<32x128xf32>
    %190 = arith.mulf %33, %189 : vector<32x128xf32>
    %191 = arith.addf %187, %190 : vector<32x128xf32>
    %c3_89 = arith.constant 3 : index
    %c4_90 = arith.constant 4 : index
    %192 = memref.load %arg4[%c3_89, %c4_90] : memref<8x8xf32, #tpu.memory_space<smem>>
    %193 = vector.broadcast %192 : f32 to vector<32x128xf32>
    %194 = arith.mulf %41, %193 : vector<32x128xf32>
    %195 = arith.addf %191, %194 : vector<32x128xf32>
    %c3_91 = arith.constant 3 : index
    %c5_92 = arith.constant 5 : index
    %196 = memref.load %arg4[%c3_91, %c5_92] : memref<8x8xf32, #tpu.memory_space<smem>>
    %197 = vector.broadcast %196 : f32 to vector<32x128xf32>
    %198 = arith.mulf %49, %197 : vector<32x128xf32>
    %199 = arith.addf %195, %198 : vector<32x128xf32>
    %c3_93 = arith.constant 3 : index
    %c6_94 = arith.constant 6 : index
    %200 = memref.load %arg4[%c3_93, %c6_94] : memref<8x8xf32, #tpu.memory_space<smem>>
    %201 = vector.broadcast %200 : f32 to vector<32x128xf32>
    %202 = arith.mulf %57, %201 : vector<32x128xf32>
    %203 = arith.addf %199, %202 : vector<32x128xf32>
    %c3_95 = arith.constant 3 : index
    %c7_96 = arith.constant 7 : index
    %204 = memref.load %arg4[%c3_95, %c7_96] : memref<8x8xf32, #tpu.memory_space<smem>>
    %205 = vector.broadcast %204 : f32 to vector<32x128xf32>
    %206 = arith.mulf %65, %205 : vector<32x128xf32>
    %207 = arith.addf %203, %206 : vector<32x128xf32>
    %cst_97 = arith.constant 0.000000e+00 : f32
    %208 = vector.broadcast %cst_97 : f32 to vector<32x128xf32>
    %209 = arith.maximumf %207, %208 : vector<32x128xf32>
    %c4_98 = arith.constant 4 : index
    %c0_99 = arith.constant 0 : index
    %210 = memref.load %arg4[%c4_98, %c0_99] : memref<8x8xf32, #tpu.memory_space<smem>>
    %211 = vector.broadcast %210 : f32 to vector<32x128xf32>
    %212 = arith.mulf %9, %211 : vector<32x128xf32>
    %c4_100 = arith.constant 4 : index
    %213 = memref.load %arg5[%c4_100] : memref<8xf32, #tpu.memory_space<smem>>
    %214 = vector.broadcast %213 : f32 to vector<32x128xf32>
    %215 = arith.addf %212, %214 : vector<32x128xf32>
    %c4_101 = arith.constant 4 : index
    %c1_102 = arith.constant 1 : index
    %216 = memref.load %arg4[%c4_101, %c1_102] : memref<8x8xf32, #tpu.memory_space<smem>>
    %217 = vector.broadcast %216 : f32 to vector<32x128xf32>
    %218 = arith.mulf %17, %217 : vector<32x128xf32>
    %219 = arith.addf %215, %218 : vector<32x128xf32>
    %c4_103 = arith.constant 4 : index
    %c2_104 = arith.constant 2 : index
    %220 = memref.load %arg4[%c4_103, %c2_104] : memref<8x8xf32, #tpu.memory_space<smem>>
    %221 = vector.broadcast %220 : f32 to vector<32x128xf32>
    %222 = arith.mulf %25, %221 : vector<32x128xf32>
    %223 = arith.addf %219, %222 : vector<32x128xf32>
    %c4_105 = arith.constant 4 : index
    %c3_106 = arith.constant 3 : index
    %224 = memref.load %arg4[%c4_105, %c3_106] : memref<8x8xf32, #tpu.memory_space<smem>>
    %225 = vector.broadcast %224 : f32 to vector<32x128xf32>
    %226 = arith.mulf %33, %225 : vector<32x128xf32>
    %227 = arith.addf %223, %226 : vector<32x128xf32>
    %c4_107 = arith.constant 4 : index
    %c4_108 = arith.constant 4 : index
    %228 = memref.load %arg4[%c4_107, %c4_108] : memref<8x8xf32, #tpu.memory_space<smem>>
    %229 = vector.broadcast %228 : f32 to vector<32x128xf32>
    %230 = arith.mulf %41, %229 : vector<32x128xf32>
    %231 = arith.addf %227, %230 : vector<32x128xf32>
    %c4_109 = arith.constant 4 : index
    %c5_110 = arith.constant 5 : index
    %232 = memref.load %arg4[%c4_109, %c5_110] : memref<8x8xf32, #tpu.memory_space<smem>>
    %233 = vector.broadcast %232 : f32 to vector<32x128xf32>
    %234 = arith.mulf %49, %233 : vector<32x128xf32>
    %235 = arith.addf %231, %234 : vector<32x128xf32>
    %c4_111 = arith.constant 4 : index
    %c6_112 = arith.constant 6 : index
    %236 = memref.load %arg4[%c4_111, %c6_112] : memref<8x8xf32, #tpu.memory_space<smem>>
    %237 = vector.broadcast %236 : f32 to vector<32x128xf32>
    %238 = arith.mulf %57, %237 : vector<32x128xf32>
    %239 = arith.addf %235, %238 : vector<32x128xf32>
    %c4_113 = arith.constant 4 : index
    %c7_114 = arith.constant 7 : index
    %240 = memref.load %arg4[%c4_113, %c7_114] : memref<8x8xf32, #tpu.memory_space<smem>>
    %241 = vector.broadcast %240 : f32 to vector<32x128xf32>
    %242 = arith.mulf %65, %241 : vector<32x128xf32>
    %243 = arith.addf %239, %242 : vector<32x128xf32>
    %cst_115 = arith.constant 0.000000e+00 : f32
    %244 = vector.broadcast %cst_115 : f32 to vector<32x128xf32>
    %245 = arith.maximumf %243, %244 : vector<32x128xf32>
    %c5_116 = arith.constant 5 : index
    %c0_117 = arith.constant 0 : index
    %246 = memref.load %arg4[%c5_116, %c0_117] : memref<8x8xf32, #tpu.memory_space<smem>>
    %247 = vector.broadcast %246 : f32 to vector<32x128xf32>
    %248 = arith.mulf %9, %247 : vector<32x128xf32>
    %c5_118 = arith.constant 5 : index
    %249 = memref.load %arg5[%c5_118] : memref<8xf32, #tpu.memory_space<smem>>
    %250 = vector.broadcast %249 : f32 to vector<32x128xf32>
    %251 = arith.addf %248, %250 : vector<32x128xf32>
    %c5_119 = arith.constant 5 : index
    %c1_120 = arith.constant 1 : index
    %252 = memref.load %arg4[%c5_119, %c1_120] : memref<8x8xf32, #tpu.memory_space<smem>>
    %253 = vector.broadcast %252 : f32 to vector<32x128xf32>
    %254 = arith.mulf %17, %253 : vector<32x128xf32>
    %255 = arith.addf %251, %254 : vector<32x128xf32>
    %c5_121 = arith.constant 5 : index
    %c2_122 = arith.constant 2 : index
    %256 = memref.load %arg4[%c5_121, %c2_122] : memref<8x8xf32, #tpu.memory_space<smem>>
    %257 = vector.broadcast %256 : f32 to vector<32x128xf32>
    %258 = arith.mulf %25, %257 : vector<32x128xf32>
    %259 = arith.addf %255, %258 : vector<32x128xf32>
    %c5_123 = arith.constant 5 : index
    %c3_124 = arith.constant 3 : index
    %260 = memref.load %arg4[%c5_123, %c3_124] : memref<8x8xf32, #tpu.memory_space<smem>>
    %261 = vector.broadcast %260 : f32 to vector<32x128xf32>
    %262 = arith.mulf %33, %261 : vector<32x128xf32>
    %263 = arith.addf %259, %262 : vector<32x128xf32>
    %c5_125 = arith.constant 5 : index
    %c4_126 = arith.constant 4 : index
    %264 = memref.load %arg4[%c5_125, %c4_126] : memref<8x8xf32, #tpu.memory_space<smem>>
    %265 = vector.broadcast %264 : f32 to vector<32x128xf32>
    %266 = arith.mulf %41, %265 : vector<32x128xf32>
    %267 = arith.addf %263, %266 : vector<32x128xf32>
    %c5_127 = arith.constant 5 : index
    %c5_128 = arith.constant 5 : index
    %268 = memref.load %arg4[%c5_127, %c5_128] : memref<8x8xf32, #tpu.memory_space<smem>>
    %269 = vector.broadcast %268 : f32 to vector<32x128xf32>
    %270 = arith.mulf %49, %269 : vector<32x128xf32>
    %271 = arith.addf %267, %270 : vector<32x128xf32>
    %c5_129 = arith.constant 5 : index
    %c6_130 = arith.constant 6 : index
    %272 = memref.load %arg4[%c5_129, %c6_130] : memref<8x8xf32, #tpu.memory_space<smem>>
    %273 = vector.broadcast %272 : f32 to vector<32x128xf32>
    %274 = arith.mulf %57, %273 : vector<32x128xf32>
    %275 = arith.addf %271, %274 : vector<32x128xf32>
    %c5_131 = arith.constant 5 : index
    %c7_132 = arith.constant 7 : index
    %276 = memref.load %arg4[%c5_131, %c7_132] : memref<8x8xf32, #tpu.memory_space<smem>>
    %277 = vector.broadcast %276 : f32 to vector<32x128xf32>
    %278 = arith.mulf %65, %277 : vector<32x128xf32>
    %279 = arith.addf %275, %278 : vector<32x128xf32>
    %cst_133 = arith.constant 0.000000e+00 : f32
    %280 = vector.broadcast %cst_133 : f32 to vector<32x128xf32>
    %281 = arith.maximumf %279, %280 : vector<32x128xf32>
    %c6_134 = arith.constant 6 : index
    %c0_135 = arith.constant 0 : index
    %282 = memref.load %arg4[%c6_134, %c0_135] : memref<8x8xf32, #tpu.memory_space<smem>>
    %283 = vector.broadcast %282 : f32 to vector<32x128xf32>
    %284 = arith.mulf %9, %283 : vector<32x128xf32>
    %c6_136 = arith.constant 6 : index
    %285 = memref.load %arg5[%c6_136] : memref<8xf32, #tpu.memory_space<smem>>
    %286 = vector.broadcast %285 : f32 to vector<32x128xf32>
    %287 = arith.addf %284, %286 : vector<32x128xf32>
    %c6_137 = arith.constant 6 : index
    %c1_138 = arith.constant 1 : index
    %288 = memref.load %arg4[%c6_137, %c1_138] : memref<8x8xf32, #tpu.memory_space<smem>>
    %289 = vector.broadcast %288 : f32 to vector<32x128xf32>
    %290 = arith.mulf %17, %289 : vector<32x128xf32>
    %291 = arith.addf %287, %290 : vector<32x128xf32>
    %c6_139 = arith.constant 6 : index
    %c2_140 = arith.constant 2 : index
    %292 = memref.load %arg4[%c6_139, %c2_140] : memref<8x8xf32, #tpu.memory_space<smem>>
    %293 = vector.broadcast %292 : f32 to vector<32x128xf32>
    %294 = arith.mulf %25, %293 : vector<32x128xf32>
    %295 = arith.addf %291, %294 : vector<32x128xf32>
    %c6_141 = arith.constant 6 : index
    %c3_142 = arith.constant 3 : index
    %296 = memref.load %arg4[%c6_141, %c3_142] : memref<8x8xf32, #tpu.memory_space<smem>>
    %297 = vector.broadcast %296 : f32 to vector<32x128xf32>
    %298 = arith.mulf %33, %297 : vector<32x128xf32>
    %299 = arith.addf %295, %298 : vector<32x128xf32>
    %c6_143 = arith.constant 6 : index
    %c4_144 = arith.constant 4 : index
    %300 = memref.load %arg4[%c6_143, %c4_144] : memref<8x8xf32, #tpu.memory_space<smem>>
    %301 = vector.broadcast %300 : f32 to vector<32x128xf32>
    %302 = arith.mulf %41, %301 : vector<32x128xf32>
    %303 = arith.addf %299, %302 : vector<32x128xf32>
    %c6_145 = arith.constant 6 : index
    %c5_146 = arith.constant 5 : index
    %304 = memref.load %arg4[%c6_145, %c5_146] : memref<8x8xf32, #tpu.memory_space<smem>>
    %305 = vector.broadcast %304 : f32 to vector<32x128xf32>
    %306 = arith.mulf %49, %305 : vector<32x128xf32>
    %307 = arith.addf %303, %306 : vector<32x128xf32>
    %c6_147 = arith.constant 6 : index
    %c6_148 = arith.constant 6 : index
    %308 = memref.load %arg4[%c6_147, %c6_148] : memref<8x8xf32, #tpu.memory_space<smem>>
    %309 = vector.broadcast %308 : f32 to vector<32x128xf32>
    %310 = arith.mulf %57, %309 : vector<32x128xf32>
    %311 = arith.addf %307, %310 : vector<32x128xf32>
    %c6_149 = arith.constant 6 : index
    %c7_150 = arith.constant 7 : index
    %312 = memref.load %arg4[%c6_149, %c7_150] : memref<8x8xf32, #tpu.memory_space<smem>>
    %313 = vector.broadcast %312 : f32 to vector<32x128xf32>
    %314 = arith.mulf %65, %313 : vector<32x128xf32>
    %315 = arith.addf %311, %314 : vector<32x128xf32>
    %cst_151 = arith.constant 0.000000e+00 : f32
    %316 = vector.broadcast %cst_151 : f32 to vector<32x128xf32>
    %317 = arith.maximumf %315, %316 : vector<32x128xf32>
    %c7_152 = arith.constant 7 : index
    %c0_153 = arith.constant 0 : index
    %318 = memref.load %arg4[%c7_152, %c0_153] : memref<8x8xf32, #tpu.memory_space<smem>>
    %319 = vector.broadcast %318 : f32 to vector<32x128xf32>
    %320 = arith.mulf %9, %319 : vector<32x128xf32>
    %c7_154 = arith.constant 7 : index
    %321 = memref.load %arg5[%c7_154] : memref<8xf32, #tpu.memory_space<smem>>
    %322 = vector.broadcast %321 : f32 to vector<32x128xf32>
    %323 = arith.addf %320, %322 : vector<32x128xf32>
    %c7_155 = arith.constant 7 : index
    %c1_156 = arith.constant 1 : index
    %324 = memref.load %arg4[%c7_155, %c1_156] : memref<8x8xf32, #tpu.memory_space<smem>>
    %325 = vector.broadcast %324 : f32 to vector<32x128xf32>
    %326 = arith.mulf %17, %325 : vector<32x128xf32>
    %327 = arith.addf %323, %326 : vector<32x128xf32>
    %c7_157 = arith.constant 7 : index
    %c2_158 = arith.constant 2 : index
    %328 = memref.load %arg4[%c7_157, %c2_158] : memref<8x8xf32, #tpu.memory_space<smem>>
    %329 = vector.broadcast %328 : f32 to vector<32x128xf32>
    %330 = arith.mulf %25, %329 : vector<32x128xf32>
    %331 = arith.addf %327, %330 : vector<32x128xf32>
    %c7_159 = arith.constant 7 : index
    %c3_160 = arith.constant 3 : index
    %332 = memref.load %arg4[%c7_159, %c3_160] : memref<8x8xf32, #tpu.memory_space<smem>>
    %333 = vector.broadcast %332 : f32 to vector<32x128xf32>
    %334 = arith.mulf %33, %333 : vector<32x128xf32>
    %335 = arith.addf %331, %334 : vector<32x128xf32>
    %c7_161 = arith.constant 7 : index
    %c4_162 = arith.constant 4 : index
    %336 = memref.load %arg4[%c7_161, %c4_162] : memref<8x8xf32, #tpu.memory_space<smem>>
    %337 = vector.broadcast %336 : f32 to vector<32x128xf32>
    %338 = arith.mulf %41, %337 : vector<32x128xf32>
    %339 = arith.addf %335, %338 : vector<32x128xf32>
    %c7_163 = arith.constant 7 : index
    %c5_164 = arith.constant 5 : index
    %340 = memref.load %arg4[%c7_163, %c5_164] : memref<8x8xf32, #tpu.memory_space<smem>>
    %341 = vector.broadcast %340 : f32 to vector<32x128xf32>
    %342 = arith.mulf %49, %341 : vector<32x128xf32>
    %343 = arith.addf %339, %342 : vector<32x128xf32>
    %c7_165 = arith.constant 7 : index
    %c6_166 = arith.constant 6 : index
    %344 = memref.load %arg4[%c7_165, %c6_166] : memref<8x8xf32, #tpu.memory_space<smem>>
    %345 = vector.broadcast %344 : f32 to vector<32x128xf32>
    %346 = arith.mulf %57, %345 : vector<32x128xf32>
    %347 = arith.addf %343, %346 : vector<32x128xf32>
    %c7_167 = arith.constant 7 : index
    %c7_168 = arith.constant 7 : index
    %348 = memref.load %arg4[%c7_167, %c7_168] : memref<8x8xf32, #tpu.memory_space<smem>>
    %349 = vector.broadcast %348 : f32 to vector<32x128xf32>
    %350 = arith.mulf %65, %349 : vector<32x128xf32>
    %351 = arith.addf %347, %350 : vector<32x128xf32>
    %cst_169 = arith.constant 0.000000e+00 : f32
    %352 = vector.broadcast %cst_169 : f32 to vector<32x128xf32>
    %353 = arith.maximumf %351, %352 : vector<32x128xf32>
    %c0_170 = arith.constant 0 : index
    %c0_171 = arith.constant 0 : index
    %354 = memref.load %arg6[%c0_170, %c0_171] : memref<3x8xf32, #tpu.memory_space<smem>>
    %355 = vector.broadcast %354 : f32 to vector<32x128xf32>
    %356 = arith.mulf %101, %355 : vector<32x128xf32>
    %c0_172 = arith.constant 0 : index
    %357 = memref.load %arg7[%c0_172] : memref<3xf32, #tpu.memory_space<smem>>
    %358 = vector.broadcast %357 : f32 to vector<32x128xf32>
    %359 = arith.addf %356, %358 : vector<32x128xf32>
    %c0_173 = arith.constant 0 : index
    %c1_174 = arith.constant 1 : index
    %360 = memref.load %arg6[%c0_173, %c1_174] : memref<3x8xf32, #tpu.memory_space<smem>>
    %361 = vector.broadcast %360 : f32 to vector<32x128xf32>
    %362 = arith.mulf %137, %361 : vector<32x128xf32>
    %363 = arith.addf %359, %362 : vector<32x128xf32>
    %c0_175 = arith.constant 0 : index
    %c2_176 = arith.constant 2 : index
    %364 = memref.load %arg6[%c0_175, %c2_176] : memref<3x8xf32, #tpu.memory_space<smem>>
    %365 = vector.broadcast %364 : f32 to vector<32x128xf32>
    %366 = arith.mulf %173, %365 : vector<32x128xf32>
    %367 = arith.addf %363, %366 : vector<32x128xf32>
    %c0_177 = arith.constant 0 : index
    %c3_178 = arith.constant 3 : index
    %368 = memref.load %arg6[%c0_177, %c3_178] : memref<3x8xf32, #tpu.memory_space<smem>>
    %369 = vector.broadcast %368 : f32 to vector<32x128xf32>
    %370 = arith.mulf %209, %369 : vector<32x128xf32>
    %371 = arith.addf %367, %370 : vector<32x128xf32>
    %c0_179 = arith.constant 0 : index
    %c4_180 = arith.constant 4 : index
    %372 = memref.load %arg6[%c0_179, %c4_180] : memref<3x8xf32, #tpu.memory_space<smem>>
    %373 = vector.broadcast %372 : f32 to vector<32x128xf32>
    %374 = arith.mulf %245, %373 : vector<32x128xf32>
    %375 = arith.addf %371, %374 : vector<32x128xf32>
    %c0_181 = arith.constant 0 : index
    %c5_182 = arith.constant 5 : index
    %376 = memref.load %arg6[%c0_181, %c5_182] : memref<3x8xf32, #tpu.memory_space<smem>>
    %377 = vector.broadcast %376 : f32 to vector<32x128xf32>
    %378 = arith.mulf %281, %377 : vector<32x128xf32>
    %379 = arith.addf %375, %378 : vector<32x128xf32>
    %c0_183 = arith.constant 0 : index
    %c6_184 = arith.constant 6 : index
    %380 = memref.load %arg6[%c0_183, %c6_184] : memref<3x8xf32, #tpu.memory_space<smem>>
    %381 = vector.broadcast %380 : f32 to vector<32x128xf32>
    %382 = arith.mulf %317, %381 : vector<32x128xf32>
    %383 = arith.addf %379, %382 : vector<32x128xf32>
    %c0_185 = arith.constant 0 : index
    %c7_186 = arith.constant 7 : index
    %384 = memref.load %arg6[%c0_185, %c7_186] : memref<3x8xf32, #tpu.memory_space<smem>>
    %385 = vector.broadcast %384 : f32 to vector<32x128xf32>
    %386 = arith.mulf %353, %385 : vector<32x128xf32>
    %387 = arith.addf %383, %386 : vector<32x128xf32>
    %c1_187 = arith.constant 1 : index
    %c0_188 = arith.constant 0 : index
    %388 = memref.load %arg6[%c1_187, %c0_188] : memref<3x8xf32, #tpu.memory_space<smem>>
    %389 = vector.broadcast %388 : f32 to vector<32x128xf32>
    %390 = arith.mulf %101, %389 : vector<32x128xf32>
    %c1_189 = arith.constant 1 : index
    %391 = memref.load %arg7[%c1_189] : memref<3xf32, #tpu.memory_space<smem>>
    %392 = vector.broadcast %391 : f32 to vector<32x128xf32>
    %393 = arith.addf %390, %392 : vector<32x128xf32>
    %c1_190 = arith.constant 1 : index
    %c1_191 = arith.constant 1 : index
    %394 = memref.load %arg6[%c1_190, %c1_191] : memref<3x8xf32, #tpu.memory_space<smem>>
    %395 = vector.broadcast %394 : f32 to vector<32x128xf32>
    %396 = arith.mulf %137, %395 : vector<32x128xf32>
    %397 = arith.addf %393, %396 : vector<32x128xf32>
    %c1_192 = arith.constant 1 : index
    %c2_193 = arith.constant 2 : index
    %398 = memref.load %arg6[%c1_192, %c2_193] : memref<3x8xf32, #tpu.memory_space<smem>>
    %399 = vector.broadcast %398 : f32 to vector<32x128xf32>
    %400 = arith.mulf %173, %399 : vector<32x128xf32>
    %401 = arith.addf %397, %400 : vector<32x128xf32>
    %c1_194 = arith.constant 1 : index
    %c3_195 = arith.constant 3 : index
    %402 = memref.load %arg6[%c1_194, %c3_195] : memref<3x8xf32, #tpu.memory_space<smem>>
    %403 = vector.broadcast %402 : f32 to vector<32x128xf32>
    %404 = arith.mulf %209, %403 : vector<32x128xf32>
    %405 = arith.addf %401, %404 : vector<32x128xf32>
    %c1_196 = arith.constant 1 : index
    %c4_197 = arith.constant 4 : index
    %406 = memref.load %arg6[%c1_196, %c4_197] : memref<3x8xf32, #tpu.memory_space<smem>>
    %407 = vector.broadcast %406 : f32 to vector<32x128xf32>
    %408 = arith.mulf %245, %407 : vector<32x128xf32>
    %409 = arith.addf %405, %408 : vector<32x128xf32>
    %c1_198 = arith.constant 1 : index
    %c5_199 = arith.constant 5 : index
    %410 = memref.load %arg6[%c1_198, %c5_199] : memref<3x8xf32, #tpu.memory_space<smem>>
    %411 = vector.broadcast %410 : f32 to vector<32x128xf32>
    %412 = arith.mulf %281, %411 : vector<32x128xf32>
    %413 = arith.addf %409, %412 : vector<32x128xf32>
    %c1_200 = arith.constant 1 : index
    %c6_201 = arith.constant 6 : index
    %414 = memref.load %arg6[%c1_200, %c6_201] : memref<3x8xf32, #tpu.memory_space<smem>>
    %415 = vector.broadcast %414 : f32 to vector<32x128xf32>
    %416 = arith.mulf %317, %415 : vector<32x128xf32>
    %417 = arith.addf %413, %416 : vector<32x128xf32>
    %c1_202 = arith.constant 1 : index
    %c7_203 = arith.constant 7 : index
    %418 = memref.load %arg6[%c1_202, %c7_203] : memref<3x8xf32, #tpu.memory_space<smem>>
    %419 = vector.broadcast %418 : f32 to vector<32x128xf32>
    %420 = arith.mulf %353, %419 : vector<32x128xf32>
    %421 = arith.addf %417, %420 : vector<32x128xf32>
    %c2_204 = arith.constant 2 : index
    %c0_205 = arith.constant 0 : index
    %422 = memref.load %arg6[%c2_204, %c0_205] : memref<3x8xf32, #tpu.memory_space<smem>>
    %423 = vector.broadcast %422 : f32 to vector<32x128xf32>
    %424 = arith.mulf %101, %423 : vector<32x128xf32>
    %c2_206 = arith.constant 2 : index
    %425 = memref.load %arg7[%c2_206] : memref<3xf32, #tpu.memory_space<smem>>
    %426 = vector.broadcast %425 : f32 to vector<32x128xf32>
    %427 = arith.addf %424, %426 : vector<32x128xf32>
    %c2_207 = arith.constant 2 : index
    %c1_208 = arith.constant 1 : index
    %428 = memref.load %arg6[%c2_207, %c1_208] : memref<3x8xf32, #tpu.memory_space<smem>>
    %429 = vector.broadcast %428 : f32 to vector<32x128xf32>
    %430 = arith.mulf %137, %429 : vector<32x128xf32>
    %431 = arith.addf %427, %430 : vector<32x128xf32>
    %c2_209 = arith.constant 2 : index
    %c2_210 = arith.constant 2 : index
    %432 = memref.load %arg6[%c2_209, %c2_210] : memref<3x8xf32, #tpu.memory_space<smem>>
    %433 = vector.broadcast %432 : f32 to vector<32x128xf32>
    %434 = arith.mulf %173, %433 : vector<32x128xf32>
    %435 = arith.addf %431, %434 : vector<32x128xf32>
    %c2_211 = arith.constant 2 : index
    %c3_212 = arith.constant 3 : index
    %436 = memref.load %arg6[%c2_211, %c3_212] : memref<3x8xf32, #tpu.memory_space<smem>>
    %437 = vector.broadcast %436 : f32 to vector<32x128xf32>
    %438 = arith.mulf %209, %437 : vector<32x128xf32>
    %439 = arith.addf %435, %438 : vector<32x128xf32>
    %c2_213 = arith.constant 2 : index
    %c4_214 = arith.constant 4 : index
    %440 = memref.load %arg6[%c2_213, %c4_214] : memref<3x8xf32, #tpu.memory_space<smem>>
    %441 = vector.broadcast %440 : f32 to vector<32x128xf32>
    %442 = arith.mulf %245, %441 : vector<32x128xf32>
    %443 = arith.addf %439, %442 : vector<32x128xf32>
    %c2_215 = arith.constant 2 : index
    %c5_216 = arith.constant 5 : index
    %444 = memref.load %arg6[%c2_215, %c5_216] : memref<3x8xf32, #tpu.memory_space<smem>>
    %445 = vector.broadcast %444 : f32 to vector<32x128xf32>
    %446 = arith.mulf %281, %445 : vector<32x128xf32>
    %447 = arith.addf %443, %446 : vector<32x128xf32>
    %c2_217 = arith.constant 2 : index
    %c6_218 = arith.constant 6 : index
    %448 = memref.load %arg6[%c2_217, %c6_218] : memref<3x8xf32, #tpu.memory_space<smem>>
    %449 = vector.broadcast %448 : f32 to vector<32x128xf32>
    %450 = arith.mulf %317, %449 : vector<32x128xf32>
    %451 = arith.addf %447, %450 : vector<32x128xf32>
    %c2_219 = arith.constant 2 : index
    %c7_220 = arith.constant 7 : index
    %452 = memref.load %arg6[%c2_219, %c7_220] : memref<3x8xf32, #tpu.memory_space<smem>>
    %453 = vector.broadcast %452 : f32 to vector<32x128xf32>
    %454 = arith.mulf %353, %453 : vector<32x128xf32>
    %455 = arith.addf %451, %454 : vector<32x128xf32>
    %c0_221 = arith.constant 0 : index
    %c0_222 = arith.constant 0 : index
    %c0_223 = arith.constant 0 : index
    %456 = vector.load %arg8[%c0_221, %c0_222, %c0_223] : memref<8x32x128xf32, #tpu.memory_space<vmem>>, vector<1x32x128xf32>
    %457 = vector.shape_cast %456 : vector<1x32x128xf32> to vector<32x128xf32>
    %458 = vector.shape_cast %101 : vector<32x128xf32> to vector<1x32x128xf32>
    tpu.vector_store %arg8[%c0_221, %c0_222, %c0_223], %458 {strides = array<i32>} : memref<8x32x128xf32, #tpu.memory_space<vmem>>, vector<1x32x128xf32>,
    %c1_224 = arith.constant 1 : index
    %c0_225 = arith.constant 0 : index
    %c0_226 = arith.constant 0 : index
    %459 = vector.load %arg8[%c1_224, %c0_225, %c0_226] : memref<8x32x128xf32, #tpu.memory_space<vmem>>, vector<1x32x128xf32>
    %460 = vector.shape_cast %459 : vector<1x32x128xf32> to vector<32x128xf32>
    %461 = vector.shape_cast %137 : vector<32x128xf32> to vector<1x32x128xf32>
    tpu.vector_store %arg8[%c1_224, %c0_225, %c0_226], %461 {strides = array<i32>} : memref<8x32x128xf32, #tpu.memory_space<vmem>>, vector<1x32x128xf32>,
    %c2_227 = arith.constant 2 : index
    %c0_228 = arith.constant 0 : index
    %c0_229 = arith.constant 0 : index
    %462 = vector.load %arg8[%c2_227, %c0_228, %c0_229] : memref<8x32x128xf32, #tpu.memory_space<vmem>>, vector<1x32x128xf32>
    %463 = vector.shape_cast %462 : vector<1x32x128xf32> to vector<32x128xf32>
    %464 = vector.shape_cast %173 : vector<32x128xf32> to vector<1x32x128xf32>
    tpu.vector_store %arg8[%c2_227, %c0_228, %c0_229], %464 {strides = array<i32>} : memref<8x32x128xf32, #tpu.memory_space<vmem>>, vector<1x32x128xf32>,
    %c3_230 = arith.constant 3 : index
    %c0_231 = arith.constant 0 : index
    %c0_232 = arith.constant 0 : index
    %465 = vector.load %arg8[%c3_230, %c0_231, %c0_232] : memref<8x32x128xf32, #tpu.memory_space<vmem>>, vector<1x32x128xf32>
    %466 = vector.shape_cast %465 : vector<1x32x128xf32> to vector<32x128xf32>
    %467 = vector.shape_cast %209 : vector<32x128xf32> to vector<1x32x128xf32>
    tpu.vector_store %arg8[%c3_230, %c0_231, %c0_232], %467 {strides = array<i32>} : memref<8x32x128xf32, #tpu.memory_space<vmem>>, vector<1x32x128xf32>,
    %c4_233 = arith.constant 4 : index
    %c0_234 = arith.constant 0 : index
    %c0_235 = arith.constant 0 : index
    %468 = vector.load %arg8[%c4_233, %c0_234, %c0_235] : memref<8x32x128xf32, #tpu.memory_space<vmem>>, vector<1x32x128xf32>
    %469 = vector.shape_cast %468 : vector<1x32x128xf32> to vector<32x128xf32>
    %470 = vector.shape_cast %245 : vector<32x128xf32> to vector<1x32x128xf32>
    tpu.vector_store %arg8[%c4_233, %c0_234, %c0_235], %470 {strides = array<i32>} : memref<8x32x128xf32, #tpu.memory_space<vmem>>, vector<1x32x128xf32>,
    %c5_236 = arith.constant 5 : index
    %c0_237 = arith.constant 0 : index
    %c0_238 = arith.constant 0 : index
    %471 = vector.load %arg8[%c5_236, %c0_237, %c0_238] : memref<8x32x128xf32, #tpu.memory_space<vmem>>, vector<1x32x128xf32>
    %472 = vector.shape_cast %471 : vector<1x32x128xf32> to vector<32x128xf32>
    %473 = vector.shape_cast %281 : vector<32x128xf32> to vector<1x32x128xf32>
    tpu.vector_store %arg8[%c5_236, %c0_237, %c0_238], %473 {strides = array<i32>} : memref<8x32x128xf32, #tpu.memory_space<vmem>>, vector<1x32x128xf32>,
    %c6_239 = arith.constant 6 : index
    %c0_240 = arith.constant 0 : index
    %c0_241 = arith.constant 0 : index
    %474 = vector.load %arg8[%c6_239, %c0_240, %c0_241] : memref<8x32x128xf32, #tpu.memory_space<vmem>>, vector<1x32x128xf32>
    %475 = vector.shape_cast %474 : vector<1x32x128xf32> to vector<32x128xf32>
    %476 = vector.shape_cast %317 : vector<32x128xf32> to vector<1x32x128xf32>
    tpu.vector_store %arg8[%c6_239, %c0_240, %c0_241], %476 {strides = array<i32>} : memref<8x32x128xf32, #tpu.memory_space<vmem>>, vector<1x32x128xf32>,
    %c7_242 = arith.constant 7 : index
    %c0_243 = arith.constant 0 : index
    %c0_244 = arith.constant 0 : index
    %477 = vector.load %arg8[%c7_242, %c0_243, %c0_244] : memref<8x32x128xf32, #tpu.memory_space<vmem>>, vector<1x32x128xf32>
    %478 = vector.shape_cast %477 : vector<1x32x128xf32> to vector<32x128xf32>
    %479 = vector.shape_cast %353 : vector<32x128xf32> to vector<1x32x128xf32>
    tpu.vector_store %arg8[%c7_242, %c0_243, %c0_244], %479 {strides = array<i32>} : memref<8x32x128xf32, #tpu.memory_space<vmem>>, vector<1x32x128xf32>,
    %c0_245 = arith.constant 0 : index
    %c0_246 = arith.constant 0 : index
    %c0_247 = arith.constant 0 : index
    %480 = vector.load %arg9[%c0_245, %c0_246, %c0_247] : memref<3x32x128xf32, #tpu.memory_space<vmem>>, vector<1x32x128xf32>
    %481 = vector.shape_cast %480 : vector<1x32x128xf32> to vector<32x128xf32>
    %482 = vector.shape_cast %387 : vector<32x128xf32> to vector<1x32x128xf32>
    tpu.vector_store %arg9[%c0_245, %c0_246, %c0_247], %482 {strides = array<i32>} : memref<3x32x128xf32, #tpu.memory_space<vmem>>, vector<1x32x128xf32>,
    %c1_248 = arith.constant 1 : index
    %c0_249 = arith.constant 0 : index
    %c0_250 = arith.constant 0 : index
    %483 = vector.load %arg9[%c1_248, %c0_249, %c0_250] : memref<3x32x128xf32, #tpu.memory_space<vmem>>, vector<1x32x128xf32>
    %484 = vector.shape_cast %483 : vector<1x32x128xf32> to vector<32x128xf32>
    %485 = vector.shape_cast %421 : vector<32x128xf32> to vector<1x32x128xf32>
    tpu.vector_store %arg9[%c1_248, %c0_249, %c0_250], %485 {strides = array<i32>} : memref<3x32x128xf32, #tpu.memory_space<vmem>>, vector<1x32x128xf32>,
    %c2_251 = arith.constant 2 : index
    %c0_252 = arith.constant 0 : index
    %c0_253 = arith.constant 0 : index
    %486 = vector.load %arg9[%c2_251, %c0_252, %c0_253] : memref<3x32x128xf32, #tpu.memory_space<vmem>>, vector<1x32x128xf32>
    %487 = vector.shape_cast %486 : vector<1x32x128xf32> to vector<32x128xf32>
    %488 = vector.shape_cast %455 : vector<32x128xf32> to vector<1x32x128xf32>
    tpu.vector_store %arg9[%c2_251, %c0_252, %c0_253], %488 {strides = array<i32>} : memref<3x32x128xf32, #tpu.memory_space<vmem>>, vector<1x32x128xf32>,
    %489 = arith.maximumf %421, %455 : vector<32x128xf32>
    %490 = arith.cmpf oge, %387, %489 : vector<32x128xf32>
    %491 = arith.extui %490 : vector<32x128xi1> to vector<32x128xi32>
    %492 = arith.sitofp %491 : vector<32x128xi32> to vector<32x128xf32>
    %c0_254 = arith.constant 0 : index
    %c0_255 = arith.constant 0 : index
    %c0_256 = arith.constant 0 : index
    %493 = vector.load %arg10[%c0_254, %c0_255, %c0_256] : memref<1x32x128xf32, #tpu.memory_space<vmem>>, vector<1x32x128xf32>
    %494 = vector.shape_cast %493 : vector<1x32x128xf32> to vector<32x128xf32>
    %495 = vector.shape_cast %492 : vector<32x128xf32> to vector<1x32x128xf32>
    tpu.vector_store %arg10[%c0_254, %c0_255, %c0_256], %495 {strides = array<i32>} : memref<1x32x128xf32, #tpu.memory_space<vmem>>, vector<1x32x128xf32>,
    return
  }
  func.func @transform_0(%arg0: i32) -> (i32, i32, i32) {
    %c0_i32 = arith.constant 0 : i32
    %c0_i32_0 = arith.constant 0 : i32
    %c0_i32_1 = arith.constant 0 : i32
    return %c0_i32, %arg0, %c0_i32_0 : i32, i32, i32
  }
  func.func @transform_1(%arg0: i32) -> (i32, i32) {
    %c0_i32 = arith.constant 0 : i32
    %c0_i32_0 = arith.constant 0 : i32
    %c0_i32_1 = arith.constant 0 : i32
    return %c0_i32, %c0_i32_0 : i32, i32
  }
  func.func @transform_2(%arg0: i32) -> i32 {
    %c0_i32 = arith.constant 0 : i32
    %c0_i32_0 = arith.constant 0 : i32
    return %c0_i32 : i32
  }
  func.func @transform_3(%arg0: i32) -> (i32, i32) {
    %c0_i32 = arith.constant 0 : i32
    %c0_i32_0 = arith.constant 0 : i32
    %c0_i32_1 = arith.constant 0 : i32
    return %c0_i32, %c0_i32_0 : i32, i32
  }
  func.func @transform_4(%arg0: i32) -> i32 {
    %c0_i32 = arith.constant 0 : i32
    %c0_i32_0 = arith.constant 0 : i32
    return %c0_i32 : i32
  }
  func.func @transform_5(%arg0: i32) -> (i32, i32) {
    %c0_i32 = arith.constant 0 : i32
    %c0_i32_0 = arith.constant 0 : i32
    %c0_i32_1 = arith.constant 0 : i32
    return %c0_i32, %c0_i32_0 : i32, i32
  }
  func.func @transform_6(%arg0: i32) -> i32 {
    %c0_i32 = arith.constant 0 : i32
    %c0_i32_0 = arith.constant 0 : i32
    return %c0_i32 : i32
  }
  func.func @transform_7(%arg0: i32) -> (i32, i32, i32) {
    %c0_i32 = arith.constant 0 : i32
    %c0_i32_0 = arith.constant 0 : i32
    %c0_i32_1 = arith.constant 0 : i32
    return %c0_i32, %arg0, %c0_i32_0 : i32, i32, i32
  }
  func.func @transform_8(%arg0: i32) -> (i32, i32, i32) {
    %c0_i32 = arith.constant 0 : i32
    %c0_i32_0 = arith.constant 0 : i32
    %c0_i32_1 = arith.constant 0 : i32
    return %c0_i32, %arg0, %c0_i32_0 : i32, i32, i32
  }
  func.func @transform_9(%arg0: i32) -> (i32, i32, i32) {
    %c0_i32 = arith.constant 0 : i32
    %c0_i32_0 = arith.constant 0 : i32
    %c0_i32_1 = arith.constant 0 : i32
    return %c0_i32, %arg0, %c0_i32_0 : i32, i32, i32
  }
}

module attributes {stable_mosaic.version = 11 : i64} {
  func.func @kernel(%arg0: i32, %arg1: memref<1x64x128xf32, #tpu.memory_space<vmem>>, %arg2: memref<3x64x128xf32, #tpu.memory_space<vmem>>, %arg3: memref<8x1xf32, #tpu.memory_space<smem>>, %arg4: memref<8xf32, #tpu.memory_space<smem>>, %arg5: memref<8x8xf32, #tpu.memory_space<smem>>, %arg6: memref<8xf32, #tpu.memory_space<smem>>, %arg7: memref<3x8xf32, #tpu.memory_space<smem>>, %arg8: memref<3xf32, #tpu.memory_space<smem>>, %arg9: memref<3x3xf32, #tpu.memory_space<smem>>, %arg10: memref<3x3xf32, #tpu.memory_space<smem>>, %arg11: memref<3xf32, #tpu.memory_space<smem>>, %arg12: memref<3x64x128xf32, #tpu.memory_space<vmem>>, %arg13: memref<3x64x128xf32, #tpu.memory_space<vmem>>) attributes {dimension_semantics = [#tpu.dimension_semantics<parallel>], iteration_bounds = array<i64: 1>, scalar_prefetch = 0 : i64, scratch_operands = 0 : i64, tpu.core_type = #tpu.core_type<tc>, window_params = [{transform_indices = @transform_0, window_bounds = array<i64: 1, 64, 128>}, {transform_indices = @transform_1, window_bounds = array<i64: 3, 64, 128>}, {transform_indices = @transform_2, window_bounds = array<i64: 8, 1>}, {transform_indices = @transform_3, window_bounds = array<i64: 8>}, {transform_indices = @transform_4, window_bounds = array<i64: 8, 8>}, {transform_indices = @transform_5, window_bounds = array<i64: 8>}, {transform_indices = @transform_6, window_bounds = array<i64: 3, 8>}, {transform_indices = @transform_7, window_bounds = array<i64: 3>}, {transform_indices = @transform_8, window_bounds = array<i64: 3, 3>}, {transform_indices = @transform_9, window_bounds = array<i64: 3, 3>}, {transform_indices = @transform_10, window_bounds = array<i64: 3>}, {transform_indices = @transform_11, window_bounds = array<i64: 3, 64, 128>}, {transform_indices = @transform_12, window_bounds = array<i64: 3, 64, 128>}]} {
    %c0 = arith.constant 0 : index
    %c0_0 = arith.constant 0 : index
    %c0_1 = arith.constant 0 : index
    %0 = vector.load %arg1[%c0, %c0_0, %c0_1] : memref<1x64x128xf32, #tpu.memory_space<vmem>>, vector<1x64x128xf32>
    %1 = vector.shape_cast %0 : vector<1x64x128xf32> to vector<64x128xf32>
    %c0_2 = arith.constant 0 : index
    %c0_3 = arith.constant 0 : index
    %2 = memref.load %arg3[%c0_2, %c0_3] : memref<8x1xf32, #tpu.memory_space<smem>>
    %3 = vector.broadcast %2 : f32 to vector<64x128xf32>
    %4 = arith.mulf %1, %3 : vector<64x128xf32>
    %c0_4 = arith.constant 0 : index
    %5 = memref.load %arg4[%c0_4] : memref<8xf32, #tpu.memory_space<smem>>
    %6 = vector.broadcast %5 : f32 to vector<64x128xf32>
    %7 = arith.addf %4, %6 : vector<64x128xf32>
    %cst = arith.constant 0.000000e+00 : f32
    %8 = vector.broadcast %cst : f32 to vector<64x128xf32>
    %9 = arith.maximumf %7, %8 : vector<64x128xf32>
    %c1 = arith.constant 1 : index
    %c0_5 = arith.constant 0 : index
    %10 = memref.load %arg3[%c1, %c0_5] : memref<8x1xf32, #tpu.memory_space<smem>>
    %11 = vector.broadcast %10 : f32 to vector<64x128xf32>
    %12 = arith.mulf %1, %11 : vector<64x128xf32>
    %c1_6 = arith.constant 1 : index
    %13 = memref.load %arg4[%c1_6] : memref<8xf32, #tpu.memory_space<smem>>
    %14 = vector.broadcast %13 : f32 to vector<64x128xf32>
    %15 = arith.addf %12, %14 : vector<64x128xf32>
    %cst_7 = arith.constant 0.000000e+00 : f32
    %16 = vector.broadcast %cst_7 : f32 to vector<64x128xf32>
    %17 = arith.maximumf %15, %16 : vector<64x128xf32>
    %c2 = arith.constant 2 : index
    %c0_8 = arith.constant 0 : index
    %18 = memref.load %arg3[%c2, %c0_8] : memref<8x1xf32, #tpu.memory_space<smem>>
    %19 = vector.broadcast %18 : f32 to vector<64x128xf32>
    %20 = arith.mulf %1, %19 : vector<64x128xf32>
    %c2_9 = arith.constant 2 : index
    %21 = memref.load %arg4[%c2_9] : memref<8xf32, #tpu.memory_space<smem>>
    %22 = vector.broadcast %21 : f32 to vector<64x128xf32>
    %23 = arith.addf %20, %22 : vector<64x128xf32>
    %cst_10 = arith.constant 0.000000e+00 : f32
    %24 = vector.broadcast %cst_10 : f32 to vector<64x128xf32>
    %25 = arith.maximumf %23, %24 : vector<64x128xf32>
    %c3 = arith.constant 3 : index
    %c0_11 = arith.constant 0 : index
    %26 = memref.load %arg3[%c3, %c0_11] : memref<8x1xf32, #tpu.memory_space<smem>>
    %27 = vector.broadcast %26 : f32 to vector<64x128xf32>
    %28 = arith.mulf %1, %27 : vector<64x128xf32>
    %c3_12 = arith.constant 3 : index
    %29 = memref.load %arg4[%c3_12] : memref<8xf32, #tpu.memory_space<smem>>
    %30 = vector.broadcast %29 : f32 to vector<64x128xf32>
    %31 = arith.addf %28, %30 : vector<64x128xf32>
    %cst_13 = arith.constant 0.000000e+00 : f32
    %32 = vector.broadcast %cst_13 : f32 to vector<64x128xf32>
    %33 = arith.maximumf %31, %32 : vector<64x128xf32>
    %c4 = arith.constant 4 : index
    %c0_14 = arith.constant 0 : index
    %34 = memref.load %arg3[%c4, %c0_14] : memref<8x1xf32, #tpu.memory_space<smem>>
    %35 = vector.broadcast %34 : f32 to vector<64x128xf32>
    %36 = arith.mulf %1, %35 : vector<64x128xf32>
    %c4_15 = arith.constant 4 : index
    %37 = memref.load %arg4[%c4_15] : memref<8xf32, #tpu.memory_space<smem>>
    %38 = vector.broadcast %37 : f32 to vector<64x128xf32>
    %39 = arith.addf %36, %38 : vector<64x128xf32>
    %cst_16 = arith.constant 0.000000e+00 : f32
    %40 = vector.broadcast %cst_16 : f32 to vector<64x128xf32>
    %41 = arith.maximumf %39, %40 : vector<64x128xf32>
    %c5 = arith.constant 5 : index
    %c0_17 = arith.constant 0 : index
    %42 = memref.load %arg3[%c5, %c0_17] : memref<8x1xf32, #tpu.memory_space<smem>>
    %43 = vector.broadcast %42 : f32 to vector<64x128xf32>
    %44 = arith.mulf %1, %43 : vector<64x128xf32>
    %c5_18 = arith.constant 5 : index
    %45 = memref.load %arg4[%c5_18] : memref<8xf32, #tpu.memory_space<smem>>
    %46 = vector.broadcast %45 : f32 to vector<64x128xf32>
    %47 = arith.addf %44, %46 : vector<64x128xf32>
    %cst_19 = arith.constant 0.000000e+00 : f32
    %48 = vector.broadcast %cst_19 : f32 to vector<64x128xf32>
    %49 = arith.maximumf %47, %48 : vector<64x128xf32>
    %c6 = arith.constant 6 : index
    %c0_20 = arith.constant 0 : index
    %50 = memref.load %arg3[%c6, %c0_20] : memref<8x1xf32, #tpu.memory_space<smem>>
    %51 = vector.broadcast %50 : f32 to vector<64x128xf32>
    %52 = arith.mulf %1, %51 : vector<64x128xf32>
    %c6_21 = arith.constant 6 : index
    %53 = memref.load %arg4[%c6_21] : memref<8xf32, #tpu.memory_space<smem>>
    %54 = vector.broadcast %53 : f32 to vector<64x128xf32>
    %55 = arith.addf %52, %54 : vector<64x128xf32>
    %cst_22 = arith.constant 0.000000e+00 : f32
    %56 = vector.broadcast %cst_22 : f32 to vector<64x128xf32>
    %57 = arith.maximumf %55, %56 : vector<64x128xf32>
    %c7 = arith.constant 7 : index
    %c0_23 = arith.constant 0 : index
    %58 = memref.load %arg3[%c7, %c0_23] : memref<8x1xf32, #tpu.memory_space<smem>>
    %59 = vector.broadcast %58 : f32 to vector<64x128xf32>
    %60 = arith.mulf %1, %59 : vector<64x128xf32>
    %c7_24 = arith.constant 7 : index
    %61 = memref.load %arg4[%c7_24] : memref<8xf32, #tpu.memory_space<smem>>
    %62 = vector.broadcast %61 : f32 to vector<64x128xf32>
    %63 = arith.addf %60, %62 : vector<64x128xf32>
    %cst_25 = arith.constant 0.000000e+00 : f32
    %64 = vector.broadcast %cst_25 : f32 to vector<64x128xf32>
    %65 = arith.maximumf %63, %64 : vector<64x128xf32>
    %c0_26 = arith.constant 0 : index
    %c0_27 = arith.constant 0 : index
    %66 = memref.load %arg5[%c0_26, %c0_27] : memref<8x8xf32, #tpu.memory_space<smem>>
    %67 = vector.broadcast %66 : f32 to vector<64x128xf32>
    %68 = arith.mulf %9, %67 : vector<64x128xf32>
    %c0_28 = arith.constant 0 : index
    %69 = memref.load %arg6[%c0_28] : memref<8xf32, #tpu.memory_space<smem>>
    %70 = vector.broadcast %69 : f32 to vector<64x128xf32>
    %71 = arith.addf %68, %70 : vector<64x128xf32>
    %c0_29 = arith.constant 0 : index
    %c1_30 = arith.constant 1 : index
    %72 = memref.load %arg5[%c0_29, %c1_30] : memref<8x8xf32, #tpu.memory_space<smem>>
    %73 = vector.broadcast %72 : f32 to vector<64x128xf32>
    %74 = arith.mulf %17, %73 : vector<64x128xf32>
    %75 = arith.addf %71, %74 : vector<64x128xf32>
    %c0_31 = arith.constant 0 : index
    %c2_32 = arith.constant 2 : index
    %76 = memref.load %arg5[%c0_31, %c2_32] : memref<8x8xf32, #tpu.memory_space<smem>>
    %77 = vector.broadcast %76 : f32 to vector<64x128xf32>
    %78 = arith.mulf %25, %77 : vector<64x128xf32>
    %79 = arith.addf %75, %78 : vector<64x128xf32>
    %c0_33 = arith.constant 0 : index
    %c3_34 = arith.constant 3 : index
    %80 = memref.load %arg5[%c0_33, %c3_34] : memref<8x8xf32, #tpu.memory_space<smem>>
    %81 = vector.broadcast %80 : f32 to vector<64x128xf32>
    %82 = arith.mulf %33, %81 : vector<64x128xf32>
    %83 = arith.addf %79, %82 : vector<64x128xf32>
    %c0_35 = arith.constant 0 : index
    %c4_36 = arith.constant 4 : index
    %84 = memref.load %arg5[%c0_35, %c4_36] : memref<8x8xf32, #tpu.memory_space<smem>>
    %85 = vector.broadcast %84 : f32 to vector<64x128xf32>
    %86 = arith.mulf %41, %85 : vector<64x128xf32>
    %87 = arith.addf %83, %86 : vector<64x128xf32>
    %c0_37 = arith.constant 0 : index
    %c5_38 = arith.constant 5 : index
    %88 = memref.load %arg5[%c0_37, %c5_38] : memref<8x8xf32, #tpu.memory_space<smem>>
    %89 = vector.broadcast %88 : f32 to vector<64x128xf32>
    %90 = arith.mulf %49, %89 : vector<64x128xf32>
    %91 = arith.addf %87, %90 : vector<64x128xf32>
    %c0_39 = arith.constant 0 : index
    %c6_40 = arith.constant 6 : index
    %92 = memref.load %arg5[%c0_39, %c6_40] : memref<8x8xf32, #tpu.memory_space<smem>>
    %93 = vector.broadcast %92 : f32 to vector<64x128xf32>
    %94 = arith.mulf %57, %93 : vector<64x128xf32>
    %95 = arith.addf %91, %94 : vector<64x128xf32>
    %c0_41 = arith.constant 0 : index
    %c7_42 = arith.constant 7 : index
    %96 = memref.load %arg5[%c0_41, %c7_42] : memref<8x8xf32, #tpu.memory_space<smem>>
    %97 = vector.broadcast %96 : f32 to vector<64x128xf32>
    %98 = arith.mulf %65, %97 : vector<64x128xf32>
    %99 = arith.addf %95, %98 : vector<64x128xf32>
    %cst_43 = arith.constant 0.000000e+00 : f32
    %100 = vector.broadcast %cst_43 : f32 to vector<64x128xf32>
    %101 = arith.maximumf %99, %100 : vector<64x128xf32>
    %c1_44 = arith.constant 1 : index
    %c0_45 = arith.constant 0 : index
    %102 = memref.load %arg5[%c1_44, %c0_45] : memref<8x8xf32, #tpu.memory_space<smem>>
    %103 = vector.broadcast %102 : f32 to vector<64x128xf32>
    %104 = arith.mulf %9, %103 : vector<64x128xf32>
    %c1_46 = arith.constant 1 : index
    %105 = memref.load %arg6[%c1_46] : memref<8xf32, #tpu.memory_space<smem>>
    %106 = vector.broadcast %105 : f32 to vector<64x128xf32>
    %107 = arith.addf %104, %106 : vector<64x128xf32>
    %c1_47 = arith.constant 1 : index
    %c1_48 = arith.constant 1 : index
    %108 = memref.load %arg5[%c1_47, %c1_48] : memref<8x8xf32, #tpu.memory_space<smem>>
    %109 = vector.broadcast %108 : f32 to vector<64x128xf32>
    %110 = arith.mulf %17, %109 : vector<64x128xf32>
    %111 = arith.addf %107, %110 : vector<64x128xf32>
    %c1_49 = arith.constant 1 : index
    %c2_50 = arith.constant 2 : index
    %112 = memref.load %arg5[%c1_49, %c2_50] : memref<8x8xf32, #tpu.memory_space<smem>>
    %113 = vector.broadcast %112 : f32 to vector<64x128xf32>
    %114 = arith.mulf %25, %113 : vector<64x128xf32>
    %115 = arith.addf %111, %114 : vector<64x128xf32>
    %c1_51 = arith.constant 1 : index
    %c3_52 = arith.constant 3 : index
    %116 = memref.load %arg5[%c1_51, %c3_52] : memref<8x8xf32, #tpu.memory_space<smem>>
    %117 = vector.broadcast %116 : f32 to vector<64x128xf32>
    %118 = arith.mulf %33, %117 : vector<64x128xf32>
    %119 = arith.addf %115, %118 : vector<64x128xf32>
    %c1_53 = arith.constant 1 : index
    %c4_54 = arith.constant 4 : index
    %120 = memref.load %arg5[%c1_53, %c4_54] : memref<8x8xf32, #tpu.memory_space<smem>>
    %121 = vector.broadcast %120 : f32 to vector<64x128xf32>
    %122 = arith.mulf %41, %121 : vector<64x128xf32>
    %123 = arith.addf %119, %122 : vector<64x128xf32>
    %c1_55 = arith.constant 1 : index
    %c5_56 = arith.constant 5 : index
    %124 = memref.load %arg5[%c1_55, %c5_56] : memref<8x8xf32, #tpu.memory_space<smem>>
    %125 = vector.broadcast %124 : f32 to vector<64x128xf32>
    %126 = arith.mulf %49, %125 : vector<64x128xf32>
    %127 = arith.addf %123, %126 : vector<64x128xf32>
    %c1_57 = arith.constant 1 : index
    %c6_58 = arith.constant 6 : index
    %128 = memref.load %arg5[%c1_57, %c6_58] : memref<8x8xf32, #tpu.memory_space<smem>>
    %129 = vector.broadcast %128 : f32 to vector<64x128xf32>
    %130 = arith.mulf %57, %129 : vector<64x128xf32>
    %131 = arith.addf %127, %130 : vector<64x128xf32>
    %c1_59 = arith.constant 1 : index
    %c7_60 = arith.constant 7 : index
    %132 = memref.load %arg5[%c1_59, %c7_60] : memref<8x8xf32, #tpu.memory_space<smem>>
    %133 = vector.broadcast %132 : f32 to vector<64x128xf32>
    %134 = arith.mulf %65, %133 : vector<64x128xf32>
    %135 = arith.addf %131, %134 : vector<64x128xf32>
    %cst_61 = arith.constant 0.000000e+00 : f32
    %136 = vector.broadcast %cst_61 : f32 to vector<64x128xf32>
    %137 = arith.maximumf %135, %136 : vector<64x128xf32>
    %c2_62 = arith.constant 2 : index
    %c0_63 = arith.constant 0 : index
    %138 = memref.load %arg5[%c2_62, %c0_63] : memref<8x8xf32, #tpu.memory_space<smem>>
    %139 = vector.broadcast %138 : f32 to vector<64x128xf32>
    %140 = arith.mulf %9, %139 : vector<64x128xf32>
    %c2_64 = arith.constant 2 : index
    %141 = memref.load %arg6[%c2_64] : memref<8xf32, #tpu.memory_space<smem>>
    %142 = vector.broadcast %141 : f32 to vector<64x128xf32>
    %143 = arith.addf %140, %142 : vector<64x128xf32>
    %c2_65 = arith.constant 2 : index
    %c1_66 = arith.constant 1 : index
    %144 = memref.load %arg5[%c2_65, %c1_66] : memref<8x8xf32, #tpu.memory_space<smem>>
    %145 = vector.broadcast %144 : f32 to vector<64x128xf32>
    %146 = arith.mulf %17, %145 : vector<64x128xf32>
    %147 = arith.addf %143, %146 : vector<64x128xf32>
    %c2_67 = arith.constant 2 : index
    %c2_68 = arith.constant 2 : index
    %148 = memref.load %arg5[%c2_67, %c2_68] : memref<8x8xf32, #tpu.memory_space<smem>>
    %149 = vector.broadcast %148 : f32 to vector<64x128xf32>
    %150 = arith.mulf %25, %149 : vector<64x128xf32>
    %151 = arith.addf %147, %150 : vector<64x128xf32>
    %c2_69 = arith.constant 2 : index
    %c3_70 = arith.constant 3 : index
    %152 = memref.load %arg5[%c2_69, %c3_70] : memref<8x8xf32, #tpu.memory_space<smem>>
    %153 = vector.broadcast %152 : f32 to vector<64x128xf32>
    %154 = arith.mulf %33, %153 : vector<64x128xf32>
    %155 = arith.addf %151, %154 : vector<64x128xf32>
    %c2_71 = arith.constant 2 : index
    %c4_72 = arith.constant 4 : index
    %156 = memref.load %arg5[%c2_71, %c4_72] : memref<8x8xf32, #tpu.memory_space<smem>>
    %157 = vector.broadcast %156 : f32 to vector<64x128xf32>
    %158 = arith.mulf %41, %157 : vector<64x128xf32>
    %159 = arith.addf %155, %158 : vector<64x128xf32>
    %c2_73 = arith.constant 2 : index
    %c5_74 = arith.constant 5 : index
    %160 = memref.load %arg5[%c2_73, %c5_74] : memref<8x8xf32, #tpu.memory_space<smem>>
    %161 = vector.broadcast %160 : f32 to vector<64x128xf32>
    %162 = arith.mulf %49, %161 : vector<64x128xf32>
    %163 = arith.addf %159, %162 : vector<64x128xf32>
    %c2_75 = arith.constant 2 : index
    %c6_76 = arith.constant 6 : index
    %164 = memref.load %arg5[%c2_75, %c6_76] : memref<8x8xf32, #tpu.memory_space<smem>>
    %165 = vector.broadcast %164 : f32 to vector<64x128xf32>
    %166 = arith.mulf %57, %165 : vector<64x128xf32>
    %167 = arith.addf %163, %166 : vector<64x128xf32>
    %c2_77 = arith.constant 2 : index
    %c7_78 = arith.constant 7 : index
    %168 = memref.load %arg5[%c2_77, %c7_78] : memref<8x8xf32, #tpu.memory_space<smem>>
    %169 = vector.broadcast %168 : f32 to vector<64x128xf32>
    %170 = arith.mulf %65, %169 : vector<64x128xf32>
    %171 = arith.addf %167, %170 : vector<64x128xf32>
    %cst_79 = arith.constant 0.000000e+00 : f32
    %172 = vector.broadcast %cst_79 : f32 to vector<64x128xf32>
    %173 = arith.maximumf %171, %172 : vector<64x128xf32>
    %c3_80 = arith.constant 3 : index
    %c0_81 = arith.constant 0 : index
    %174 = memref.load %arg5[%c3_80, %c0_81] : memref<8x8xf32, #tpu.memory_space<smem>>
    %175 = vector.broadcast %174 : f32 to vector<64x128xf32>
    %176 = arith.mulf %9, %175 : vector<64x128xf32>
    %c3_82 = arith.constant 3 : index
    %177 = memref.load %arg6[%c3_82] : memref<8xf32, #tpu.memory_space<smem>>
    %178 = vector.broadcast %177 : f32 to vector<64x128xf32>
    %179 = arith.addf %176, %178 : vector<64x128xf32>
    %c3_83 = arith.constant 3 : index
    %c1_84 = arith.constant 1 : index
    %180 = memref.load %arg5[%c3_83, %c1_84] : memref<8x8xf32, #tpu.memory_space<smem>>
    %181 = vector.broadcast %180 : f32 to vector<64x128xf32>
    %182 = arith.mulf %17, %181 : vector<64x128xf32>
    %183 = arith.addf %179, %182 : vector<64x128xf32>
    %c3_85 = arith.constant 3 : index
    %c2_86 = arith.constant 2 : index
    %184 = memref.load %arg5[%c3_85, %c2_86] : memref<8x8xf32, #tpu.memory_space<smem>>
    %185 = vector.broadcast %184 : f32 to vector<64x128xf32>
    %186 = arith.mulf %25, %185 : vector<64x128xf32>
    %187 = arith.addf %183, %186 : vector<64x128xf32>
    %c3_87 = arith.constant 3 : index
    %c3_88 = arith.constant 3 : index
    %188 = memref.load %arg5[%c3_87, %c3_88] : memref<8x8xf32, #tpu.memory_space<smem>>
    %189 = vector.broadcast %188 : f32 to vector<64x128xf32>
    %190 = arith.mulf %33, %189 : vector<64x128xf32>
    %191 = arith.addf %187, %190 : vector<64x128xf32>
    %c3_89 = arith.constant 3 : index
    %c4_90 = arith.constant 4 : index
    %192 = memref.load %arg5[%c3_89, %c4_90] : memref<8x8xf32, #tpu.memory_space<smem>>
    %193 = vector.broadcast %192 : f32 to vector<64x128xf32>
    %194 = arith.mulf %41, %193 : vector<64x128xf32>
    %195 = arith.addf %191, %194 : vector<64x128xf32>
    %c3_91 = arith.constant 3 : index
    %c5_92 = arith.constant 5 : index
    %196 = memref.load %arg5[%c3_91, %c5_92] : memref<8x8xf32, #tpu.memory_space<smem>>
    %197 = vector.broadcast %196 : f32 to vector<64x128xf32>
    %198 = arith.mulf %49, %197 : vector<64x128xf32>
    %199 = arith.addf %195, %198 : vector<64x128xf32>
    %c3_93 = arith.constant 3 : index
    %c6_94 = arith.constant 6 : index
    %200 = memref.load %arg5[%c3_93, %c6_94] : memref<8x8xf32, #tpu.memory_space<smem>>
    %201 = vector.broadcast %200 : f32 to vector<64x128xf32>
    %202 = arith.mulf %57, %201 : vector<64x128xf32>
    %203 = arith.addf %199, %202 : vector<64x128xf32>
    %c3_95 = arith.constant 3 : index
    %c7_96 = arith.constant 7 : index
    %204 = memref.load %arg5[%c3_95, %c7_96] : memref<8x8xf32, #tpu.memory_space<smem>>
    %205 = vector.broadcast %204 : f32 to vector<64x128xf32>
    %206 = arith.mulf %65, %205 : vector<64x128xf32>
    %207 = arith.addf %203, %206 : vector<64x128xf32>
    %cst_97 = arith.constant 0.000000e+00 : f32
    %208 = vector.broadcast %cst_97 : f32 to vector<64x128xf32>
    %209 = arith.maximumf %207, %208 : vector<64x128xf32>
    %c4_98 = arith.constant 4 : index
    %c0_99 = arith.constant 0 : index
    %210 = memref.load %arg5[%c4_98, %c0_99] : memref<8x8xf32, #tpu.memory_space<smem>>
    %211 = vector.broadcast %210 : f32 to vector<64x128xf32>
    %212 = arith.mulf %9, %211 : vector<64x128xf32>
    %c4_100 = arith.constant 4 : index
    %213 = memref.load %arg6[%c4_100] : memref<8xf32, #tpu.memory_space<smem>>
    %214 = vector.broadcast %213 : f32 to vector<64x128xf32>
    %215 = arith.addf %212, %214 : vector<64x128xf32>
    %c4_101 = arith.constant 4 : index
    %c1_102 = arith.constant 1 : index
    %216 = memref.load %arg5[%c4_101, %c1_102] : memref<8x8xf32, #tpu.memory_space<smem>>
    %217 = vector.broadcast %216 : f32 to vector<64x128xf32>
    %218 = arith.mulf %17, %217 : vector<64x128xf32>
    %219 = arith.addf %215, %218 : vector<64x128xf32>
    %c4_103 = arith.constant 4 : index
    %c2_104 = arith.constant 2 : index
    %220 = memref.load %arg5[%c4_103, %c2_104] : memref<8x8xf32, #tpu.memory_space<smem>>
    %221 = vector.broadcast %220 : f32 to vector<64x128xf32>
    %222 = arith.mulf %25, %221 : vector<64x128xf32>
    %223 = arith.addf %219, %222 : vector<64x128xf32>
    %c4_105 = arith.constant 4 : index
    %c3_106 = arith.constant 3 : index
    %224 = memref.load %arg5[%c4_105, %c3_106] : memref<8x8xf32, #tpu.memory_space<smem>>
    %225 = vector.broadcast %224 : f32 to vector<64x128xf32>
    %226 = arith.mulf %33, %225 : vector<64x128xf32>
    %227 = arith.addf %223, %226 : vector<64x128xf32>
    %c4_107 = arith.constant 4 : index
    %c4_108 = arith.constant 4 : index
    %228 = memref.load %arg5[%c4_107, %c4_108] : memref<8x8xf32, #tpu.memory_space<smem>>
    %229 = vector.broadcast %228 : f32 to vector<64x128xf32>
    %230 = arith.mulf %41, %229 : vector<64x128xf32>
    %231 = arith.addf %227, %230 : vector<64x128xf32>
    %c4_109 = arith.constant 4 : index
    %c5_110 = arith.constant 5 : index
    %232 = memref.load %arg5[%c4_109, %c5_110] : memref<8x8xf32, #tpu.memory_space<smem>>
    %233 = vector.broadcast %232 : f32 to vector<64x128xf32>
    %234 = arith.mulf %49, %233 : vector<64x128xf32>
    %235 = arith.addf %231, %234 : vector<64x128xf32>
    %c4_111 = arith.constant 4 : index
    %c6_112 = arith.constant 6 : index
    %236 = memref.load %arg5[%c4_111, %c6_112] : memref<8x8xf32, #tpu.memory_space<smem>>
    %237 = vector.broadcast %236 : f32 to vector<64x128xf32>
    %238 = arith.mulf %57, %237 : vector<64x128xf32>
    %239 = arith.addf %235, %238 : vector<64x128xf32>
    %c4_113 = arith.constant 4 : index
    %c7_114 = arith.constant 7 : index
    %240 = memref.load %arg5[%c4_113, %c7_114] : memref<8x8xf32, #tpu.memory_space<smem>>
    %241 = vector.broadcast %240 : f32 to vector<64x128xf32>
    %242 = arith.mulf %65, %241 : vector<64x128xf32>
    %243 = arith.addf %239, %242 : vector<64x128xf32>
    %cst_115 = arith.constant 0.000000e+00 : f32
    %244 = vector.broadcast %cst_115 : f32 to vector<64x128xf32>
    %245 = arith.maximumf %243, %244 : vector<64x128xf32>
    %c5_116 = arith.constant 5 : index
    %c0_117 = arith.constant 0 : index
    %246 = memref.load %arg5[%c5_116, %c0_117] : memref<8x8xf32, #tpu.memory_space<smem>>
    %247 = vector.broadcast %246 : f32 to vector<64x128xf32>
    %248 = arith.mulf %9, %247 : vector<64x128xf32>
    %c5_118 = arith.constant 5 : index
    %249 = memref.load %arg6[%c5_118] : memref<8xf32, #tpu.memory_space<smem>>
    %250 = vector.broadcast %249 : f32 to vector<64x128xf32>
    %251 = arith.addf %248, %250 : vector<64x128xf32>
    %c5_119 = arith.constant 5 : index
    %c1_120 = arith.constant 1 : index
    %252 = memref.load %arg5[%c5_119, %c1_120] : memref<8x8xf32, #tpu.memory_space<smem>>
    %253 = vector.broadcast %252 : f32 to vector<64x128xf32>
    %254 = arith.mulf %17, %253 : vector<64x128xf32>
    %255 = arith.addf %251, %254 : vector<64x128xf32>
    %c5_121 = arith.constant 5 : index
    %c2_122 = arith.constant 2 : index
    %256 = memref.load %arg5[%c5_121, %c2_122] : memref<8x8xf32, #tpu.memory_space<smem>>
    %257 = vector.broadcast %256 : f32 to vector<64x128xf32>
    %258 = arith.mulf %25, %257 : vector<64x128xf32>
    %259 = arith.addf %255, %258 : vector<64x128xf32>
    %c5_123 = arith.constant 5 : index
    %c3_124 = arith.constant 3 : index
    %260 = memref.load %arg5[%c5_123, %c3_124] : memref<8x8xf32, #tpu.memory_space<smem>>
    %261 = vector.broadcast %260 : f32 to vector<64x128xf32>
    %262 = arith.mulf %33, %261 : vector<64x128xf32>
    %263 = arith.addf %259, %262 : vector<64x128xf32>
    %c5_125 = arith.constant 5 : index
    %c4_126 = arith.constant 4 : index
    %264 = memref.load %arg5[%c5_125, %c4_126] : memref<8x8xf32, #tpu.memory_space<smem>>
    %265 = vector.broadcast %264 : f32 to vector<64x128xf32>
    %266 = arith.mulf %41, %265 : vector<64x128xf32>
    %267 = arith.addf %263, %266 : vector<64x128xf32>
    %c5_127 = arith.constant 5 : index
    %c5_128 = arith.constant 5 : index
    %268 = memref.load %arg5[%c5_127, %c5_128] : memref<8x8xf32, #tpu.memory_space<smem>>
    %269 = vector.broadcast %268 : f32 to vector<64x128xf32>
    %270 = arith.mulf %49, %269 : vector<64x128xf32>
    %271 = arith.addf %267, %270 : vector<64x128xf32>
    %c5_129 = arith.constant 5 : index
    %c6_130 = arith.constant 6 : index
    %272 = memref.load %arg5[%c5_129, %c6_130] : memref<8x8xf32, #tpu.memory_space<smem>>
    %273 = vector.broadcast %272 : f32 to vector<64x128xf32>
    %274 = arith.mulf %57, %273 : vector<64x128xf32>
    %275 = arith.addf %271, %274 : vector<64x128xf32>
    %c5_131 = arith.constant 5 : index
    %c7_132 = arith.constant 7 : index
    %276 = memref.load %arg5[%c5_131, %c7_132] : memref<8x8xf32, #tpu.memory_space<smem>>
    %277 = vector.broadcast %276 : f32 to vector<64x128xf32>
    %278 = arith.mulf %65, %277 : vector<64x128xf32>
    %279 = arith.addf %275, %278 : vector<64x128xf32>
    %cst_133 = arith.constant 0.000000e+00 : f32
    %280 = vector.broadcast %cst_133 : f32 to vector<64x128xf32>
    %281 = arith.maximumf %279, %280 : vector<64x128xf32>
    %c6_134 = arith.constant 6 : index
    %c0_135 = arith.constant 0 : index
    %282 = memref.load %arg5[%c6_134, %c0_135] : memref<8x8xf32, #tpu.memory_space<smem>>
    %283 = vector.broadcast %282 : f32 to vector<64x128xf32>
    %284 = arith.mulf %9, %283 : vector<64x128xf32>
    %c6_136 = arith.constant 6 : index
    %285 = memref.load %arg6[%c6_136] : memref<8xf32, #tpu.memory_space<smem>>
    %286 = vector.broadcast %285 : f32 to vector<64x128xf32>
    %287 = arith.addf %284, %286 : vector<64x128xf32>
    %c6_137 = arith.constant 6 : index
    %c1_138 = arith.constant 1 : index
    %288 = memref.load %arg5[%c6_137, %c1_138] : memref<8x8xf32, #tpu.memory_space<smem>>
    %289 = vector.broadcast %288 : f32 to vector<64x128xf32>
    %290 = arith.mulf %17, %289 : vector<64x128xf32>
    %291 = arith.addf %287, %290 : vector<64x128xf32>
    %c6_139 = arith.constant 6 : index
    %c2_140 = arith.constant 2 : index
    %292 = memref.load %arg5[%c6_139, %c2_140] : memref<8x8xf32, #tpu.memory_space<smem>>
    %293 = vector.broadcast %292 : f32 to vector<64x128xf32>
    %294 = arith.mulf %25, %293 : vector<64x128xf32>
    %295 = arith.addf %291, %294 : vector<64x128xf32>
    %c6_141 = arith.constant 6 : index
    %c3_142 = arith.constant 3 : index
    %296 = memref.load %arg5[%c6_141, %c3_142] : memref<8x8xf32, #tpu.memory_space<smem>>
    %297 = vector.broadcast %296 : f32 to vector<64x128xf32>
    %298 = arith.mulf %33, %297 : vector<64x128xf32>
    %299 = arith.addf %295, %298 : vector<64x128xf32>
    %c6_143 = arith.constant 6 : index
    %c4_144 = arith.constant 4 : index
    %300 = memref.load %arg5[%c6_143, %c4_144] : memref<8x8xf32, #tpu.memory_space<smem>>
    %301 = vector.broadcast %300 : f32 to vector<64x128xf32>
    %302 = arith.mulf %41, %301 : vector<64x128xf32>
    %303 = arith.addf %299, %302 : vector<64x128xf32>
    %c6_145 = arith.constant 6 : index
    %c5_146 = arith.constant 5 : index
    %304 = memref.load %arg5[%c6_145, %c5_146] : memref<8x8xf32, #tpu.memory_space<smem>>
    %305 = vector.broadcast %304 : f32 to vector<64x128xf32>
    %306 = arith.mulf %49, %305 : vector<64x128xf32>
    %307 = arith.addf %303, %306 : vector<64x128xf32>
    %c6_147 = arith.constant 6 : index
    %c6_148 = arith.constant 6 : index
    %308 = memref.load %arg5[%c6_147, %c6_148] : memref<8x8xf32, #tpu.memory_space<smem>>
    %309 = vector.broadcast %308 : f32 to vector<64x128xf32>
    %310 = arith.mulf %57, %309 : vector<64x128xf32>
    %311 = arith.addf %307, %310 : vector<64x128xf32>
    %c6_149 = arith.constant 6 : index
    %c7_150 = arith.constant 7 : index
    %312 = memref.load %arg5[%c6_149, %c7_150] : memref<8x8xf32, #tpu.memory_space<smem>>
    %313 = vector.broadcast %312 : f32 to vector<64x128xf32>
    %314 = arith.mulf %65, %313 : vector<64x128xf32>
    %315 = arith.addf %311, %314 : vector<64x128xf32>
    %cst_151 = arith.constant 0.000000e+00 : f32
    %316 = vector.broadcast %cst_151 : f32 to vector<64x128xf32>
    %317 = arith.maximumf %315, %316 : vector<64x128xf32>
    %c7_152 = arith.constant 7 : index
    %c0_153 = arith.constant 0 : index
    %318 = memref.load %arg5[%c7_152, %c0_153] : memref<8x8xf32, #tpu.memory_space<smem>>
    %319 = vector.broadcast %318 : f32 to vector<64x128xf32>
    %320 = arith.mulf %9, %319 : vector<64x128xf32>
    %c7_154 = arith.constant 7 : index
    %321 = memref.load %arg6[%c7_154] : memref<8xf32, #tpu.memory_space<smem>>
    %322 = vector.broadcast %321 : f32 to vector<64x128xf32>
    %323 = arith.addf %320, %322 : vector<64x128xf32>
    %c7_155 = arith.constant 7 : index
    %c1_156 = arith.constant 1 : index
    %324 = memref.load %arg5[%c7_155, %c1_156] : memref<8x8xf32, #tpu.memory_space<smem>>
    %325 = vector.broadcast %324 : f32 to vector<64x128xf32>
    %326 = arith.mulf %17, %325 : vector<64x128xf32>
    %327 = arith.addf %323, %326 : vector<64x128xf32>
    %c7_157 = arith.constant 7 : index
    %c2_158 = arith.constant 2 : index
    %328 = memref.load %arg5[%c7_157, %c2_158] : memref<8x8xf32, #tpu.memory_space<smem>>
    %329 = vector.broadcast %328 : f32 to vector<64x128xf32>
    %330 = arith.mulf %25, %329 : vector<64x128xf32>
    %331 = arith.addf %327, %330 : vector<64x128xf32>
    %c7_159 = arith.constant 7 : index
    %c3_160 = arith.constant 3 : index
    %332 = memref.load %arg5[%c7_159, %c3_160] : memref<8x8xf32, #tpu.memory_space<smem>>
    %333 = vector.broadcast %332 : f32 to vector<64x128xf32>
    %334 = arith.mulf %33, %333 : vector<64x128xf32>
    %335 = arith.addf %331, %334 : vector<64x128xf32>
    %c7_161 = arith.constant 7 : index
    %c4_162 = arith.constant 4 : index
    %336 = memref.load %arg5[%c7_161, %c4_162] : memref<8x8xf32, #tpu.memory_space<smem>>
    %337 = vector.broadcast %336 : f32 to vector<64x128xf32>
    %338 = arith.mulf %41, %337 : vector<64x128xf32>
    %339 = arith.addf %335, %338 : vector<64x128xf32>
    %c7_163 = arith.constant 7 : index
    %c5_164 = arith.constant 5 : index
    %340 = memref.load %arg5[%c7_163, %c5_164] : memref<8x8xf32, #tpu.memory_space<smem>>
    %341 = vector.broadcast %340 : f32 to vector<64x128xf32>
    %342 = arith.mulf %49, %341 : vector<64x128xf32>
    %343 = arith.addf %339, %342 : vector<64x128xf32>
    %c7_165 = arith.constant 7 : index
    %c6_166 = arith.constant 6 : index
    %344 = memref.load %arg5[%c7_165, %c6_166] : memref<8x8xf32, #tpu.memory_space<smem>>
    %345 = vector.broadcast %344 : f32 to vector<64x128xf32>
    %346 = arith.mulf %57, %345 : vector<64x128xf32>
    %347 = arith.addf %343, %346 : vector<64x128xf32>
    %c7_167 = arith.constant 7 : index
    %c7_168 = arith.constant 7 : index
    %348 = memref.load %arg5[%c7_167, %c7_168] : memref<8x8xf32, #tpu.memory_space<smem>>
    %349 = vector.broadcast %348 : f32 to vector<64x128xf32>
    %350 = arith.mulf %65, %349 : vector<64x128xf32>
    %351 = arith.addf %347, %350 : vector<64x128xf32>
    %cst_169 = arith.constant 0.000000e+00 : f32
    %352 = vector.broadcast %cst_169 : f32 to vector<64x128xf32>
    %353 = arith.maximumf %351, %352 : vector<64x128xf32>
    %c0_170 = arith.constant 0 : index
    %c0_171 = arith.constant 0 : index
    %354 = memref.load %arg7[%c0_170, %c0_171] : memref<3x8xf32, #tpu.memory_space<smem>>
    %355 = vector.broadcast %354 : f32 to vector<64x128xf32>
    %356 = arith.mulf %101, %355 : vector<64x128xf32>
    %c0_172 = arith.constant 0 : index
    %357 = memref.load %arg8[%c0_172] : memref<3xf32, #tpu.memory_space<smem>>
    %358 = vector.broadcast %357 : f32 to vector<64x128xf32>
    %359 = arith.addf %356, %358 : vector<64x128xf32>
    %c0_173 = arith.constant 0 : index
    %c1_174 = arith.constant 1 : index
    %360 = memref.load %arg7[%c0_173, %c1_174] : memref<3x8xf32, #tpu.memory_space<smem>>
    %361 = vector.broadcast %360 : f32 to vector<64x128xf32>
    %362 = arith.mulf %137, %361 : vector<64x128xf32>
    %363 = arith.addf %359, %362 : vector<64x128xf32>
    %c0_175 = arith.constant 0 : index
    %c2_176 = arith.constant 2 : index
    %364 = memref.load %arg7[%c0_175, %c2_176] : memref<3x8xf32, #tpu.memory_space<smem>>
    %365 = vector.broadcast %364 : f32 to vector<64x128xf32>
    %366 = arith.mulf %173, %365 : vector<64x128xf32>
    %367 = arith.addf %363, %366 : vector<64x128xf32>
    %c0_177 = arith.constant 0 : index
    %c3_178 = arith.constant 3 : index
    %368 = memref.load %arg7[%c0_177, %c3_178] : memref<3x8xf32, #tpu.memory_space<smem>>
    %369 = vector.broadcast %368 : f32 to vector<64x128xf32>
    %370 = arith.mulf %209, %369 : vector<64x128xf32>
    %371 = arith.addf %367, %370 : vector<64x128xf32>
    %c0_179 = arith.constant 0 : index
    %c4_180 = arith.constant 4 : index
    %372 = memref.load %arg7[%c0_179, %c4_180] : memref<3x8xf32, #tpu.memory_space<smem>>
    %373 = vector.broadcast %372 : f32 to vector<64x128xf32>
    %374 = arith.mulf %245, %373 : vector<64x128xf32>
    %375 = arith.addf %371, %374 : vector<64x128xf32>
    %c0_181 = arith.constant 0 : index
    %c5_182 = arith.constant 5 : index
    %376 = memref.load %arg7[%c0_181, %c5_182] : memref<3x8xf32, #tpu.memory_space<smem>>
    %377 = vector.broadcast %376 : f32 to vector<64x128xf32>
    %378 = arith.mulf %281, %377 : vector<64x128xf32>
    %379 = arith.addf %375, %378 : vector<64x128xf32>
    %c0_183 = arith.constant 0 : index
    %c6_184 = arith.constant 6 : index
    %380 = memref.load %arg7[%c0_183, %c6_184] : memref<3x8xf32, #tpu.memory_space<smem>>
    %381 = vector.broadcast %380 : f32 to vector<64x128xf32>
    %382 = arith.mulf %317, %381 : vector<64x128xf32>
    %383 = arith.addf %379, %382 : vector<64x128xf32>
    %c0_185 = arith.constant 0 : index
    %c7_186 = arith.constant 7 : index
    %384 = memref.load %arg7[%c0_185, %c7_186] : memref<3x8xf32, #tpu.memory_space<smem>>
    %385 = vector.broadcast %384 : f32 to vector<64x128xf32>
    %386 = arith.mulf %353, %385 : vector<64x128xf32>
    %387 = arith.addf %383, %386 : vector<64x128xf32>
    %c1_187 = arith.constant 1 : index
    %c0_188 = arith.constant 0 : index
    %388 = memref.load %arg7[%c1_187, %c0_188] : memref<3x8xf32, #tpu.memory_space<smem>>
    %389 = vector.broadcast %388 : f32 to vector<64x128xf32>
    %390 = arith.mulf %101, %389 : vector<64x128xf32>
    %c1_189 = arith.constant 1 : index
    %391 = memref.load %arg8[%c1_189] : memref<3xf32, #tpu.memory_space<smem>>
    %392 = vector.broadcast %391 : f32 to vector<64x128xf32>
    %393 = arith.addf %390, %392 : vector<64x128xf32>
    %c1_190 = arith.constant 1 : index
    %c1_191 = arith.constant 1 : index
    %394 = memref.load %arg7[%c1_190, %c1_191] : memref<3x8xf32, #tpu.memory_space<smem>>
    %395 = vector.broadcast %394 : f32 to vector<64x128xf32>
    %396 = arith.mulf %137, %395 : vector<64x128xf32>
    %397 = arith.addf %393, %396 : vector<64x128xf32>
    %c1_192 = arith.constant 1 : index
    %c2_193 = arith.constant 2 : index
    %398 = memref.load %arg7[%c1_192, %c2_193] : memref<3x8xf32, #tpu.memory_space<smem>>
    %399 = vector.broadcast %398 : f32 to vector<64x128xf32>
    %400 = arith.mulf %173, %399 : vector<64x128xf32>
    %401 = arith.addf %397, %400 : vector<64x128xf32>
    %c1_194 = arith.constant 1 : index
    %c3_195 = arith.constant 3 : index
    %402 = memref.load %arg7[%c1_194, %c3_195] : memref<3x8xf32, #tpu.memory_space<smem>>
    %403 = vector.broadcast %402 : f32 to vector<64x128xf32>
    %404 = arith.mulf %209, %403 : vector<64x128xf32>
    %405 = arith.addf %401, %404 : vector<64x128xf32>
    %c1_196 = arith.constant 1 : index
    %c4_197 = arith.constant 4 : index
    %406 = memref.load %arg7[%c1_196, %c4_197] : memref<3x8xf32, #tpu.memory_space<smem>>
    %407 = vector.broadcast %406 : f32 to vector<64x128xf32>
    %408 = arith.mulf %245, %407 : vector<64x128xf32>
    %409 = arith.addf %405, %408 : vector<64x128xf32>
    %c1_198 = arith.constant 1 : index
    %c5_199 = arith.constant 5 : index
    %410 = memref.load %arg7[%c1_198, %c5_199] : memref<3x8xf32, #tpu.memory_space<smem>>
    %411 = vector.broadcast %410 : f32 to vector<64x128xf32>
    %412 = arith.mulf %281, %411 : vector<64x128xf32>
    %413 = arith.addf %409, %412 : vector<64x128xf32>
    %c1_200 = arith.constant 1 : index
    %c6_201 = arith.constant 6 : index
    %414 = memref.load %arg7[%c1_200, %c6_201] : memref<3x8xf32, #tpu.memory_space<smem>>
    %415 = vector.broadcast %414 : f32 to vector<64x128xf32>
    %416 = arith.mulf %317, %415 : vector<64x128xf32>
    %417 = arith.addf %413, %416 : vector<64x128xf32>
    %c1_202 = arith.constant 1 : index
    %c7_203 = arith.constant 7 : index
    %418 = memref.load %arg7[%c1_202, %c7_203] : memref<3x8xf32, #tpu.memory_space<smem>>
    %419 = vector.broadcast %418 : f32 to vector<64x128xf32>
    %420 = arith.mulf %353, %419 : vector<64x128xf32>
    %421 = arith.addf %417, %420 : vector<64x128xf32>
    %c2_204 = arith.constant 2 : index
    %c0_205 = arith.constant 0 : index
    %422 = memref.load %arg7[%c2_204, %c0_205] : memref<3x8xf32, #tpu.memory_space<smem>>
    %423 = vector.broadcast %422 : f32 to vector<64x128xf32>
    %424 = arith.mulf %101, %423 : vector<64x128xf32>
    %c2_206 = arith.constant 2 : index
    %425 = memref.load %arg8[%c2_206] : memref<3xf32, #tpu.memory_space<smem>>
    %426 = vector.broadcast %425 : f32 to vector<64x128xf32>
    %427 = arith.addf %424, %426 : vector<64x128xf32>
    %c2_207 = arith.constant 2 : index
    %c1_208 = arith.constant 1 : index
    %428 = memref.load %arg7[%c2_207, %c1_208] : memref<3x8xf32, #tpu.memory_space<smem>>
    %429 = vector.broadcast %428 : f32 to vector<64x128xf32>
    %430 = arith.mulf %137, %429 : vector<64x128xf32>
    %431 = arith.addf %427, %430 : vector<64x128xf32>
    %c2_209 = arith.constant 2 : index
    %c2_210 = arith.constant 2 : index
    %432 = memref.load %arg7[%c2_209, %c2_210] : memref<3x8xf32, #tpu.memory_space<smem>>
    %433 = vector.broadcast %432 : f32 to vector<64x128xf32>
    %434 = arith.mulf %173, %433 : vector<64x128xf32>
    %435 = arith.addf %431, %434 : vector<64x128xf32>
    %c2_211 = arith.constant 2 : index
    %c3_212 = arith.constant 3 : index
    %436 = memref.load %arg7[%c2_211, %c3_212] : memref<3x8xf32, #tpu.memory_space<smem>>
    %437 = vector.broadcast %436 : f32 to vector<64x128xf32>
    %438 = arith.mulf %209, %437 : vector<64x128xf32>
    %439 = arith.addf %435, %438 : vector<64x128xf32>
    %c2_213 = arith.constant 2 : index
    %c4_214 = arith.constant 4 : index
    %440 = memref.load %arg7[%c2_213, %c4_214] : memref<3x8xf32, #tpu.memory_space<smem>>
    %441 = vector.broadcast %440 : f32 to vector<64x128xf32>
    %442 = arith.mulf %245, %441 : vector<64x128xf32>
    %443 = arith.addf %439, %442 : vector<64x128xf32>
    %c2_215 = arith.constant 2 : index
    %c5_216 = arith.constant 5 : index
    %444 = memref.load %arg7[%c2_215, %c5_216] : memref<3x8xf32, #tpu.memory_space<smem>>
    %445 = vector.broadcast %444 : f32 to vector<64x128xf32>
    %446 = arith.mulf %281, %445 : vector<64x128xf32>
    %447 = arith.addf %443, %446 : vector<64x128xf32>
    %c2_217 = arith.constant 2 : index
    %c6_218 = arith.constant 6 : index
    %448 = memref.load %arg7[%c2_217, %c6_218] : memref<3x8xf32, #tpu.memory_space<smem>>
    %449 = vector.broadcast %448 : f32 to vector<64x128xf32>
    %450 = arith.mulf %317, %449 : vector<64x128xf32>
    %451 = arith.addf %447, %450 : vector<64x128xf32>
    %c2_219 = arith.constant 2 : index
    %c7_220 = arith.constant 7 : index
    %452 = memref.load %arg7[%c2_219, %c7_220] : memref<3x8xf32, #tpu.memory_space<smem>>
    %453 = vector.broadcast %452 : f32 to vector<64x128xf32>
    %454 = arith.mulf %353, %453 : vector<64x128xf32>
    %455 = arith.addf %451, %454 : vector<64x128xf32>
    %c0_221 = arith.constant 0 : index
    %c0_222 = arith.constant 0 : index
    %c0_223 = arith.constant 0 : index
    %456 = vector.load %arg2[%c0_221, %c0_222, %c0_223] : memref<3x64x128xf32, #tpu.memory_space<vmem>>, vector<1x64x128xf32>
    %457 = vector.shape_cast %456 : vector<1x64x128xf32> to vector<64x128xf32>
    %c1_224 = arith.constant 1 : index
    %c0_225 = arith.constant 0 : index
    %c0_226 = arith.constant 0 : index
    %458 = vector.load %arg2[%c1_224, %c0_225, %c0_226] : memref<3x64x128xf32, #tpu.memory_space<vmem>>, vector<1x64x128xf32>
    %459 = vector.shape_cast %458 : vector<1x64x128xf32> to vector<64x128xf32>
    %c2_227 = arith.constant 2 : index
    %c0_228 = arith.constant 0 : index
    %c0_229 = arith.constant 0 : index
    %460 = vector.load %arg2[%c2_227, %c0_228, %c0_229] : memref<3x64x128xf32, #tpu.memory_space<vmem>>, vector<1x64x128xf32>
    %461 = vector.shape_cast %460 : vector<1x64x128xf32> to vector<64x128xf32>
    %c0_230 = arith.constant 0 : index
    %c0_231 = arith.constant 0 : index
    %c0_232 = arith.constant 0 : index
    %462 = vector.load %arg12[%c0_230, %c0_231, %c0_232] : memref<3x64x128xf32, #tpu.memory_space<vmem>>, vector<1x64x128xf32>
    %463 = vector.shape_cast %462 : vector<1x64x128xf32> to vector<64x128xf32>
    %464 = vector.shape_cast %387 : vector<64x128xf32> to vector<1x64x128xf32>
    tpu.vector_store %arg12[%c0_230, %c0_231, %c0_232], %464 {strides = array<i32>} : memref<3x64x128xf32, #tpu.memory_space<vmem>>, vector<1x64x128xf32>,
    %c1_233 = arith.constant 1 : index
    %c0_234 = arith.constant 0 : index
    %c0_235 = arith.constant 0 : index
    %465 = vector.load %arg12[%c1_233, %c0_234, %c0_235] : memref<3x64x128xf32, #tpu.memory_space<vmem>>, vector<1x64x128xf32>
    %466 = vector.shape_cast %465 : vector<1x64x128xf32> to vector<64x128xf32>
    %467 = vector.shape_cast %421 : vector<64x128xf32> to vector<1x64x128xf32>
    tpu.vector_store %arg12[%c1_233, %c0_234, %c0_235], %467 {strides = array<i32>} : memref<3x64x128xf32, #tpu.memory_space<vmem>>, vector<1x64x128xf32>,
    %c2_236 = arith.constant 2 : index
    %c0_237 = arith.constant 0 : index
    %c0_238 = arith.constant 0 : index
    %468 = vector.load %arg12[%c2_236, %c0_237, %c0_238] : memref<3x64x128xf32, #tpu.memory_space<vmem>>, vector<1x64x128xf32>
    %469 = vector.shape_cast %468 : vector<1x64x128xf32> to vector<64x128xf32>
    %470 = vector.shape_cast %455 : vector<64x128xf32> to vector<1x64x128xf32>
    tpu.vector_store %arg12[%c2_236, %c0_237, %c0_238], %470 {strides = array<i32>} : memref<3x64x128xf32, #tpu.memory_space<vmem>>, vector<1x64x128xf32>,
    %c0_239 = arith.constant 0 : index
    %c0_240 = arith.constant 0 : index
    %471 = memref.load %arg9[%c0_239, %c0_240] : memref<3x3xf32, #tpu.memory_space<smem>>
    %472 = vector.broadcast %471 : f32 to vector<64x128xf32>
    %473 = arith.mulf %457, %472 : vector<64x128xf32>
    %c0_241 = arith.constant 0 : index
    %474 = memref.load %arg11[%c0_241] : memref<3xf32, #tpu.memory_space<smem>>
    %475 = vector.broadcast %474 : f32 to vector<64x128xf32>
    %476 = arith.addf %473, %475 : vector<64x128xf32>
    %c0_242 = arith.constant 0 : index
    %c1_243 = arith.constant 1 : index
    %477 = memref.load %arg9[%c0_242, %c1_243] : memref<3x3xf32, #tpu.memory_space<smem>>
    %478 = vector.broadcast %477 : f32 to vector<64x128xf32>
    %479 = arith.mulf %459, %478 : vector<64x128xf32>
    %480 = arith.addf %476, %479 : vector<64x128xf32>
    %c0_244 = arith.constant 0 : index
    %c2_245 = arith.constant 2 : index
    %481 = memref.load %arg9[%c0_244, %c2_245] : memref<3x3xf32, #tpu.memory_space<smem>>
    %482 = vector.broadcast %481 : f32 to vector<64x128xf32>
    %483 = arith.mulf %461, %482 : vector<64x128xf32>
    %484 = arith.addf %480, %483 : vector<64x128xf32>
    %c0_246 = arith.constant 0 : index
    %c0_247 = arith.constant 0 : index
    %485 = memref.load %arg10[%c0_246, %c0_247] : memref<3x3xf32, #tpu.memory_space<smem>>
    %486 = vector.broadcast %485 : f32 to vector<64x128xf32>
    %487 = arith.mulf %387, %486 : vector<64x128xf32>
    %488 = arith.addf %484, %487 : vector<64x128xf32>
    %c0_248 = arith.constant 0 : index
    %c1_249 = arith.constant 1 : index
    %489 = memref.load %arg10[%c0_248, %c1_249] : memref<3x3xf32, #tpu.memory_space<smem>>
    %490 = vector.broadcast %489 : f32 to vector<64x128xf32>
    %491 = arith.mulf %421, %490 : vector<64x128xf32>
    %492 = arith.addf %488, %491 : vector<64x128xf32>
    %c0_250 = arith.constant 0 : index
    %c2_251 = arith.constant 2 : index
    %493 = memref.load %arg10[%c0_250, %c2_251] : memref<3x3xf32, #tpu.memory_space<smem>>
    %494 = vector.broadcast %493 : f32 to vector<64x128xf32>
    %495 = arith.mulf %455, %494 : vector<64x128xf32>
    %496 = arith.addf %492, %495 : vector<64x128xf32>
    %c0_252 = arith.constant 0 : index
    %c0_253 = arith.constant 0 : index
    %c0_254 = arith.constant 0 : index
    %497 = vector.load %arg13[%c0_252, %c0_253, %c0_254] : memref<3x64x128xf32, #tpu.memory_space<vmem>>, vector<1x64x128xf32>
    %498 = vector.shape_cast %497 : vector<1x64x128xf32> to vector<64x128xf32>
    %499 = vector.shape_cast %496 : vector<64x128xf32> to vector<1x64x128xf32>
    tpu.vector_store %arg13[%c0_252, %c0_253, %c0_254], %499 {strides = array<i32>} : memref<3x64x128xf32, #tpu.memory_space<vmem>>, vector<1x64x128xf32>,
    %c1_255 = arith.constant 1 : index
    %c0_256 = arith.constant 0 : index
    %500 = memref.load %arg9[%c1_255, %c0_256] : memref<3x3xf32, #tpu.memory_space<smem>>
    %501 = vector.broadcast %500 : f32 to vector<64x128xf32>
    %502 = arith.mulf %457, %501 : vector<64x128xf32>
    %c1_257 = arith.constant 1 : index
    %503 = memref.load %arg11[%c1_257] : memref<3xf32, #tpu.memory_space<smem>>
    %504 = vector.broadcast %503 : f32 to vector<64x128xf32>
    %505 = arith.addf %502, %504 : vector<64x128xf32>
    %c1_258 = arith.constant 1 : index
    %c1_259 = arith.constant 1 : index
    %506 = memref.load %arg9[%c1_258, %c1_259] : memref<3x3xf32, #tpu.memory_space<smem>>
    %507 = vector.broadcast %506 : f32 to vector<64x128xf32>
    %508 = arith.mulf %459, %507 : vector<64x128xf32>
    %509 = arith.addf %505, %508 : vector<64x128xf32>
    %c1_260 = arith.constant 1 : index
    %c2_261 = arith.constant 2 : index
    %510 = memref.load %arg9[%c1_260, %c2_261] : memref<3x3xf32, #tpu.memory_space<smem>>
    %511 = vector.broadcast %510 : f32 to vector<64x128xf32>
    %512 = arith.mulf %461, %511 : vector<64x128xf32>
    %513 = arith.addf %509, %512 : vector<64x128xf32>
    %c1_262 = arith.constant 1 : index
    %c0_263 = arith.constant 0 : index
    %514 = memref.load %arg10[%c1_262, %c0_263] : memref<3x3xf32, #tpu.memory_space<smem>>
    %515 = vector.broadcast %514 : f32 to vector<64x128xf32>
    %516 = arith.mulf %387, %515 : vector<64x128xf32>
    %517 = arith.addf %513, %516 : vector<64x128xf32>
    %c1_264 = arith.constant 1 : index
    %c1_265 = arith.constant 1 : index
    %518 = memref.load %arg10[%c1_264, %c1_265] : memref<3x3xf32, #tpu.memory_space<smem>>
    %519 = vector.broadcast %518 : f32 to vector<64x128xf32>
    %520 = arith.mulf %421, %519 : vector<64x128xf32>
    %521 = arith.addf %517, %520 : vector<64x128xf32>
    %c1_266 = arith.constant 1 : index
    %c2_267 = arith.constant 2 : index
    %522 = memref.load %arg10[%c1_266, %c2_267] : memref<3x3xf32, #tpu.memory_space<smem>>
    %523 = vector.broadcast %522 : f32 to vector<64x128xf32>
    %524 = arith.mulf %455, %523 : vector<64x128xf32>
    %525 = arith.addf %521, %524 : vector<64x128xf32>
    %c1_268 = arith.constant 1 : index
    %c0_269 = arith.constant 0 : index
    %c0_270 = arith.constant 0 : index
    %526 = vector.load %arg13[%c1_268, %c0_269, %c0_270] : memref<3x64x128xf32, #tpu.memory_space<vmem>>, vector<1x64x128xf32>
    %527 = vector.shape_cast %526 : vector<1x64x128xf32> to vector<64x128xf32>
    %528 = vector.shape_cast %525 : vector<64x128xf32> to vector<1x64x128xf32>
    tpu.vector_store %arg13[%c1_268, %c0_269, %c0_270], %528 {strides = array<i32>} : memref<3x64x128xf32, #tpu.memory_space<vmem>>, vector<1x64x128xf32>,
    %c2_271 = arith.constant 2 : index
    %c0_272 = arith.constant 0 : index
    %529 = memref.load %arg9[%c2_271, %c0_272] : memref<3x3xf32, #tpu.memory_space<smem>>
    %530 = vector.broadcast %529 : f32 to vector<64x128xf32>
    %531 = arith.mulf %457, %530 : vector<64x128xf32>
    %c2_273 = arith.constant 2 : index
    %532 = memref.load %arg11[%c2_273] : memref<3xf32, #tpu.memory_space<smem>>
    %533 = vector.broadcast %532 : f32 to vector<64x128xf32>
    %534 = arith.addf %531, %533 : vector<64x128xf32>
    %c2_274 = arith.constant 2 : index
    %c1_275 = arith.constant 1 : index
    %535 = memref.load %arg9[%c2_274, %c1_275] : memref<3x3xf32, #tpu.memory_space<smem>>
    %536 = vector.broadcast %535 : f32 to vector<64x128xf32>
    %537 = arith.mulf %459, %536 : vector<64x128xf32>
    %538 = arith.addf %534, %537 : vector<64x128xf32>
    %c2_276 = arith.constant 2 : index
    %c2_277 = arith.constant 2 : index
    %539 = memref.load %arg9[%c2_276, %c2_277] : memref<3x3xf32, #tpu.memory_space<smem>>
    %540 = vector.broadcast %539 : f32 to vector<64x128xf32>
    %541 = arith.mulf %461, %540 : vector<64x128xf32>
    %542 = arith.addf %538, %541 : vector<64x128xf32>
    %c2_278 = arith.constant 2 : index
    %c0_279 = arith.constant 0 : index
    %543 = memref.load %arg10[%c2_278, %c0_279] : memref<3x3xf32, #tpu.memory_space<smem>>
    %544 = vector.broadcast %543 : f32 to vector<64x128xf32>
    %545 = arith.mulf %387, %544 : vector<64x128xf32>
    %546 = arith.addf %542, %545 : vector<64x128xf32>
    %c2_280 = arith.constant 2 : index
    %c1_281 = arith.constant 1 : index
    %547 = memref.load %arg10[%c2_280, %c1_281] : memref<3x3xf32, #tpu.memory_space<smem>>
    %548 = vector.broadcast %547 : f32 to vector<64x128xf32>
    %549 = arith.mulf %421, %548 : vector<64x128xf32>
    %550 = arith.addf %546, %549 : vector<64x128xf32>
    %c2_282 = arith.constant 2 : index
    %c2_283 = arith.constant 2 : index
    %551 = memref.load %arg10[%c2_282, %c2_283] : memref<3x3xf32, #tpu.memory_space<smem>>
    %552 = vector.broadcast %551 : f32 to vector<64x128xf32>
    %553 = arith.mulf %455, %552 : vector<64x128xf32>
    %554 = arith.addf %550, %553 : vector<64x128xf32>
    %c2_284 = arith.constant 2 : index
    %c0_285 = arith.constant 0 : index
    %c0_286 = arith.constant 0 : index
    %555 = vector.load %arg13[%c2_284, %c0_285, %c0_286] : memref<3x64x128xf32, #tpu.memory_space<vmem>>, vector<1x64x128xf32>
    %556 = vector.shape_cast %555 : vector<1x64x128xf32> to vector<64x128xf32>
    %557 = vector.shape_cast %554 : vector<64x128xf32> to vector<1x64x128xf32>
    tpu.vector_store %arg13[%c2_284, %c0_285, %c0_286], %557 {strides = array<i32>} : memref<3x64x128xf32, #tpu.memory_space<vmem>>, vector<1x64x128xf32>,
    return
  }
  func.func @transform_0(%arg0: i32) -> (i32, i32, i32) {
    %c0_i32 = arith.constant 0 : i32
    %c0_i32_0 = arith.constant 0 : i32
    %c0_i32_1 = arith.constant 0 : i32
    return %c0_i32, %arg0, %c0_i32_0 : i32, i32, i32
  }
  func.func @transform_1(%arg0: i32) -> (i32, i32, i32) {
    %c0_i32 = arith.constant 0 : i32
    %c0_i32_0 = arith.constant 0 : i32
    %c0_i32_1 = arith.constant 0 : i32
    return %c0_i32, %arg0, %c0_i32_0 : i32, i32, i32
  }
  func.func @transform_2(%arg0: i32) -> (i32, i32) {
    %c0_i32 = arith.constant 0 : i32
    %c0_i32_0 = arith.constant 0 : i32
    %c0_i32_1 = arith.constant 0 : i32
    return %c0_i32, %c0_i32_0 : i32, i32
  }
  func.func @transform_3(%arg0: i32) -> i32 {
    %c0_i32 = arith.constant 0 : i32
    %c0_i32_0 = arith.constant 0 : i32
    return %c0_i32 : i32
  }
  func.func @transform_4(%arg0: i32) -> (i32, i32) {
    %c0_i32 = arith.constant 0 : i32
    %c0_i32_0 = arith.constant 0 : i32
    %c0_i32_1 = arith.constant 0 : i32
    return %c0_i32, %c0_i32_0 : i32, i32
  }
  func.func @transform_5(%arg0: i32) -> i32 {
    %c0_i32 = arith.constant 0 : i32
    %c0_i32_0 = arith.constant 0 : i32
    return %c0_i32 : i32
  }
  func.func @transform_6(%arg0: i32) -> (i32, i32) {
    %c0_i32 = arith.constant 0 : i32
    %c0_i32_0 = arith.constant 0 : i32
    %c0_i32_1 = arith.constant 0 : i32
    return %c0_i32, %c0_i32_0 : i32, i32
  }
  func.func @transform_7(%arg0: i32) -> i32 {
    %c0_i32 = arith.constant 0 : i32
    %c0_i32_0 = arith.constant 0 : i32
    return %c0_i32 : i32
  }
  func.func @transform_8(%arg0: i32) -> (i32, i32) {
    %c0_i32 = arith.constant 0 : i32
    %c0_i32_0 = arith.constant 0 : i32
    %c0_i32_1 = arith.constant 0 : i32
    return %c0_i32, %c0_i32_0 : i32, i32
  }
  func.func @transform_9(%arg0: i32) -> (i32, i32) {
    %c0_i32 = arith.constant 0 : i32
    %c0_i32_0 = arith.constant 0 : i32
    %c0_i32_1 = arith.constant 0 : i32
    return %c0_i32, %c0_i32_0 : i32, i32
  }
  func.func @transform_10(%arg0: i32) -> i32 {
    %c0_i32 = arith.constant 0 : i32
    %c0_i32_0 = arith.constant 0 : i32
    return %c0_i32 : i32
  }
  func.func @transform_11(%arg0: i32) -> (i32, i32, i32) {
    %c0_i32 = arith.constant 0 : i32
    %c0_i32_0 = arith.constant 0 : i32
    %c0_i32_1 = arith.constant 0 : i32
    return %c0_i32, %arg0, %c0_i32_0 : i32, i32, i32
  }
  func.func @transform_12(%arg0: i32) -> (i32, i32, i32) {
    %c0_i32 = arith.constant 0 : i32
    %c0_i32_0 = arith.constant 0 : i32
    %c0_i32_1 = arith.constant 0 : i32
    return %c0_i32, %arg0, %c0_i32_0 : i32, i32, i32
  }
}

</mosaic_0001>

<llo_original>
// kernel: forward.2
$region0: #{forward.2}
  #allocation0 [shape = 'u32[]', space=smem, size = 0x4, offset = 0x4, fixed_abs, tag = 'smem constant byte address 0x4 - core index']
  #allocation1 [shape = 'u32[144,128]{1,0:T(1,128)}', space=vmem, size = 0x12000, scoped, tag = 'internal scratch']
  %s0 = inlined_call_operand.vmem [shape: f32[1,32,128], index: 0, kind: input, shape index: {}]
  %s1 = inlined_call_operand.vmem [shape: f32[8,1], index: 1, kind: input, shape index: {}]
  %s2 = inlined_call_operand.vmem [shape: f32[8], index: 2, kind: input, shape index: {}]
  %s3 = inlined_call_operand.vmem [shape: f32[8,8], index: 3, kind: input, shape index: {}]
  %s4 = inlined_call_operand.vmem [shape: f32[8], index: 4, kind: input, shape index: {}]
  %s5 = inlined_call_operand.vmem [shape: f32[3,8], index: 5, kind: input, shape index: {}]
  %s6 = inlined_call_operand.vmem [shape: f32[3], index: 6, kind: input, shape index: {}]
  %s7 = inlined_call_operand.vmem [shape: f32[8,32,128], index: 7, kind: output, shape index: {0}]
  %s8 = inlined_call_operand.vmem [shape: f32[3,32,128], index: 8, kind: output, shape index: {1}]
  %s9 = inlined_call_operand.vmem [shape: f32[1,32,128], index: 9, kind: output, shape index: {2}]
  %10 = xla_tuple %s7, %s8, %s9
  %s11 = sld [smem:[#allocation0]]
  $region78: #{forward.2} parent=0
    _
  %s13 = ssub.s32 1, %s11
  %s14 = scalar_select 0, %s13, %s11
  $region1: #{forward.2} parent=0
    #allocation2 [shape = 'u8[4096]{0}', space=smem, size = 0x1000, scoped, tag = 'input window, operand 1, single buffered']
    #allocation3 [shape = 's32[1]{0}', space=sflag, size = 0x4, scoped, tag = 'scoped memory for forward.2']
    #allocation4 [shape = 'u8[512]{0}', space=smem, size = 0x200, scoped, tag = 'input window, operand 2, single buffered']
    #allocation5 [shape = 's32[1]{0}', space=sflag, size = 0x4, scoped, tag = 'scoped memory for forward.2']
    #allocation6 [shape = 'u8[4096]{0}', space=smem, size = 0x1000, scoped, tag = 'input window, operand 3, single buffered']
    #allocation7 [shape = 'u8[512]{0}', space=smem, size = 0x200, scoped, tag = 'input window, operand 4, single buffered']
    #allocation8 [shape = 's32[1]{0}', space=sflag, size = 0x4, scoped, tag = 'scoped memory for forward.2']
    #allocation9 [shape = 'u8[2048]{0}', space=smem, size = 0x800, scoped, tag = 'input window, operand 5, single buffered']
    #allocation10 [shape = 'u8[512]{0}', space=smem, size = 0x200, scoped, tag = 'input window, operand 6, single buffered']
    #allocation11 [shape = 's32[1]{0}', space=sflag, size = 0x4, scoped, tag = 'scoped memory for forward.2']
    %15 = vsyncpa [#allocation3], 0
    %16 = vsyncpa [#allocation5], 0
    %17 = vsyncpa [#allocation8], 0
    %18 = vsyncpa [#allocation11], 0
    // Predicated region
    $region2: #{forward.2} parent=1 // pred_check
      _
    $region3: #{forward.2} parent=1 // pred_check_branch
      %20 = sbr.rel (0) target = $region5
    $region4: #{forward.2} parent=1 // pred_region
      _
    $region5: #{forward.2} parent=1 // pred_fallthru
      _
    // Predicated region
    $region6: #{forward.2} parent=1 // pred_check
      _
    $region7: #{forward.2} parent=1 // pred_check_branch
      %22 = sbr.rel (0) target = $region9
    $region8: #{forward.2} parent=1 // pred_region
      %s24 = ssub.s32 128, 128
      %25 = vsyncadd [#allocation3], %s24
      %s27 = sshll.u32 %s1, 4
      %s28 = int_to_ptr.vmem [resolvable:$true] %s27
      %30 = dma.vmem_to_smem %s28, 128, [#allocation2], [#allocation3]
    $region9: #{forward.2} parent=1 // pred_fallthru
      _
    // Predicated region
    $region10: #{forward.2} parent=1 // pred_check
      _
    $region11: #{forward.2} parent=1 // pred_check_branch
      %32 = sbr.rel (0) target = $region13
    $region12: #{forward.2} parent=1 // pred_region
      %s34 = ssub.s32 16, 16
      %35 = vsyncadd [#allocation5], %s34
      %s37 = sshll.u32 %s2, 4
      %s38 = int_to_ptr.vmem [resolvable:$true] %s37
      %40 = dma.vmem_to_smem %s38, 16, [#allocation4], [#allocation5]
    $region13: #{forward.2} parent=1 // pred_fallthru
      _
    // Predicated region
    $region14: #{forward.2} parent=1 // pred_check
      _
    $region15: #{forward.2} parent=1 // pred_check_branch
      %42 = sbr.rel (0) target = $region17
    $region16: #{forward.2} parent=1 // pred_region
      %s44 = ssub.s32 128, 128
      %45 = vsyncadd [#allocation5], %s44
      %s47 = sshll.u32 %s3, 4
      %s48 = int_to_ptr.vmem [resolvable:$true] %s47
      %50 = dma.vmem_to_smem %s48, 128, [#allocation6], [#allocation5]
    $region17: #{forward.2} parent=1 // pred_fallthru
      _
    // Predicated region
    $region18: #{forward.2} parent=1 // pred_check
      _
    $region19: #{forward.2} parent=1 // pred_check_branch
      %52 = sbr.rel (0) target = $region21
    $region20: #{forward.2} parent=1 // pred_region
      %s54 = ssub.s32 16, 16
      %55 = vsyncadd [#allocation8], %s54
      %s57 = sshll.u32 %s4, 4
      %s58 = int_to_ptr.vmem [resolvable:$true] %s57
      %60 = dma.vmem_to_smem %s58, 16, [#allocation7], [#allocation8]
    $region21: #{forward.2} parent=1 // pred_fallthru
      _
    // Predicated region
    $region22: #{forward.2} parent=1 // pred_check
      _
    $region23: #{forward.2} parent=1 // pred_check_branch
      %62 = sbr.rel (0) target = $region25
    $region24: #{forward.2} parent=1 // pred_region
      %s64 = ssub.s32 64, 64
      %65 = vsyncadd [#allocation8], %s64
      %s67 = sshll.u32 %s5, 4
      %s68 = int_to_ptr.vmem [resolvable:$true] %s67
      %70 = dma.vmem_to_smem %s68, 64, [#allocation9], [#allocation8]
    $region25: #{forward.2} parent=1 // pred_fallthru
      _
    // Predicated region
    $region26: #{forward.2} parent=1 // pred_check
      _
    $region27: #{forward.2} parent=1 // pred_check_branch
      %72 = sbr.rel (0) target = $region29
    $region28: #{forward.2} parent=1 // pred_region
      %s74 = ssub.s32 16, 16
      %75 = vsyncadd [#allocation11], %s74
      %s77 = sshll.u32 %s6, 4
      %s78 = int_to_ptr.vmem [resolvable:$true] %s77
      %80 = dma.vmem_to_smem %s78, 16, [#allocation10], [#allocation11]
    $region29: #{forward.2} parent=1 // pred_fallthru
      _
    // Predicated region
    $region30: #{forward.2} parent=1 // pred_check
      _
    $region31: #{forward.2} parent=1 // pred_check_branch
      %82 = sbr.rel (0) target = $region33
    $region32: #{forward.2} parent=1 // pred_region
      %83 = dma.done [#allocation3], 128
    $region33: #{forward.2} parent=1 // pred_fallthru
      _
    // Predicated region
    $region34: #{forward.2} parent=1 // pred_check
      _
    $region35: #{forward.2} parent=1 // pred_check_branch
      %85 = sbr.rel (0) target = $region37
    $region36: #{forward.2} parent=1 // pred_region
      %86 = dma.done [#allocation5], 16
    $region37: #{forward.2} parent=1 // pred_fallthru
      _
    // Predicated region
    $region38: #{forward.2} parent=1 // pred_check
      _
    $region39: #{forward.2} parent=1 // pred_check_branch
      %88 = sbr.rel (0) target = $region41
    $region40: #{forward.2} parent=1 // pred_region
      %89 = dma.done [#allocation5], 128
    $region41: #{forward.2} parent=1 // pred_fallthru
      _
    // Predicated region
    $region42: #{forward.2} parent=1 // pred_check
      _
    $region43: #{forward.2} parent=1 // pred_check_branch
      %91 = sbr.rel (0) target = $region45
    $region44: #{forward.2} parent=1 // pred_region
      %92 = dma.done [#allocation8], 16
    $region45: #{forward.2} parent=1 // pred_fallthru
      _
    // Predicated region
    $region46: #{forward.2} parent=1 // pred_check
      _
    $region47: #{forward.2} parent=1 // pred_check_branch
      %94 = sbr.rel (0) target = $region49
    $region48: #{forward.2} parent=1 // pred_region
      %95 = dma.done [#allocation8], 64
    $region49: #{forward.2} parent=1 // pred_fallthru
      _
    // Predicated region
    $region50: #{forward.2} parent=1 // pred_check
      _
    $region51: #{forward.2} parent=1 // pred_check_branch
      %97 = sbr.rel (0) target = $region53
    $region52: #{forward.2} parent=1 // pred_region
      %98 = dma.done [#allocation11], 16
    $region53: #{forward.2} parent=1 // pred_fallthru
      _
    %99 = sfence
    %v100 = vld [vmem:[%s0] sm:$0xff]
    %v101 = vld [vmem:[%s0 + $0x8] sm:$0xff]
    %v102 = vld [vmem:[%s0 + $0x10] sm:$0xff]
    %v103 = vld [vmem:[%s0 + $0x18] sm:$0xff]
    %s104 = sld [smem:[#allocation2]]
    %v105 = vstv %s104
    %v106 = vmul.f32 %v100, %v105
    %v107 = vmul.f32 %v101, %v105
    %v108 = vmul.f32 %v102, %v105
    %v109 = vmul.f32 %v103, %v105
    %s110 = sld [smem:[#allocation4]]
    %v111 = vstv %s110
    %v112 = vadd.f32 %v106, %v111
    %v113 = vadd.f32 %v107, %v111
    %v114 = vadd.f32 %v108, %v111
    %v115 = vadd.f32 %v109, %v111
    %v116 = vmax.f32 %v112, 0.0
    %v117 = vmax.f32 %v113, 0.0
    %v118 = vmax.f32 %v114, 0.0
    %v119 = vmax.f32 %v115, 0.0
    %s120 = sld [smem:[#allocation2 + $0x80]]
    %v121 = vstv %s120
    %v122 = vmul.f32 %v100, %v121
    %v123 = vmul.f32 %v101, %v121
    %v124 = vmul.f32 %v102, %v121
    %v125 = vmul.f32 %v103, %v121
    %s126 = sld [smem:[#allocation4 + $0x1]]
    %v127 = vstv %s126
    %v128 = vadd.f32 %v122, %v127
    %v129 = vadd.f32 %v123, %v127
    %v130 = vadd.f32 %v124, %v127
    %v131 = vadd.f32 %v125, %v127
    %v132 = vmax.f32 %v128, 0.0
    %v133 = vmax.f32 %v129, 0.0
    %v134 = vmax.f32 %v130, 0.0
    %v135 = vmax.f32 %v131, 0.0
    %s136 = sld [smem:[#allocation2 + $0x100]]
    %v137 = vstv %s136
    %v138 = vmul.f32 %v100, %v137
    %v139 = vmul.f32 %v101, %v137
    %v140 = vmul.f32 %v102, %v137
    %v141 = vmul.f32 %v103, %v137
    %s142 = sld [smem:[#allocation4 + $0x2]]
    %v143 = vstv %s142
    %v144 = vadd.f32 %v138, %v143
    %v145 = vadd.f32 %v139, %v143
    %v146 = vadd.f32 %v140, %v143
    %v147 = vadd.f32 %v141, %v143
    %v148 = vmax.f32 %v144, 0.0
    %v149 = vmax.f32 %v145, 0.0
    %v150 = vmax.f32 %v146, 0.0
    %v151 = vmax.f32 %v147, 0.0
    %s152 = sld [smem:[#allocation2 + $0x180]]
    %v153 = vstv %s152
    %v154 = vmul.f32 %v100, %v153
    %v155 = vmul.f32 %v101, %v153
    %v156 = vmul.f32 %v102, %v153
    %v157 = vmul.f32 %v103, %v153
    %s158 = sld [smem:[#allocation4 + $0x3]]
    %v159 = vstv %s158
    %v160 = vadd.f32 %v154, %v159
    %v161 = vadd.f32 %v155, %v159
    %v162 = vadd.f32 %v156, %v159
    %v163 = vadd.f32 %v157, %v159
    %v164 = vmax.f32 %v160, 0.0
    %v165 = vmax.f32 %v161, 0.0
    %v166 = vmax.f32 %v162, 0.0
    %v167 = vmax.f32 %v163, 0.0
    %s168 = sld [smem:[#allocation2 + $0x200]]
    %v169 = vstv %s168
    %v170 = vmul.f32 %v100, %v169
    %v171 = vmul.f32 %v101, %v169
    %v172 = vmul.f32 %v102, %v169
    %v173 = vmul.f32 %v103, %v169
    %s174 = sld [smem:[#allocation4 + $0x4]]
    %v175 = vstv %s174
    %v176 = vadd.f32 %v170, %v175
    %v177 = vadd.f32 %v171, %v175
    %v178 = vadd.f32 %v172, %v175
    %v179 = vadd.f32 %v173, %v175
    %v180 = vmax.f32 %v176, 0.0
    %v181 = vmax.f32 %v177, 0.0
    %v182 = vmax.f32 %v178, 0.0
    %v183 = vmax.f32 %v179, 0.0
    %s184 = sld [smem:[#allocation2 + $0x280]]
    %v185 = vstv %s184
    %v186 = vmul.f32 %v100, %v185
    %v187 = vmul.f32 %v101, %v185
    %v188 = vmul.f32 %v102, %v185
    %v189 = vmul.f32 %v103, %v185
    %s190 = sld [smem:[#allocation4 + $0x5]]
    %v191 = vstv %s190
    %v192 = vadd.f32 %v186, %v191
    %v193 = vadd.f32 %v187, %v191
    %v194 = vadd.f32 %v188, %v191
    %v195 = vadd.f32 %v189, %v191
    %v196 = vmax.f32 %v192, 0.0
    %v197 = vmax.f32 %v193, 0.0
    %v198 = vmax.f32 %v194, 0.0
    %v199 = vmax.f32 %v195, 0.0
    %s200 = sld [smem:[#allocation2 + $0x300]]
    %v201 = vstv %s200
    %v202 = vmul.f32 %v100, %v201
    %v203 = vmul.f32 %v101, %v201
    %v204 = vmul.f32 %v102, %v201
    %v205 = vmul.f32 %v103, %v201
    %s206 = sld [smem:[#allocation4 + $0x6]]
    %v207 = vstv %s206
    %v208 = vadd.f32 %v202, %v207
    %v209 = vadd.f32 %v203, %v207
    %v210 = vadd.f32 %v204, %v207
    %v211 = vadd.f32 %v205, %v207
    %v212 = vmax.f32 %v208, 0.0
    %v213 = vmax.f32 %v209, 0.0
    %v214 = vmax.f32 %v210, 0.0
    %v215 = vmax.f32 %v211, 0.0
    %s216 = sld [smem:[#allocation2 + $0x380]]
    %v217 = vstv %s216
    %v218 = vmul.f32 %v100, %v217
    %v219 = vmul.f32 %v101, %v217
    %v220 = vmul.f32 %v102, %v217
    %v221 = vmul.f32 %v103, %v217
    %s222 = sld [smem:[#allocation4 + $0x7]]
    %v223 = vstv %s222
    %v224 = vadd.f32 %v218, %v223
    %v225 = vadd.f32 %v219, %v223
    %v226 = vadd.f32 %v220, %v223
    %v227 = vadd.f32 %v221, %v223
    %v228 = vmax.f32 %v224, 0.0
    %v229 = vmax.f32 %v225, 0.0
    %v230 = vmax.f32 %v226, 0.0
    %v231 = vmax.f32 %v227, 0.0
    %s232 = sld [smem:[#allocation6]]
    %v233 = vstv %s232
    %v234 = vmul.f32 %v116, %v233
    %v235 = vmul.f32 %v117, %v233
    %v236 = vmul.f32 %v118, %v233
    %v237 = vmul.f32 %v119, %v233
    %s238 = sld [smem:[#allocation7]]
    %v239 = vstv %s238
    %v240 = vadd.f32 %v234, %v239
    %v241 = vadd.f32 %v235, %v239
    %v242 = vadd.f32 %v236, %v239
    %v243 = vadd.f32 %v237, %v239
    %s244 = sld [smem:[#allocation6 + $0x1]]
    %v245 = vstv %s244
    %v246 = vmul.f32 %v132, %v245
    %v247 = vmul.f32 %v133, %v245
    %v248 = vmul.f32 %v134, %v245
    %v249 = vmul.f32 %v135, %v245
    %v250 = vadd.f32 %v240, %v246
    %v251 = vadd.f32 %v241, %v247
    %v252 = vadd.f32 %v242, %v248
    %v253 = vadd.f32 %v243, %v249
    %s254 = sld [smem:[#allocation6 + $0x2]]
    %v255 = vstv %s254
    %v256 = vmul.f32 %v148, %v255
    %v257 = vmul.f32 %v149, %v255
    %v258 = vmul.f32 %v150, %v255
    %v259 = vmul.f32 %v151, %v255
    %v260 = vadd.f32 %v250, %v256
    %v261 = vadd.f32 %v251, %v257
    %v262 = vadd.f32 %v252, %v258
    %v263 = vadd.f32 %v253, %v259
    %s264 = sld [smem:[#allocation6 + $0x3]]
    %v265 = vstv %s264
    %v266 = vmul.f32 %v164, %v265
    %v267 = vmul.f32 %v165, %v265
    %v268 = vmul.f32 %v166, %v265
    %v269 = vmul.f32 %v167, %v265
    %v270 = vadd.f32 %v260, %v266
    %v271 = vadd.f32 %v261, %v267
    %v272 = vadd.f32 %v262, %v268
    %v273 = vadd.f32 %v263, %v269
    %s274 = sld [smem:[#allocation6 + $0x4]]
    %v275 = vstv %s274
    %v276 = vmul.f32 %v180, %v275
    %v277 = vmul.f32 %v181, %v275
    %v278 = vmul.f32 %v182, %v275
    %v279 = vmul.f32 %v183, %v275
    %v280 = vadd.f32 %v270, %v276
    %v281 = vadd.f32 %v271, %v277
    %v282 = vadd.f32 %v272, %v278
    %v283 = vadd.f32 %v273, %v279
    %s284 = sld [smem:[#allocation6 + $0x5]]
    %v285 = vstv %s284
    %v286 = vmul.f32 %v196, %v285
    %v287 = vmul.f32 %v197, %v285
    %v288 = vmul.f32 %v198, %v285
    %v289 = vmul.f32 %v199, %v285
    %v290 = vadd.f32 %v280, %v286
    %v291 = vadd.f32 %v281, %v287
    %v292 = vadd.f32 %v282, %v288
    %v293 = vadd.f32 %v283, %v289
    %s294 = sld [smem:[#allocation6 + $0x6]]
    %v295 = vstv %s294
    %v296 = vmul.f32 %v212, %v295
    %v297 = vmul.f32 %v213, %v295
    %v298 = vmul.f32 %v214, %v295
    %v299 = vmul.f32 %v215, %v295
    %v300 = vadd.f32 %v290, %v296
    %v301 = vadd.f32 %v291, %v297
    %v302 = vadd.f32 %v292, %v298
    %v303 = vadd.f32 %v293, %v299
    %s304 = sld [smem:[#allocation6 + $0x7]]
    %v305 = vstv %s304
    %v306 = vmul.f32 %v228, %v305
    %v307 = vmul.f32 %v229, %v305
    %v308 = vmul.f32 %v230, %v305
    %v309 = vmul.f32 %v231, %v305
    %v310 = vadd.f32 %v300, %v306
    %v311 = vadd.f32 %v301, %v307
    %v312 = vadd.f32 %v302, %v308
    %v313 = vadd.f32 %v303, %v309
    %v314 = vmax.f32 %v310, 0.0
    %v315 = vmax.f32 %v311, 0.0
    %v316 = vmax.f32 %v312, 0.0
    %v317 = vmax.f32 %v313, 0.0
    %s318 = sld [smem:[#allocation6 + $0x80]]
    %v319 = vstv %s318
    %v320 = vmul.f32 %v116, %v319
    %v321 = vmul.f32 %v117, %v319
    %v322 = vmul.f32 %v118, %v319
    %v323 = vmul.f32 %v119, %v319
    %s324 = sld [smem:[#allocation7 + $0x1]]
    %v325 = vstv %s324
    %v326 = vadd.f32 %v320, %v325
    %v327 = vadd.f32 %v321, %v325
    %v328 = vadd.f32 %v322, %v325
    %v329 = vadd.f32 %v323, %v325
    %s330 = sld [smem:[#allocation6 + $0x81]]
    %v331 = vstv %s330
    %v332 = vmul.f32 %v132, %v331
    %v333 = vmul.f32 %v133, %v331
    %v334 = vmul.f32 %v134, %v331
    %v335 = vmul.f32 %v135, %v331
    %v336 = vadd.f32 %v326, %v332
    %v337 = vadd.f32 %v327, %v333
    %v338 = vadd.f32 %v328, %v334
    %v339 = vadd.f32 %v329, %v335
    %s340 = sld [smem:[#allocation6 + $0x82]]
    %v341 = vstv %s340
    %v342 = vmul.f32 %v148, %v341
    %v343 = vmul.f32 %v149, %v341
    %v344 = vmul.f32 %v150, %v341
    %v345 = vmul.f32 %v151, %v341
    %v346 = vadd.f32 %v336, %v342
    %v347 = vadd.f32 %v337, %v343
    %v348 = vadd.f32 %v338, %v344
    %v349 = vadd.f32 %v339, %v345
    %s350 = sld [smem:[#allocation6 + $0x83]]
    %v351 = vstv %s350
    %v352 = vmul.f32 %v164, %v351
    %v353 = vmul.f32 %v165, %v351
    %v354 = vmul.f32 %v166, %v351
    %v355 = vmul.f32 %v167, %v351
    %v356 = vadd.f32 %v346, %v352
    %v357 = vadd.f32 %v347, %v353
    %v358 = vadd.f32 %v348, %v354
    %v359 = vadd.f32 %v349, %v355
    %s360 = sld [smem:[#allocation6 + $0x84]]
    %v361 = vstv %s360
    %v362 = vmul.f32 %v180, %v361
    %v363 = vmul.f32 %v181, %v361
    %v364 = vmul.f32 %v182, %v361
    %v365 = vmul.f32 %v183, %v361
    %v366 = vadd.f32 %v356, %v362
    %v367 = vadd.f32 %v357, %v363
    %v368 = vadd.f32 %v358, %v364
    %v369 = vadd.f32 %v359, %v365
    %s370 = sld [smem:[#allocation6 + $0x85]]
    %v371 = vstv %s370
    %v372 = vmul.f32 %v196, %v371
    %v373 = vmul.f32 %v197, %v371
    %v374 = vmul.f32 %v198, %v371
    %v375 = vmul.f32 %v199, %v371
    %v376 = vadd.f32 %v366, %v372
    %v377 = vadd.f32 %v367, %v373
    %v378 = vadd.f32 %v368, %v374
    %v379 = vadd.f32 %v369, %v375
    %s380 = sld [smem:[#allocation6 + $0x86]]
    %v381 = vstv %s380
    %v382 = vmul.f32 %v212, %v381
    %v383 = vmul.f32 %v213, %v381
    %v384 = vmul.f32 %v214, %v381
    %v385 = vmul.f32 %v215, %v381
    %v386 = vadd.f32 %v376, %v382
    %v387 = vadd.f32 %v377, %v383
    %v388 = vadd.f32 %v378, %v384
    %v389 = vadd.f32 %v379, %v385
    %s390 = sld [smem:[#allocation6 + $0x87]]
    %v391 = vstv %s390
    %v392 = vmul.f32 %v228, %v391
    %v393 = vmul.f32 %v229, %v391
    %v394 = vmul.f32 %v230, %v391
    %v395 = vmul.f32 %v231, %v391
    %v396 = vadd.f32 %v386, %v392
    %v397 = vadd.f32 %v387, %v393
    %v398 = vadd.f32 %v388, %v394
    %v399 = vadd.f32 %v389, %v395
    %v400 = vmax.f32 %v396, 0.0
    %v401 = vmax.f32 %v397, 0.0
    %v402 = vmax.f32 %v398, 0.0
    %v403 = vmax.f32 %v399, 0.0
    %s404 = sld [smem:[#allocation6 + $0x100]]
    %v405 = vstv %s404
    %v406 = vmul.f32 %v116, %v405
    %v407 = vmul.f32 %v117, %v405
    %v408 = vmul.f32 %v118, %v405
    %v409 = vmul.f32 %v119, %v405
    %s410 = sld [smem:[#allocation7 + $0x2]]
    %v411 = vstv %s410
    %v412 = vadd.f32 %v406, %v411
    %v413 = vadd.f32 %v407, %v411
    %v414 = vadd.f32 %v408, %v411
    %v415 = vadd.f32 %v409, %v411
    %s416 = sld [smem:[#allocation6 + $0x101]]
    %v417 = vstv %s416
    %v418 = vmul.f32 %v132, %v417
    %v419 = vmul.f32 %v133, %v417
    %v420 = vmul.f32 %v134, %v417
    %v421 = vmul.f32 %v135, %v417
    %v422 = vadd.f32 %v412, %v418
    %v423 = vadd.f32 %v413, %v419
    %v424 = vadd.f32 %v414, %v420
    %v425 = vadd.f32 %v415, %v421
    %s426 = sld [smem:[#allocation6 + $0x102]]
    %v427 = vstv %s426
    %v428 = vmul.f32 %v148, %v427
    %v429 = vmul.f32 %v149, %v427
    %v430 = vmul.f32 %v150, %v427
    %v431 = vmul.f32 %v151, %v427
    %v432 = vadd.f32 %v422, %v428
    %v433 = vadd.f32 %v423, %v429
    %v434 = vadd.f32 %v424, %v430
    %v435 = vadd.f32 %v425, %v431
    %s436 = sld [smem:[#allocation6 + $0x103]]
    %v437 = vstv %s436
    %v438 = vmul.f32 %v164, %v437
    %v439 = vmul.f32 %v165, %v437
    %v440 = vmul.f32 %v166, %v437
    %v441 = vmul.f32 %v167, %v437
    %v442 = vadd.f32 %v432, %v438
    %v443 = vadd.f32 %v433, %v439
    %v444 = vadd.f32 %v434, %v440
    %v445 = vadd.f32 %v435, %v441
    %s446 = sld [smem:[#allocation6 + $0x104]]
    %v447 = vstv %s446
    %v448 = vmul.f32 %v180, %v447
    %v449 = vmul.f32 %v181, %v447
    %v450 = vmul.f32 %v182, %v447
    %v451 = vmul.f32 %v183, %v447
    %v452 = vadd.f32 %v442, %v448
    %v453 = vadd.f32 %v443, %v449
    %v454 = vadd.f32 %v444, %v450
    %v455 = vadd.f32 %v445, %v451
    %s456 = sld [smem:[#allocation6 + $0x105]]
    %v457 = vstv %s456
    %v458 = vmul.f32 %v196, %v457
    %v459 = vmul.f32 %v197, %v457
    %v460 = vmul.f32 %v198, %v457
    %v461 = vmul.f32 %v199, %v457
    %v462 = vadd.f32 %v452, %v458
    %v463 = vadd.f32 %v453, %v459
    %v464 = vadd.f32 %v454, %v460
    %v465 = vadd.f32 %v455, %v461
    %s466 = sld [smem:[#allocation6 + $0x106]]
    %v467 = vstv %s466
    %v468 = vmul.f32 %v212, %v467
    %v469 = vmul.f32 %v213, %v467
    %v470 = vmul.f32 %v214, %v467
    %v471 = vmul.f32 %v215, %v467
    %v472 = vadd.f32 %v462, %v468
    %v473 = vadd.f32 %v463, %v469
    %v474 = vadd.f32 %v464, %v470
    %v475 = vadd.f32 %v465, %v471
    %s476 = sld [smem:[#allocation6 + $0x107]]
    %v477 = vstv %s476
    %v478 = vmul.f32 %v228, %v477
    %v479 = vmul.f32 %v229, %v477
    %v480 = vmul.f32 %v230, %v477
    %v481 = vmul.f32 %v231, %v477
    %v482 = vadd.f32 %v472, %v478
    %v483 = vadd.f32 %v473, %v479
    %v484 = vadd.f32 %v474, %v480
    %v485 = vadd.f32 %v475, %v481
    %v486 = vmax.f32 %v482, 0.0
    %v487 = vmax.f32 %v483, 0.0
    %v488 = vmax.f32 %v484, 0.0
    %v489 = vmax.f32 %v485, 0.0
    %s490 = sld [smem:[#allocation6 + $0x180]]
    %v491 = vstv %s490
    %v492 = vmul.f32 %v116, %v491
    %v493 = vmul.f32 %v117, %v491
    %v494 = vmul.f32 %v118, %v491
    %v495 = vmul.f32 %v119, %v491
    %s496 = sld [smem:[#allocation7 + $0x3]]
    %v497 = vstv %s496
    %v498 = vadd.f32 %v492, %v497
    %v499 = vadd.f32 %v493, %v497
    %v500 = vadd.f32 %v494, %v497
    %v501 = vadd.f32 %v495, %v497
    %s502 = sld [smem:[#allocation6 + $0x181]]
    %v503 = vstv %s502
    %v504 = vmul.f32 %v132, %v503
    %v505 = vmul.f32 %v133, %v503
    %v506 = vmul.f32 %v134, %v503
    %v507 = vmul.f32 %v135, %v503
    %v508 = vadd.f32 %v498, %v504
    %v509 = vadd.f32 %v499, %v505
    %v510 = vadd.f32 %v500, %v506
    %v511 = vadd.f32 %v501, %v507
    %s512 = sld [smem:[#allocation6 + $0x182]]
    %v513 = vstv %s512
    %v514 = vmul.f32 %v148, %v513
    %v515 = vmul.f32 %v149, %v513
    %v516 = vmul.f32 %v150, %v513
    %v517 = vmul.f32 %v151, %v513
    %v518 = vadd.f32 %v508, %v514
    %v519 = vadd.f32 %v509, %v515
    %v520 = vadd.f32 %v510, %v516
    %v521 = vadd.f32 %v511, %v517
    %s522 = sld [smem:[#allocation6 + $0x183]]
    %v523 = vstv %s522
    %v524 = vmul.f32 %v164, %v523
    %v525 = vmul.f32 %v165, %v523
    %v526 = vmul.f32 %v166, %v523
    %v527 = vmul.f32 %v167, %v523
    %v528 = vadd.f32 %v518, %v524
    %v529 = vadd.f32 %v519, %v525
    %v530 = vadd.f32 %v520, %v526
    %v531 = vadd.f32 %v521, %v527
    %s532 = sld [smem:[#allocation6 + $0x184]]
    %v533 = vstv %s532
    %v534 = vmul.f32 %v180, %v533
    %v535 = vmul.f32 %v181, %v533
    %v536 = vmul.f32 %v182, %v533
    %v537 = vmul.f32 %v183, %v533
    %v538 = vadd.f32 %v528, %v534
    %v539 = vadd.f32 %v529, %v535
    %v540 = vadd.f32 %v530, %v536
    %v541 = vadd.f32 %v531, %v537
    %s542 = sld [smem:[#allocation6 + $0x185]]
    %v543 = vstv %s542
    %v544 = vmul.f32 %v196, %v543
    %v545 = vmul.f32 %v197, %v543
    %v546 = vmul.f32 %v198, %v543
    %v547 = vmul.f32 %v199, %v543
    %v548 = vadd.f32 %v538, %v544
    %v549 = vadd.f32 %v539, %v545
    %v550 = vadd.f32 %v540, %v546
    %v551 = vadd.f32 %v541, %v547
    %s552 = sld [smem:[#allocation6 + $0x186]]
    %v553 = vstv %s552
    %v554 = vmul.f32 %v212, %v553
    %v555 = vmul.f32 %v213, %v553
    %v556 = vmul.f32 %v214, %v553
    %v557 = vmul.f32 %v215, %v553
    %v558 = vadd.f32 %v548, %v554
    %v559 = vadd.f32 %v549, %v555
    %v560 = vadd.f32 %v550, %v556
    %v561 = vadd.f32 %v551, %v557
    %s562 = sld [smem:[#allocation6 + $0x187]]
    %v563 = vstv %s562
    %v564 = vmul.f32 %v228, %v563
    %v565 = vmul.f32 %v229, %v563
    %v566 = vmul.f32 %v230, %v563
    %v567 = vmul.f32 %v231, %v563
    %v568 = vadd.f32 %v558, %v564
    %v569 = vadd.f32 %v559, %v565
    %v570 = vadd.f32 %v560, %v566
    %v571 = vadd.f32 %v561, %v567
    %v572 = vmax.f32 %v568, 0.0
    %v573 = vmax.f32 %v569, 0.0
    %v574 = vmax.f32 %v570, 0.0
    %v575 = vmax.f32 %v571, 0.0
    %s576 = sld [smem:[#allocation6 + $0x200]]
    %v577 = vstv %s576
    %v578 = vmul.f32 %v116, %v577
    %v579 = vmul.f32 %v117, %v577
    %v580 = vmul.f32 %v118, %v577
    %v581 = vmul.f32 %v119, %v577
    %s582 = sld [smem:[#allocation7 + $0x4]]
    %v583 = vstv %s582
    %v584 = vadd.f32 %v578, %v583
    %v585 = vadd.f32 %v579, %v583
    %v586 = vadd.f32 %v580, %v583
    %v587 = vadd.f32 %v581, %v583
    %s588 = sld [smem:[#allocation6 + $0x201]]
    %v589 = vstv %s588
    %v590 = vmul.f32 %v132, %v589
    %v591 = vmul.f32 %v133, %v589
    %v592 = vmul.f32 %v134, %v589
    %v593 = vmul.f32 %v135, %v589
    %v594 = vadd.f32 %v584, %v590
    %v595 = vadd.f32 %v585, %v591
    %v596 = vadd.f32 %v586, %v592
    %v597 = vadd.f32 %v587, %v593
    %s598 = sld [smem:[#allocation6 + $0x202]]
    %v599 = vstv %s598
    %v600 = vmul.f32 %v148, %v599
    %v601 = vmul.f32 %v149, %v599
    %v602 = vmul.f32 %v150, %v599
    %v603 = vmul.f32 %v151, %v599
    %v604 = vadd.f32 %v594, %v600
    %v605 = vadd.f32 %v595, %v601
    %v606 = vadd.f32 %v596, %v602
    %v607 = vadd.f32 %v597, %v603
    %s608 = sld [smem:[#allocation6 + $0x203]]
    %v609 = vstv %s608
    %v610 = vmul.f32 %v164, %v609
    %v611 = vmul.f32 %v165, %v609
    %v612 = vmul.f32 %v166, %v609
    %v613 = vmul.f32 %v167, %v609
    %v614 = vadd.f32 %v604, %v610
    %v615 = vadd.f32 %v605, %v611
    %v616 = vadd.f32 %v606, %v612
    %v617 = vadd.f32 %v607, %v613
    %s618 = sld [smem:[#allocation6 + $0x204]]
    %v619 = vstv %s618
    %v620 = vmul.f32 %v180, %v619
    %v621 = vmul.f32 %v181, %v619
    %v622 = vmul.f32 %v182, %v619
    %v623 = vmul.f32 %v183, %v619
    %v624 = vadd.f32 %v614, %v620
    %v625 = vadd.f32 %v615, %v621
    %v626 = vadd.f32 %v616, %v622
    %v627 = vadd.f32 %v617, %v623
    %s628 = sld [smem:[#allocation6 + $0x205]]
    %v629 = vstv %s628
    %v630 = vmul.f32 %v196, %v629
    %v631 = vmul.f32 %v197, %v629
    %v632 = vmul.f32 %v198, %v629
    %v633 = vmul.f32 %v199, %v629
    %v634 = vadd.f32 %v624, %v630
    %v635 = vadd.f32 %v625, %v631
    %v636 = vadd.f32 %v626, %v632
    %v637 = vadd.f32 %v627, %v633
    %s638 = sld [smem:[#allocation6 + $0x206]]
    %v639 = vstv %s638
    %v640 = vmul.f32 %v212, %v639
    %v641 = vmul.f32 %v213, %v639
    %v642 = vmul.f32 %v214, %v639
    %v643 = vmul.f32 %v215, %v639
    %v644 = vadd.f32 %v634, %v640
    %v645 = vadd.f32 %v635, %v641
    %v646 = vadd.f32 %v636, %v642
    %v647 = vadd.f32 %v637, %v643
    %s648 = sld [smem:[#allocation6 + $0x207]]
    %v649 = vstv %s648
    %v650 = vmul.f32 %v228, %v649
    %v651 = vmul.f32 %v229, %v649
    %v652 = vmul.f32 %v230, %v649
    %v653 = vmul.f32 %v231, %v649
    %v654 = vadd.f32 %v644, %v650
    %v655 = vadd.f32 %v645, %v651
    %v656 = vadd.f32 %v646, %v652
    %v657 = vadd.f32 %v647, %v653
    %v658 = vmax.f32 %v654, 0.0
    %v659 = vmax.f32 %v655, 0.0
    %v660 = vmax.f32 %v656, 0.0
    %v661 = vmax.f32 %v657, 0.0
    %s662 = sld [smem:[#allocation6 + $0x280]]
    %v663 = vstv %s662
    %v664 = vmul.f32 %v116, %v663
    %v665 = vmul.f32 %v117, %v663
    %v666 = vmul.f32 %v118, %v663
    %v667 = vmul.f32 %v119, %v663
    %s668 = sld [smem:[#allocation7 + $0x5]]
    %v669 = vstv %s668
    %v670 = vadd.f32 %v664, %v669
    %v671 = vadd.f32 %v665, %v669
    %v672 = vadd.f32 %v666, %v669
    %v673 = vadd.f32 %v667, %v669
    %s674 = sld [smem:[#allocation6 + $0x281]]
    %v675 = vstv %s674
    %v676 = vmul.f32 %v132, %v675
    %v677 = vmul.f32 %v133, %v675
    %v678 = vmul.f32 %v134, %v675
    %v679 = vmul.f32 %v135, %v675
    %v680 = vadd.f32 %v670, %v676
    %v681 = vadd.f32 %v671, %v677
    %v682 = vadd.f32 %v672, %v678
    %v683 = vadd.f32 %v673, %v679
    %s684 = sld [smem:[#allocation6 + $0x282]]
    %v685 = vstv %s684
    %v686 = vmul.f32 %v148, %v685
    %v687 = vmul.f32 %v149, %v685
    %v688 = vmul.f32 %v150, %v685
    %v689 = vmul.f32 %v151, %v685
    %v690 = vadd.f32 %v680, %v686
    %v691 = vadd.f32 %v681, %v687
    %v692 = vadd.f32 %v682, %v688
    %v693 = vadd.f32 %v683, %v689
    %s694 = sld [smem:[#allocation6 + $0x283]]
    %v695 = vstv %s694
    %v696 = vmul.f32 %v164, %v695
    %v697 = vmul.f32 %v165, %v695
    %v698 = vmul.f32 %v166, %v695
    %v699 = vmul.f32 %v167, %v695
    %v700 = vadd.f32 %v690, %v696
    %v701 = vadd.f32 %v691, %v697
    %v702 = vadd.f32 %v692, %v698
    %v703 = vadd.f32 %v693, %v699
    %s704 = sld [smem:[#allocation6 + $0x284]]
    %v705 = vstv %s704
    %v706 = vmul.f32 %v180, %v705
    %v707 = vmul.f32 %v181, %v705
    %v708 = vmul.f32 %v182, %v705
    %v709 = vmul.f32 %v183, %v705
    %v710 = vadd.f32 %v700, %v706
    %v711 = vadd.f32 %v701, %v707
    %v712 = vadd.f32 %v702, %v708
    %v713 = vadd.f32 %v703, %v709
    %s714 = sld [smem:[#allocation6 + $0x285]]
    %v715 = vstv %s714
    %v716 = vmul.f32 %v196, %v715
    %v717 = vmul.f32 %v197, %v715
    %v718 = vmul.f32 %v198, %v715
    %v719 = vmul.f32 %v199, %v715
    %v720 = vadd.f32 %v710, %v716
    %v721 = vadd.f32 %v711, %v717
    %v722 = vadd.f32 %v712, %v718
    %v723 = vadd.f32 %v713, %v719
    %s724 = sld [smem:[#allocation6 + $0x286]]
    %v725 = vstv %s724
    %v726 = vmul.f32 %v212, %v725
    %v727 = vmul.f32 %v213, %v725
    %v728 = vmul.f32 %v214, %v725
    %v729 = vmul.f32 %v215, %v725
    %v730 = vadd.f32 %v720, %v726
    %v731 = vadd.f32 %v721, %v727
    %v732 = vadd.f32 %v722, %v728
    %v733 = vadd.f32 %v723, %v729
    %s734 = sld [smem:[#allocation6 + $0x287]]
    %v735 = vstv %s734
    %v736 = vmul.f32 %v228, %v735
    %v737 = vmul.f32 %v229, %v735
    %v738 = vmul.f32 %v230, %v735
    %v739 = vmul.f32 %v231, %v735
    %v740 = vadd.f32 %v730, %v736
    %v741 = vadd.f32 %v731, %v737
    %v742 = vadd.f32 %v732, %v738
    %v743 = vadd.f32 %v733, %v739
    %v744 = vmax.f32 %v740, 0.0
    %v745 = vmax.f32 %v741, 0.0
    %v746 = vmax.f32 %v742, 0.0
    %v747 = vmax.f32 %v743, 0.0
    %s748 = sld [smem:[#allocation6 + $0x300]]
    %v749 = vstv %s748
    %v750 = vmul.f32 %v116, %v749
    %v751 = vmul.f32 %v117, %v749
    %v752 = vmul.f32 %v118, %v749
    %v753 = vmul.f32 %v119, %v749
    %s754 = sld [smem:[#allocation7 + $0x6]]
    %v755 = vstv %s754
    %v756 = vadd.f32 %v750, %v755
    %v757 = vadd.f32 %v751, %v755
    %v758 = vadd.f32 %v752, %v755
    %v759 = vadd.f32 %v753, %v755
    %s760 = sld [smem:[#allocation6 + $0x301]]
    %v761 = vstv %s760
    %v762 = vmul.f32 %v132, %v761
    %v763 = vmul.f32 %v133, %v761
    %v764 = vmul.f32 %v134, %v761
    %v765 = vmul.f32 %v135, %v761
    %v766 = vadd.f32 %v756, %v762
    %v767 = vadd.f32 %v757, %v763
    %v768 = vadd.f32 %v758, %v764
    %v769 = vadd.f32 %v759, %v765
    %s770 = sld [smem:[#allocation6 + $0x302]]
    %v771 = vstv %s770
    %v772 = vmul.f32 %v148, %v771
    %v773 = vmul.f32 %v149, %v771
    %v774 = vmul.f32 %v150, %v771
    %v775 = vmul.f32 %v151, %v771
    %v776 = vadd.f32 %v766, %v772
    %v777 = vadd.f32 %v767, %v773
    %v778 = vadd.f32 %v768, %v774
    %v779 = vadd.f32 %v769, %v775
    %s780 = sld [smem:[#allocation6 + $0x303]]
    %v781 = vstv %s780
    %v782 = vmul.f32 %v164, %v781
    %v783 = vmul.f32 %v165, %v781
    %v784 = vmul.f32 %v166, %v781
    %v785 = vmul.f32 %v167, %v781
    %v786 = vadd.f32 %v776, %v782
    %v787 = vadd.f32 %v777, %v783
    %v788 = vadd.f32 %v778, %v784
    %v789 = vadd.f32 %v779, %v785
    %s790 = sld [smem:[#allocation6 + $0x304]]
    %v791 = vstv %s790
    %v792 = vmul.f32 %v180, %v791
    %v793 = vmul.f32 %v181, %v791
    %v794 = vmul.f32 %v182, %v791
    %v795 = vmul.f32 %v183, %v791
    %v796 = vadd.f32 %v786, %v792
    %v797 = vadd.f32 %v787, %v793
    %v798 = vadd.f32 %v788, %v794
    %v799 = vadd.f32 %v789, %v795
    %s800 = sld [smem:[#allocation6 + $0x305]]
    %v801 = vstv %s800
    %v802 = vmul.f32 %v196, %v801
    %v803 = vmul.f32 %v197, %v801
    %v804 = vmul.f32 %v198, %v801
    %v805 = vmul.f32 %v199, %v801
    %v806 = vadd.f32 %v796, %v802
    %v807 = vadd.f32 %v797, %v803
    %v808 = vadd.f32 %v798, %v804
    %v809 = vadd.f32 %v799, %v805
    %s810 = sld [smem:[#allocation6 + $0x306]]
    %v811 = vstv %s810
    %v812 = vmul.f32 %v212, %v811
    %v813 = vmul.f32 %v213, %v811
    %v814 = vmul.f32 %v214, %v811
    %v815 = vmul.f32 %v215, %v811
    %v816 = vadd.f32 %v806, %v812
    %v817 = vadd.f32 %v807, %v813
    %v818 = vadd.f32 %v808, %v814
    %v819 = vadd.f32 %v809, %v815
    %s820 = sld [smem:[#allocation6 + $0x307]]
    %v821 = vstv %s820
    %v822 = vmul.f32 %v228, %v821
    %v823 = vmul.f32 %v229, %v821
    %v824 = vmul.f32 %v230, %v821
    %v825 = vmul.f32 %v231, %v821
    %v826 = vadd.f32 %v816, %v822
    %v827 = vadd.f32 %v817, %v823
    %v828 = vadd.f32 %v818, %v824
    %v829 = vadd.f32 %v819, %v825
    %v830 = vmax.f32 %v826, 0.0
    %v831 = vmax.f32 %v827, 0.0
    %v832 = vmax.f32 %v828, 0.0
    %v833 = vmax.f32 %v829, 0.0
    %s834 = sld [smem:[#allocation6 + $0x380]]
    %v835 = vstv %s834
    %v836 = vmul.f32 %v116, %v835
    %v837 = vmul.f32 %v117, %v835
    %v838 = vmul.f32 %v118, %v835
    %v839 = vmul.f32 %v119, %v835
    %s840 = sld [smem:[#allocation7 + $0x7]]
    %v841 = vstv %s840
    %v842 = vadd.f32 %v836, %v841
    %v843 = vadd.f32 %v837, %v841
    %v844 = vadd.f32 %v838, %v841
    %v845 = vadd.f32 %v839, %v841
    %s846 = sld [smem:[#allocation6 + $0x381]]
    %v847 = vstv %s846
    %v848 = vmul.f32 %v132, %v847
    %v849 = vmul.f32 %v133, %v847
    %v850 = vmul.f32 %v134, %v847
    %v851 = vmul.f32 %v135, %v847
    %v852 = vadd.f32 %v842, %v848
    %v853 = vadd.f32 %v843, %v849
    %v854 = vadd.f32 %v844, %v850
    %v855 = vadd.f32 %v845, %v851
    %s856 = sld [smem:[#allocation6 + $0x382]]
    %v857 = vstv %s856
    %v858 = vmul.f32 %v148, %v857
    %v859 = vmul.f32 %v149, %v857
    %v860 = vmul.f32 %v150, %v857
    %v861 = vmul.f32 %v151, %v857
    %v862 = vadd.f32 %v852, %v858
    %v863 = vadd.f32 %v853, %v859
    %v864 = vadd.f32 %v854, %v860
    %v865 = vadd.f32 %v855, %v861
    %s866 = sld [smem:[#allocation6 + $0x383]]
    %v867 = vstv %s866
    %v868 = vmul.f32 %v164, %v867
    %v869 = vmul.f32 %v165, %v867
    %v870 = vmul.f32 %v166, %v867
    %v871 = vmul.f32 %v167, %v867
    %v872 = vadd.f32 %v862, %v868
    %v873 = vadd.f32 %v863, %v869
    %v874 = vadd.f32 %v864, %v870
    %v875 = vadd.f32 %v865, %v871
    %s876 = sld [smem:[#allocation6 + $0x384]]
    %v877 = vstv %s876
    %v878 = vmul.f32 %v180, %v877
    %v879 = vmul.f32 %v181, %v877
    %v880 = vmul.f32 %v182, %v877
    %v881 = vmul.f32 %v183, %v877
    %v882 = vadd.f32 %v872, %v878
    %v883 = vadd.f32 %v873, %v879
    %v884 = vadd.f32 %v874, %v880
    %v885 = vadd.f32 %v875, %v881
    %s886 = sld [smem:[#allocation6 + $0x385]]
    %v887 = vstv %s886
    %v888 = vmul.f32 %v196, %v887
    %v889 = vmul.f32 %v197, %v887
    %v890 = vmul.f32 %v198, %v887
    %v891 = vmul.f32 %v199, %v887
    %v892 = vadd.f32 %v882, %v888
    %v893 = vadd.f32 %v883, %v889
    %v894 = vadd.f32 %v884, %v890
    %v895 = vadd.f32 %v885, %v891
    %s896 = sld [smem:[#allocation6 + $0x386]]
    %v897 = vstv %s896
    %v898 = vmul.f32 %v212, %v897
    %v899 = vmul.f32 %v213, %v897
    %v900 = vmul.f32 %v214, %v897
    %v901 = vmul.f32 %v215, %v897
    %v902 = vadd.f32 %v892, %v898
    %v903 = vadd.f32 %v893, %v899
    %v904 = vadd.f32 %v894, %v900
    %v905 = vadd.f32 %v895, %v901
    %s906 = sld [smem:[#allocation6 + $0x387]]
    %v907 = vstv %s906
    %v908 = vmul.f32 %v228, %v907
    %v909 = vmul.f32 %v229, %v907
    %v910 = vmul.f32 %v230, %v907
    %v911 = vmul.f32 %v231, %v907
    %v912 = vadd.f32 %v902, %v908
    %v913 = vadd.f32 %v903, %v909
    %v914 = vadd.f32 %v904, %v910
    %v915 = vadd.f32 %v905, %v911
    %v916 = vmax.f32 %v912, 0.0
    %v917 = vmax.f32 %v913, 0.0
    %v918 = vmax.f32 %v914, 0.0
    %v919 = vmax.f32 %v915, 0.0
    %s920 = sld [smem:[#allocation9]]
    %v921 = vstv %s920
    %v922 = vmul.f32 %v314, %v921
    %v923 = vmul.f32 %v315, %v921
    %v924 = vmul.f32 %v316, %v921
    %v925 = vmul.f32 %v317, %v921
    %s926 = sld [smem:[#allocation10]]
    %v927 = vstv %s926
    %v928 = vadd.f32 %v922, %v927
    %v929 = vadd.f32 %v923, %v927
    %v930 = vadd.f32 %v924, %v927
    %v931 = vadd.f32 %v925, %v927
    %s932 = sld [smem:[#allocation9 + $0x1]]
    %v933 = vstv %s932
    %v934 = vmul.f32 %v400, %v933
    %v935 = vmul.f32 %v401, %v933
    %v936 = vmul.f32 %v402, %v933
    %v937 = vmul.f32 %v403, %v933
    %v938 = vadd.f32 %v928, %v934
    %v939 = vadd.f32 %v929, %v935
    %v940 = vadd.f32 %v930, %v936
    %v941 = vadd.f32 %v931, %v937
    %s942 = sld [smem:[#allocation9 + $0x2]]
    %v943 = vstv %s942
    %v944 = vmul.f32 %v486, %v943
    %v945 = vmul.f32 %v487, %v943
    %v946 = vmul.f32 %v488, %v943
    %v947 = vmul.f32 %v489, %v943
    %v948 = vadd.f32 %v938, %v944
    %v949 = vadd.f32 %v939, %v945
    %v950 = vadd.f32 %v940, %v946
    %v951 = vadd.f32 %v941, %v947
    %s952 = sld [smem:[#allocation9 + $0x3]]
    %v953 = vstv %s952
    %v954 = vmul.f32 %v572, %v953
    %v955 = vmul.f32 %v573, %v953
    %v956 = vmul.f32 %v574, %v953
    %v957 = vmul.f32 %v575, %v953
    %v958 = vadd.f32 %v948, %v954
    %v959 = vadd.f32 %v949, %v955
    %v960 = vadd.f32 %v950, %v956
    %v961 = vadd.f32 %v951, %v957
    %s962 = sld [smem:[#allocation9 + $0x4]]
    %v963 = vstv %s962
    %v964 = vmul.f32 %v658, %v963
    %v965 = vmul.f32 %v659, %v963
    %v966 = vmul.f32 %v660, %v963
    %v967 = vmul.f32 %v661, %v963
    %v968 = vadd.f32 %v958, %v964
    %v969 = vadd.f32 %v959, %v965
    %v970 = vadd.f32 %v960, %v966
    %v971 = vadd.f32 %v961, %v967
    %s972 = sld [smem:[#allocation9 + $0x5]]
    %v973 = vstv %s972
    %v974 = vmul.f32 %v744, %v973
    %v975 = vmul.f32 %v745, %v973
    %v976 = vmul.f32 %v746, %v973
    %v977 = vmul.f32 %v747, %v973
    %v978 = vadd.f32 %v968, %v974
    %v979 = vadd.f32 %v969, %v975
    %v980 = vadd.f32 %v970, %v976
    %v981 = vadd.f32 %v971, %v977
    %s982 = sld [smem:[#allocation9 + $0x6]]
    %v983 = vstv %s982
    %v984 = vmul.f32 %v830, %v983
    %v985 = vmul.f32 %v831, %v983
    %v986 = vmul.f32 %v832, %v983
    %v987 = vmul.f32 %v833, %v983
    %v988 = vadd.f32 %v978, %v984
    %v989 = vadd.f32 %v979, %v985
    %v990 = vadd.f32 %v980, %v986
    %v991 = vadd.f32 %v981, %v987
    %s992 = sld [smem:[#allocation9 + $0x7]]
    %v993 = vstv %s992
    %v994 = vmul.f32 %v916, %v993
    %v995 = vmul.f32 %v917, %v993
    %v996 = vmul.f32 %v918, %v993
    %v997 = vmul.f32 %v919, %v993
    %v998 = vadd.f32 %v988, %v994
    %v999 = vadd.f32 %v989, %v995
    %v1000 = vadd.f32 %v990, %v996
    %v1001 = vadd.f32 %v991, %v997
    %s1002 = sld [smem:[#allocation9 + $0x80]]
    %v1003 = vstv %s1002
    %v1004 = vmul.f32 %v314, %v1003
    %v1005 = vmul.f32 %v315, %v1003
    %v1006 = vmul.f32 %v316, %v1003
    %v1007 = vmul.f32 %v317, %v1003
    %s1008 = sld [smem:[#allocation10 + $0x1]]
    %v1009 = vstv %s1008
    %v1010 = vadd.f32 %v1004, %v1009
    %v1011 = vadd.f32 %v1005, %v1009
    %v1012 = vadd.f32 %v1006, %v1009
    %v1013 = vadd.f32 %v1007, %v1009
    %s1014 = sld [smem:[#allocation9 + $0x81]]
    %v1015 = vstv %s1014
    %v1016 = vmul.f32 %v400, %v1015
    %v1017 = vmul.f32 %v401, %v1015
    %v1018 = vmul.f32 %v402, %v1015
    %v1019 = vmul.f32 %v403, %v1015
    %v1020 = vadd.f32 %v1010, %v1016
    %v1021 = vadd.f32 %v1011, %v1017
    %v1022 = vadd.f32 %v1012, %v1018
    %v1023 = vadd.f32 %v1013, %v1019
    %s1024 = sld [smem:[#allocation9 + $0x82]]
    %v1025 = vstv %s1024
    %v1026 = vmul.f32 %v486, %v1025
    %v1027 = vmul.f32 %v487, %v1025
    %v1028 = vmul.f32 %v488, %v1025
    %v1029 = vmul.f32 %v489, %v1025
    %v1030 = vadd.f32 %v1020, %v1026
    %v1031 = vadd.f32 %v1021, %v1027
    %v1032 = vadd.f32 %v1022, %v1028
    %v1033 = vadd.f32 %v1023, %v1029
    %s1034 = sld [smem:[#allocation9 + $0x83]]
    %v1035 = vstv %s1034
    %v1036 = vmul.f32 %v572, %v1035
    %v1037 = vmul.f32 %v573, %v1035
    %v1038 = vmul.f32 %v574, %v1035
    %v1039 = vmul.f32 %v575, %v1035
    %v1040 = vadd.f32 %v1030, %v1036
    %v1041 = vadd.f32 %v1031, %v1037
    %v1042 = vadd.f32 %v1032, %v1038
    %v1043 = vadd.f32 %v1033, %v1039
    %s1044 = sld [smem:[#allocation9 + $0x84]]
    %v1045 = vstv %s1044
    %v1046 = vmul.f32 %v658, %v1045
    %v1047 = vmul.f32 %v659, %v1045
    %v1048 = vmul.f32 %v660, %v1045
    %v1049 = vmul.f32 %v661, %v1045
    %v1050 = vadd.f32 %v1040, %v1046
    %v1051 = vadd.f32 %v1041, %v1047
    %v1052 = vadd.f32 %v1042, %v1048
    %v1053 = vadd.f32 %v1043, %v1049
    %s1054 = sld [smem:[#allocation9 + $0x85]]
    %v1055 = vstv %s1054
    %v1056 = vmul.f32 %v744, %v1055
    %v1057 = vmul.f32 %v745, %v1055
    %v1058 = vmul.f32 %v746, %v1055
    %v1059 = vmul.f32 %v747, %v1055
    %v1060 = vadd.f32 %v1050, %v1056
    %v1061 = vadd.f32 %v1051, %v1057
    %v1062 = vadd.f32 %v1052, %v1058
    %v1063 = vadd.f32 %v1053, %v1059
    %s1064 = sld [smem:[#allocation9 + $0x86]]
    %v1065 = vstv %s1064
    %v1066 = vmul.f32 %v830, %v1065
    %v1067 = vmul.f32 %v831, %v1065
    %v1068 = vmul.f32 %v832, %v1065
    %v1069 = vmul.f32 %v833, %v1065
    %v1070 = vadd.f32 %v1060, %v1066
    %v1071 = vadd.f32 %v1061, %v1067
    %v1072 = vadd.f32 %v1062, %v1068
    %v1073 = vadd.f32 %v1063, %v1069
    %s1074 = sld [smem:[#allocation9 + $0x87]]
    %v1075 = vstv %s1074
    %v1076 = vmul.f32 %v916, %v1075
    %v1077 = vmul.f32 %v917, %v1075
    %v1078 = vmul.f32 %v918, %v1075
    %v1079 = vmul.f32 %v919, %v1075
    %v1080 = vadd.f32 %v1070, %v1076
    %v1081 = vadd.f32 %v1071, %v1077
    %v1082 = vadd.f32 %v1072, %v1078
    %v1083 = vadd.f32 %v1073, %v1079
    %s1084 = sld [smem:[#allocation9 + $0x100]]
    %v1085 = vstv %s1084
    %v1086 = vmul.f32 %v314, %v1085
    %v1087 = vmul.f32 %v315, %v1085
    %v1088 = vmul.f32 %v316, %v1085
    %v1089 = vmul.f32 %v317, %v1085
    %s1090 = sld [smem:[#allocation10 + $0x2]]
    %v1091 = vstv %s1090
    %v1092 = vadd.f32 %v1086, %v1091
    %v1093 = vadd.f32 %v1087, %v1091
    %v1094 = vadd.f32 %v1088, %v1091
    %v1095 = vadd.f32 %v1089, %v1091
    %s1096 = sld [smem:[#allocation9 + $0x101]]
    %v1097 = vstv %s1096
    %v1098 = vmul.f32 %v400, %v1097
    %v1099 = vmul.f32 %v401, %v1097
    %v1100 = vmul.f32 %v402, %v1097
    %v1101 = vmul.f32 %v403, %v1097
    %v1102 = vadd.f32 %v1092, %v1098
    %v1103 = vadd.f32 %v1093, %v1099
    %v1104 = vadd.f32 %v1094, %v1100
    %v1105 = vadd.f32 %v1095, %v1101
    %s1106 = sld [smem:[#allocation9 + $0x102]]
    %v1107 = vstv %s1106
    %v1108 = vmul.f32 %v486, %v1107
    %v1109 = vmul.f32 %v487, %v1107
    %v1110 = vmul.f32 %v488, %v1107
    %v1111 = vmul.f32 %v489, %v1107
    %v1112 = vadd.f32 %v1102, %v1108
    %v1113 = vadd.f32 %v1103, %v1109
    %v1114 = vadd.f32 %v1104, %v1110
    %v1115 = vadd.f32 %v1105, %v1111
    %s1116 = sld [smem:[#allocation9 + $0x103]]
    %v1117 = vstv %s1116
    %v1118 = vmul.f32 %v572, %v1117
    %v1119 = vmul.f32 %v573, %v1117
    %v1120 = vmul.f32 %v574, %v1117
    %v1121 = vmul.f32 %v575, %v1117
    %v1122 = vadd.f32 %v1112, %v1118
    %v1123 = vadd.f32 %v1113, %v1119
    %v1124 = vadd.f32 %v1114, %v1120
    %v1125 = vadd.f32 %v1115, %v1121
    %s1126 = sld [smem:[#allocation9 + $0x104]]
    %v1127 = vstv %s1126
    %v1128 = vmul.f32 %v658, %v1127
    %v1129 = vmul.f32 %v659, %v1127
    %v1130 = vmul.f32 %v660, %v1127
    %v1131 = vmul.f32 %v661, %v1127
    %v1132 = vadd.f32 %v1122, %v1128
    %v1133 = vadd.f32 %v1123, %v1129
    %v1134 = vadd.f32 %v1124, %v1130
    %v1135 = vadd.f32 %v1125, %v1131
    %s1136 = sld [smem:[#allocation9 + $0x105]]
    %v1137 = vstv %s1136
    %v1138 = vmul.f32 %v744, %v1137
    %v1139 = vmul.f32 %v745, %v1137
    %v1140 = vmul.f32 %v746, %v1137
    %v1141 = vmul.f32 %v747, %v1137
    %v1142 = vadd.f32 %v1132, %v1138
    %v1143 = vadd.f32 %v1133, %v1139
    %v1144 = vadd.f32 %v1134, %v1140
    %v1145 = vadd.f32 %v1135, %v1141
    %s1146 = sld [smem:[#allocation9 + $0x106]]
    %v1147 = vstv %s1146
    %v1148 = vmul.f32 %v830, %v1147
    %v1149 = vmul.f32 %v831, %v1147
    %v1150 = vmul.f32 %v832, %v1147
    %v1151 = vmul.f32 %v833, %v1147
    %v1152 = vadd.f32 %v1142, %v1148
    %v1153 = vadd.f32 %v1143, %v1149
    %v1154 = vadd.f32 %v1144, %v1150
    %v1155 = vadd.f32 %v1145, %v1151
    %s1156 = sld [smem:[#allocation9 + $0x107]]
    %v1157 = vstv %s1156
    %v1158 = vmul.f32 %v916, %v1157
    %v1159 = vmul.f32 %v917, %v1157
    %v1160 = vmul.f32 %v918, %v1157
    %v1161 = vmul.f32 %v919, %v1157
    %v1162 = vadd.f32 %v1152, %v1158
    %v1163 = vadd.f32 %v1153, %v1159
    %v1164 = vadd.f32 %v1154, %v1160
    %v1165 = vadd.f32 %v1155, %v1161
    %1166 = vst [vmem:[%s7] sm:$0xff] %v314
    %1167 = vst [vmem:[%s7 + $0x8] sm:$0xff] %v315
    %1168 = vst [vmem:[%s7 + $0x10] sm:$0xff] %v316
    %1169 = vst [vmem:[%s7 + $0x18] sm:$0xff] %v317
    %s1170 = scalar_lea.vmem %s7, 32
    %1171 = vst [vmem:[%s1170] sm:$0xff] %v400
    %1172 = vst [vmem:[%s1170 + $0x8] sm:$0xff] %v401
    %1173 = vst [vmem:[%s1170 + $0x10] sm:$0xff] %v402
    %1174 = vst [vmem:[%s1170 + $0x18] sm:$0xff] %v403
    %s1175 = scalar_lea.vmem %s7, 64
    %1176 = vst [vmem:[%s1175] sm:$0xff] %v486
    %1177 = vst [vmem:[%s1175 + $0x8] sm:$0xff] %v487
    %1178 = vst [vmem:[%s1175 + $0x10] sm:$0xff] %v488
    %1179 = vst [vmem:[%s1175 + $0x18] sm:$0xff] %v489
    %s1180 = scalar_lea.vmem %s7, 96
    %1181 = vst [vmem:[%s1180] sm:$0xff] %v572
    %1182 = vst [vmem:[%s1180 + $0x8] sm:$0xff] %v573
    %1183 = vst [vmem:[%s1180 + $0x10] sm:$0xff] %v574
    %1184 = vst [vmem:[%s1180 + $0x18] sm:$0xff] %v575
    %s1185 = scalar_lea.vmem %s7, 128
    %1186 = vst [vmem:[%s1185] sm:$0xff] %v658
    %1187 = vst [vmem:[%s1185 + $0x8] sm:$0xff] %v659
    %1188 = vst [vmem:[%s1185 + $0x10] sm:$0xff] %v660
    %1189 = vst [vmem:[%s1185 + $0x18] sm:$0xff] %v661
    %s1190 = scalar_lea.vmem %s7, 160
    %1191 = vst [vmem:[%s1190] sm:$0xff] %v744
    %1192 = vst [vmem:[%s1190 + $0x8] sm:$0xff] %v745
    %1193 = vst [vmem:[%s1190 + $0x10] sm:$0xff] %v746
    %1194 = vst [vmem:[%s1190 + $0x18] sm:$0xff] %v747
    %s1195 = scalar_lea.vmem %s7, 192
    %1196 = vst [vmem:[%s1195] sm:$0xff] %v830
    %1197 = vst [vmem:[%s1195 + $0x8] sm:$0xff] %v831
    %1198 = vst [vmem:[%s1195 + $0x10] sm:$0xff] %v832
    %1199 = vst [vmem:[%s1195 + $0x18] sm:$0xff] %v833
    %s1200 = scalar_lea.vmem %s7, 224
    %1201 = vst [vmem:[%s1200] sm:$0xff] %v916
    %1202 = vst [vmem:[%s1200 + $0x8] sm:$0xff] %v917
    %1203 = vst [vmem:[%s1200 + $0x10] sm:$0xff] %v918
    %1204 = vst [vmem:[%s1200 + $0x18] sm:$0xff] %v919
    %1205 = vst [vmem:[%s8] sm:$0xff] %v998
    %1206 = vst [vmem:[%s8 + $0x8] sm:$0xff] %v999
    %1207 = vst [vmem:[%s8 + $0x10] sm:$0xff] %v1000
    %1208 = vst [vmem:[%s8 + $0x18] sm:$0xff] %v1001
    %s1209 = scalar_lea.vmem %s8, 32
    %1210 = vst [vmem:[%s1209] sm:$0xff] %v1080
    %1211 = vst [vmem:[%s1209 + $0x8] sm:$0xff] %v1081
    %1212 = vst [vmem:[%s1209 + $0x10] sm:$0xff] %v1082
    %1213 = vst [vmem:[%s1209 + $0x18] sm:$0xff] %v1083
    %s1214 = scalar_lea.vmem %s8, 64
    %1215 = vst [vmem:[%s1214] sm:$0xff] %v1162
    %1216 = vst [vmem:[%s1214 + $0x8] sm:$0xff] %v1163
    %1217 = vst [vmem:[%s1214 + $0x10] sm:$0xff] %v1164
    %1218 = vst [vmem:[%s1214 + $0x18] sm:$0xff] %v1165
    %v1219 = vmax.f32 %v1080, %v1162
    %v1220 = vmax.f32 %v1081, %v1163
    %v1221 = vmax.f32 %v1082, %v1164
    %v1222 = vmax.f32 %v1083, %v1165
    %vm1223 = vcmp.ge.f32.partialorder %v998, %v1219
    %vm1224 = vcmp.ge.f32.partialorder %v999, %v1220
    %vm1225 = vcmp.ge.f32.partialorder %v1000, %v1221
    %vm1226 = vcmp.ge.f32.partialorder %v1001, %v1222
    %v1227 = vsel %vm1223, 1, 0
    %v1228 = vsel %vm1224, 1, 0
    %v1229 = vsel %vm1225, 1, 0
    %v1230 = vsel %vm1226, 1, 0
    %v1231 = vcvt.s32.f32 %v1227
    %v1232 = vcvt.s32.f32 %v1228
    %v1233 = vcvt.s32.f32 %v1229
    %v1234 = vcvt.s32.f32 %v1230
    %1235 = vst [vmem:[%s9] sm:$0xff] %v1231
    %1236 = vst [vmem:[%s9 + $0x8] sm:$0xff] %v1232
    %1237 = vst [vmem:[%s9 + $0x10] sm:$0xff] %v1233
    %1238 = vst [vmem:[%s9 + $0x18] sm:$0xff] %v1234
    // Predicated region
    $region54: #{forward.2} parent=1 // pred_check
      _
    $region55: #{forward.2} parent=1 // pred_check_branch
      %1240 = sbr.rel (0) target = $region57
    $region56: #{forward.2} parent=1 // pred_region
      _
    $region57: #{forward.2} parent=1 // pred_fallthru
      _
    // Predicated region
    $region58: #{forward.2} parent=1 // pred_check
      _
    $region59: #{forward.2} parent=1 // pred_check_branch
      %1242 = sbr.rel (0) target = $region61
    $region60: #{forward.2} parent=1 // pred_region
      _
    $region61: #{forward.2} parent=1 // pred_fallthru
      _
    // Predicated region
    $region62: #{forward.2} parent=1 // pred_check
      _
    $region63: #{forward.2} parent=1 // pred_check_branch
      %1244 = sbr.rel (0) target = $region65
    $region64: #{forward.2} parent=1 // pred_region
      _
    $region65: #{forward.2} parent=1 // pred_fallthru
      _
    // Predicated region
    $region66: #{forward.2} parent=1 // pred_check
      _
    $region67: #{forward.2} parent=1 // pred_check_branch
      %1246 = sbr.rel (0) target = $region69
    $region68: #{forward.2} parent=1 // pred_region
      _
    $region69: #{forward.2} parent=1 // pred_fallthru
      _
    // Predicated region
    $region70: #{forward.2} parent=1 // pred_check
      _
    $region71: #{forward.2} parent=1 // pred_check_branch
      %1248 = sbr.rel (0) target = $region73
    $region72: #{forward.2} parent=1 // pred_region
      _
    $region73: #{forward.2} parent=1 // pred_fallthru
      _
    // Predicated region
    $region74: #{forward.2} parent=1 // pred_check
      _
    $region75: #{forward.2} parent=1 // pred_check_branch
      %1250 = sbr.rel (0) target = $region77
    $region76: #{forward.2} parent=1 // pred_region
      _
    $region77: #{forward.2} parent=1 // pred_fallthru
      _
    %1251 = vsyncpa [#allocation3], 1
    %1252 = vsyncpa [#allocation5], 1
    %1253 = vsyncpa [#allocation8], 1
    %1254 = vsyncpa [#allocation11], 1

// kernel: custom-call.12
$region0: #{custom-call.12}
  %s0 = inlined_call_operand.vmem [shape: f32[2,1,3,16,16,16], index: 0, kind: output, shape index: {}]

// kernel: squeeze.13
$region0: #{squeeze.13}
  %s0 = inlined_call_operand.vmem [shape: f32[2,1,1,16,16,16], index: 0, kind: input, shape index: {}]
  %s1 = inlined_call_operand.vmem [shape: f32[1,64,128], index: 1, kind: output, shape index: {}]
  %v2 = vld [vmem:[%s0] ss:$8 sm:$0xf]
  %v3 = vld [vmem:[%s0] ss:$8 sm:$0xf0]
  %vm4 = vcmask 1047556
  %v5 = vsel %vm4, %v3, %v2
  %vm6 = vcmask 130048
  %7 = vst.msk [vmem:[%s1] sm:$0xff] %vm6, %v5
  %s8 = scalar_lea.vmem %s0, 64
  %v9 = vld [vmem:[%s8] ss:$8 sm:$0xf]
  %s10 = scalar_lea.vmem %s0, 64
  %v11 = vld [vmem:[%s10] ss:$8 sm:$0xf0]
  %vm12 = vcmask 1047556
  %v13 = vsel %vm12, %v11, %v9
  %vm14 = vcmask 130048
  %s15 = scalar_lea.vmem %s1, 8
  %16 = vst.msk [vmem:[%s15] sm:$0xff] %vm14, %v13
  %s17 = scalar_lea.vmem %s0, 128
  %v18 = vld [vmem:[%s17] ss:$8 sm:$0xf]
  %s19 = scalar_lea.vmem %s0, 128
  %v20 = vld [vmem:[%s19] ss:$8 sm:$0xf0]
  %vm21 = vcmask 1047556
  %v22 = vsel %vm21, %v20, %v18
  %vm23 = vcmask 130048
  %s24 = scalar_lea.vmem %s1, 16
  %25 = vst.msk [vmem:[%s24] sm:$0xff] %vm23, %v22
  %s26 = scalar_lea.vmem %s0, 192
  %v27 = vld [vmem:[%s26] ss:$8 sm:$0xf]
  %s28 = scalar_lea.vmem %s0, 192
  %v29 = vld [vmem:[%s28] ss:$8 sm:$0xf0]
  %vm30 = vcmask 1047556
  %v31 = vsel %vm30, %v29, %v27
  %vm32 = vcmask 130048
  %s33 = scalar_lea.vmem %s1, 24
  %34 = vst.msk [vmem:[%s33] sm:$0xff] %vm32, %v31
  %s35 = scalar_lea.vmem %s0, 256
  %v36 = vld [vmem:[%s35] ss:$8 sm:$0xf]
  %s37 = scalar_lea.vmem %s0, 256
  %v38 = vld [vmem:[%s37] ss:$8 sm:$0xf0]
  %vm39 = vcmask 1047556
  %v40 = vsel %vm39, %v38, %v36
  %vm41 = vcmask 130048
  %s42 = scalar_lea.vmem %s1, 32
  %43 = vst.msk [vmem:[%s42] sm:$0xff] %vm41, %v40
  %s44 = scalar_lea.vmem %s0, 320
  %v45 = vld [vmem:[%s44] ss:$8 sm:$0xf]
  %s46 = scalar_lea.vmem %s0, 320
  %v47 = vld [vmem:[%s46] ss:$8 sm:$0xf0]
  %vm48 = vcmask 1047556
  %v49 = vsel %vm48, %v47, %v45
  %vm50 = vcmask 130048
  %s51 = scalar_lea.vmem %s1, 40
  %52 = vst.msk [vmem:[%s51] sm:$0xff] %vm50, %v49
  %s53 = scalar_lea.vmem %s0, 384
  %v54 = vld [vmem:[%s53] ss:$8 sm:$0xf]
  %s55 = scalar_lea.vmem %s0, 384
  %v56 = vld [vmem:[%s55] ss:$8 sm:$0xf0]
  %vm57 = vcmask 1047556
  %v58 = vsel %vm57, %v56, %v54
  %vm59 = vcmask 130048
  %s60 = scalar_lea.vmem %s1, 48
  %61 = vst.msk [vmem:[%s60] sm:$0xff] %vm59, %v58
  %s62 = scalar_lea.vmem %s0, 448
  %v63 = vld [vmem:[%s62] ss:$8 sm:$0xf]
  %s64 = scalar_lea.vmem %s0, 448
  %v65 = vld [vmem:[%s64] ss:$8 sm:$0xf0]
  %vm66 = vcmask 1047556
  %v67 = vsel %vm66, %v65, %v63
  %vm68 = vcmask 130048
  %s69 = scalar_lea.vmem %s1, 56
  %70 = vst.msk [vmem:[%s69] sm:$0xff] %vm68, %v67
  %s71 = scalar_lea.vmem %s0, 7
  %v72 = vld [vmem:[%s71] ss:$8 sm:$0xf]
  %s73 = scalar_lea.vmem %s0, 7
  %v74 = vld [vmem:[%s73] ss:$8 sm:$0xf0]
  %vm75 = vcmask 1047556
  %v76 = vsel %vm75, %v74, %v72
  %77 = vrot.lane.b32.xlu0 %v76, 112
  %v78 = vpop.permute.xlu0 %77
  %vm79 = vcmask 1048448
  %80 = vst.msk [vmem:[%s1] sm:$0xff] %vm79, %v78
  %s81 = scalar_lea.vmem %s0, 263
  %v82 = vld [vmem:[%s81] ss:$8 sm:$0xf]
  %s83 = scalar_lea.vmem %s0, 263
  %v84 = vld [vmem:[%s83] ss:$8 sm:$0xf0]
  %vm85 = vcmask 1047556
  %v86 = vsel %vm85, %v84, %v82
  %87 = vrot.lane.b32.xlu0 %v86, 112
  %v88 = vpop.permute.xlu0 %87
  %vm89 = vcmask 1048448
  %s90 = scalar_lea.vmem %s1, 32
  %91 = vst.msk [vmem:[%s90] sm:$0xff] %vm89, %v88
  %s92 = scalar_lea.vmem %s0, 71
  %v93 = vld [vmem:[%s92] ss:$8 sm:$0xf]
  %s94 = scalar_lea.vmem %s0, 71
  %v95 = vld [vmem:[%s94] ss:$8 sm:$0xf0]
  %vm96 = vcmask 1047556
  %v97 = vsel %vm96, %v95, %v93
  %98 = vrot.lane.b32.xlu0 %v97, 112
  %v99 = vpop.permute.xlu0 %98
  %vm100 = vcmask 1048448
  %s101 = scalar_lea.vmem %s1, 8
  %102 = vst.msk [vmem:[%s101] sm:$0xff] %vm100, %v99
  %s103 = scalar_lea.vmem %s0, 327
  %v104 = vld [vmem:[%s103] ss:$8 sm:$0xf]
  %s105 = scalar_lea.vmem %s0, 327
  %v106 = vld [vmem:[%s105] ss:$8 sm:$0xf0]
  %vm107 = vcmask 1047556
  %v108 = vsel %vm107, %v106, %v104
  %109 = vrot.lane.b32.xlu0 %v108, 112
  %v110 = vpop.permute.xlu0 %109
  %vm111 = vcmask 1048448
  %s112 = scalar_lea.vmem %s1, 40
  %113 = vst.msk [vmem:[%s112] sm:$0xff] %vm111, %v110
  %s114 = scalar_lea.vmem %s0, 135
  %v115 = vld [vmem:[%s114] ss:$8 sm:$0xf]
  %s116 = scalar_lea.vmem %s0, 135
  %v117 = vld [vmem:[%s116] ss:$8 sm:$0xf0]
  %vm118 = vcmask 1047556
  %v119 = vsel %vm118, %v117, %v115
  %120 = vrot.lane.b32.xlu0 %v119, 112
  %v121 = vpop.permute.xlu0 %120
  %vm122 = vcmask 1048448
  %s123 = scalar_lea.vmem %s1, 16
  %124 = vst.msk [vmem:[%s123] sm:$0xff] %vm122, %v121
  %s125 = scalar_lea.vmem %s0, 391
  %v126 = vld [vmem:[%s125] ss:$8 sm:$0xf]
  %s127 = scalar_lea.vmem %s0, 391
  %v128 = vld [vmem:[%s127] ss:$8 sm:$0xf0]
  %vm129 = vcmask 1047556
  %v130 = vsel %vm129, %v128, %v126
  %131 = vrot.lane.b32.xlu0 %v130, 112
  %v132 = vpop.permute.xlu0 %131
  %vm133 = vcmask 1048448
  %s134 = scalar_lea.vmem %s1, 48
  %135 = vst.msk [vmem:[%s134] sm:$0xff] %vm133, %v132
  %s136 = scalar_lea.vmem %s0, 199
  %v137 = vld [vmem:[%s136] ss:$8 sm:$0xf]
  %s138 = scalar_lea.vmem %s0, 199
  %v139 = vld [vmem:[%s138] ss:$8 sm:$0xf0]
  %vm140 = vcmask 1047556
  %v141 = vsel %vm140, %v139, %v137
  %142 = vrot.lane.b32.xlu0 %v141, 112
  %v143 = vpop.permute.xlu0 %142
  %vm144 = vcmask 1048448
  %s145 = scalar_lea.vmem %s1, 24
  %146 = vst.msk [vmem:[%s145] sm:$0xff] %vm144, %v143
  %s147 = scalar_lea.vmem %s0, 455
  %v148 = vld [vmem:[%s147] ss:$8 sm:$0xf]
  %s149 = scalar_lea.vmem %s0, 455
  %v150 = vld [vmem:[%s149] ss:$8 sm:$0xf0]
  %vm151 = vcmask 1047556
  %v152 = vsel %vm151, %v150, %v148
  %153 = vrot.lane.b32.xlu0 %v152, 112
  %v154 = vpop.permute.xlu0 %153
  %vm155 = vcmask 1048448
  %s156 = scalar_lea.vmem %s1, 56
  %157 = vst.msk [vmem:[%s156] sm:$0xff] %vm155, %v154
  %s158 = scalar_lea.vmem %s0, 6
  %v159 = vld [vmem:[%s158] ss:$8 sm:$0xf]
  %s160 = scalar_lea.vmem %s0, 6
  %v161 = vld [vmem:[%s160] ss:$8 sm:$0xf0]
  %vm162 = vcmask 1047556
  %v163 = vsel %vm162, %v161, %v159
  %164 = vrot.lane.b32.xlu0 %v163, 96
  %v165 = vpop.permute.xlu0 %164
  %vm166 = vcmask 917248
  %167 = vst.msk [vmem:[%s1] sm:$0xff] %vm166, %v165
  %s168 = scalar_lea.vmem %s0, 262
  %v169 = vld [vmem:[%s168] ss:$8 sm:$0xf]
  %s170 = scalar_lea.vmem %s0, 262
  %v171 = vld [vmem:[%s170] ss:$8 sm:$0xf0]
  %vm172 = vcmask 1047556
  %v173 = vsel %vm172, %v171, %v169
  %174 = vrot.lane.b32.xlu0 %v173, 96
  %v175 = vpop.permute.xlu0 %174
  %vm176 = vcmask 917248
  %s177 = scalar_lea.vmem %s1, 32
  %178 = vst.msk [vmem:[%s177] sm:$0xff] %vm176, %v175
  %s179 = scalar_lea.vmem %s0, 70
  %v180 = vld [vmem:[%s179] ss:$8 sm:$0xf]
  %s181 = scalar_lea.vmem %s0, 70
  %v182 = vld [vmem:[%s181] ss:$8 sm:$0xf0]
  %vm183 = vcmask 1047556
  %v184 = vsel %vm183, %v182, %v180
  %185 = vrot.lane.b32.xlu0 %v184, 96
  %v186 = vpop.permute.xlu0 %185
  %vm187 = vcmask 917248
  %s188 = scalar_lea.vmem %s1, 8
  %189 = vst.msk [vmem:[%s188] sm:$0xff] %vm187, %v186
  %s190 = scalar_lea.vmem %s0, 326
  %v191 = vld [vmem:[%s190] ss:$8 sm:$0xf]
  %s192 = scalar_lea.vmem %s0, 326
  %v193 = vld [vmem:[%s192] ss:$8 sm:$0xf0]
  %vm194 = vcmask 1047556
  %v195 = vsel %vm194, %v193, %v191
  %196 = vrot.lane.b32.xlu0 %v195, 96
  %v197 = vpop.permute.xlu0 %196
  %vm198 = vcmask 917248
  %s199 = scalar_lea.vmem %s1, 40
  %200 = vst.msk [vmem:[%s199] sm:$0xff] %vm198, %v197
  %s201 = scalar_lea.vmem %s0, 134
  %v202 = vld [vmem:[%s201] ss:$8 sm:$0xf]
  %s203 = scalar_lea.vmem %s0, 134
  %v204 = vld [vmem:[%s203] ss:$8 sm:$0xf0]
  %vm205 = vcmask 1047556
  %v206 = vsel %vm205, %v204, %v202
  %207 = vrot.lane.b32.xlu0 %v206, 96
  %v208 = vpop.permute.xlu0 %207
  %vm209 = vcmask 917248
  %s210 = scalar_lea.vmem %s1, 16
  %211 = vst.msk [vmem:[%s210] sm:$0xff] %vm209, %v208
  %s212 = scalar_lea.vmem %s0, 390
  %v213 = vld [vmem:[%s212] ss:$8 sm:$0xf]
  %s214 = scalar_lea.vmem %s0, 390
  %v215 = vld [vmem:[%s214] ss:$8 sm:$0xf0]
  %vm216 = vcmask 1047556
  %v217 = vsel %vm216, %v215, %v213
  %218 = vrot.lane.b32.xlu0 %v217, 96
  %v219 = vpop.permute.xlu0 %218
  %vm220 = vcmask 917248
  %s221 = scalar_lea.vmem %s1, 48
  %222 = vst.msk [vmem:[%s221] sm:$0xff] %vm220, %v219
  %s223 = scalar_lea.vmem %s0, 198
  %v224 = vld [vmem:[%s223] ss:$8 sm:$0xf]
  %s225 = scalar_lea.vmem %s0, 198
  %v226 = vld [vmem:[%s225] ss:$8 sm:$0xf0]
  %vm227 = vcmask 1047556
  %v228 = vsel %vm227, %v226, %v224
  %229 = vrot.lane.b32.xlu0 %v228, 96
  %v230 = vpop.permute.xlu0 %229
  %vm231 = vcmask 917248
  %s232 = scalar_lea.vmem %s1, 24
  %233 = vst.msk [vmem:[%s232] sm:$0xff] %vm231, %v230
  %s234 = scalar_lea.vmem %s0, 454
  %v235 = vld [vmem:[%s234] ss:$8 sm:$0xf]
  %s236 = scalar_lea.vmem %s0, 454
  %v237 = vld [vmem:[%s236] ss:$8 sm:$0xf0]
  %vm238 = vcmask 1047556
  %v239 = vsel %vm238, %v237, %v235
  %240 = vrot.lane.b32.xlu0 %v239, 96
  %v241 = vpop.permute.xlu0 %240
  %vm242 = vcmask 917248
  %s243 = scalar_lea.vmem %s1, 56
  %244 = vst.msk [vmem:[%s243] sm:$0xff] %vm242, %v241
  %s245 = scalar_lea.vmem %s0, 5
  %v246 = vld [vmem:[%s245] ss:$8 sm:$0xf]
  %s247 = scalar_lea.vmem %s0, 5
  %v248 = vld [vmem:[%s247] ss:$8 sm:$0xf0]
  %vm249 = vcmask 1047556
  %v250 = vsel %vm249, %v248, %v246
  %251 = vrot.lane.b32.xlu0 %v250, 80
  %v252 = vpop.permute.xlu0 %251
  %vm253 = vcmask 786048
  %254 = vst.msk [vmem:[%s1] sm:$0xff] %vm253, %v252
  %s255 = scalar_lea.vmem %s0, 261
  %v256 = vld [vmem:[%s255] ss:$8 sm:$0xf]
  %s257 = scalar_lea.vmem %s0, 261
  %v258 = vld [vmem:[%s257] ss:$8 sm:$0xf0]
  %vm259 = vcmask 1047556
  %v260 = vsel %vm259, %v258, %v256
  %261 = vrot.lane.b32.xlu0 %v260, 80
  %v262 = vpop.permute.xlu0 %261
  %vm263 = vcmask 786048
  %s264 = scalar_lea.vmem %s1, 32
  %265 = vst.msk [vmem:[%s264] sm:$0xff] %vm263, %v262
  %s266 = scalar_lea.vmem %s0, 69
  %v267 = vld [vmem:[%s266] ss:$8 sm:$0xf]
  %s268 = scalar_lea.vmem %s0, 69
  %v269 = vld [vmem:[%s268] ss:$8 sm:$0xf0]
  %vm270 = vcmask 1047556
  %v271 = vsel %vm270, %v269, %v267
  %272 = vrot.lane.b32.xlu0 %v271, 80
  %v273 = vpop.permute.xlu0 %272
  %vm274 = vcmask 786048
  %s275 = scalar_lea.vmem %s1, 8
  %276 = vst.msk [vmem:[%s275] sm:$0xff] %vm274, %v273
  %s277 = scalar_lea.vmem %s0, 325
  %v278 = vld [vmem:[%s277] ss:$8 sm:$0xf]
  %s279 = scalar_lea.vmem %s0, 325
  %v280 = vld [vmem:[%s279] ss:$8 sm:$0xf0]
  %vm281 = vcmask 1047556
  %v282 = vsel %vm281, %v280, %v278
  %283 = vrot.lane.b32.xlu0 %v282, 80
  %v284 = vpop.permute.xlu0 %283
  %vm285 = vcmask 786048
  %s286 = scalar_lea.vmem %s1, 40
  %287 = vst.msk [vmem:[%s286] sm:$0xff] %vm285, %v284
  %s288 = scalar_lea.vmem %s0, 133
  %v289 = vld [vmem:[%s288] ss:$8 sm:$0xf]
  %s290 = scalar_lea.vmem %s0, 133
  %v291 = vld [vmem:[%s290] ss:$8 sm:$0xf0]
  %vm292 = vcmask 1047556
  %v293 = vsel %vm292, %v291, %v289
  %294 = vrot.lane.b32.xlu0 %v293, 80
  %v295 = vpop.permute.xlu0 %294
  %vm296 = vcmask 786048
  %s297 = scalar_lea.vmem %s1, 16
  %298 = vst.msk [vmem:[%s297] sm:$0xff] %vm296, %v295
  %s299 = scalar_lea.vmem %s0, 389
  %v300 = vld [vmem:[%s299] ss:$8 sm:$0xf]
  %s301 = scalar_lea.vmem %s0, 389
  %v302 = vld [vmem:[%s301] ss:$8 sm:$0xf0]
  %vm303 = vcmask 1047556
  %v304 = vsel %vm303, %v302, %v300
  %305 = vrot.lane.b32.xlu0 %v304, 80
  %v306 = vpop.permute.xlu0 %305
  %vm307 = vcmask 786048
  %s308 = scalar_lea.vmem %s1, 48
  %309 = vst.msk [vmem:[%s308] sm:$0xff] %vm307, %v306
  %s310 = scalar_lea.vmem %s0, 197
  %v311 = vld [vmem:[%s310] ss:$8 sm:$0xf]
  %s312 = scalar_lea.vmem %s0, 197
  %v313 = vld [vmem:[%s312] ss:$8 sm:$0xf0]
  %vm314 = vcmask 1047556
  %v315 = vsel %vm314, %v313, %v311
  %316 = vrot.lane.b32.xlu0 %v315, 80
  %v317 = vpop.permute.xlu0 %316
  %vm318 = vcmask 786048
  %s319 = scalar_lea.vmem %s1, 24
  %320 = vst.msk [vmem:[%s319] sm:$0xff] %vm318, %v317
  %s321 = scalar_lea.vmem %s0, 453
  %v322 = vld [vmem:[%s321] ss:$8 sm:$0xf]
  %s323 = scalar_lea.vmem %s0, 453
  %v324 = vld [vmem:[%s323] ss:$8 sm:$0xf0]
  %vm325 = vcmask 1047556
  %v326 = vsel %vm325, %v324, %v322
  %327 = vrot.lane.b32.xlu0 %v326, 80
  %v328 = vpop.permute.xlu0 %327
  %vm329 = vcmask 786048
  %s330 = scalar_lea.vmem %s1, 56
  %331 = vst.msk [vmem:[%s330] sm:$0xff] %vm329, %v328
  %s332 = scalar_lea.vmem %s0, 4
  %v333 = vld [vmem:[%s332] ss:$8 sm:$0xf]
  %s334 = scalar_lea.vmem %s0, 4
  %v335 = vld [vmem:[%s334] ss:$8 sm:$0xf0]
  %vm336 = vcmask 1047556
  %v337 = vsel %vm336, %v335, %v333
  %338 = vrot.lane.b32.xlu0 %v337, 64
  %v339 = vpop.permute.xlu0 %338
  %vm340 = vcmask 654848
  %341 = vst.msk [vmem:[%s1] sm:$0xff] %vm340, %v339
  %s342 = scalar_lea.vmem %s0, 260
  %v343 = vld [vmem:[%s342] ss:$8 sm:$0xf]
  %s344 = scalar_lea.vmem %s0, 260
  %v345 = vld [vmem:[%s344] ss:$8 sm:$0xf0]
  %vm346 = vcmask 1047556
  %v347 = vsel %vm346, %v345, %v343
  %348 = vrot.lane.b32.xlu0 %v347, 64
  %v349 = vpop.permute.xlu0 %348
  %vm350 = vcmask 654848
  %s351 = scalar_lea.vmem %s1, 32
  %352 = vst.msk [vmem:[%s351] sm:$0xff] %vm350, %v349
  %s353 = scalar_lea.vmem %s0, 68
  %v354 = vld [vmem:[%s353] ss:$8 sm:$0xf]
  %s355 = scalar_lea.vmem %s0, 68
  %v356 = vld [vmem:[%s355] ss:$8 sm:$0xf0]
  %vm357 = vcmask 1047556
  %v358 = vsel %vm357, %v356, %v354
  %359 = vrot.lane.b32.xlu0 %v358, 64
  %v360 = vpop.permute.xlu0 %359
  %vm361 = vcmask 654848
  %s362 = scalar_lea.vmem %s1, 8
  %363 = vst.msk [vmem:[%s362] sm:$0xff] %vm361, %v360
  %s364 = scalar_lea.vmem %s0, 324
  %v365 = vld [vmem:[%s364] ss:$8 sm:$0xf]
  %s366 = scalar_lea.vmem %s0, 324
  %v367 = vld [vmem:[%s366] ss:$8 sm:$0xf0]
  %vm368 = vcmask 1047556
  %v369 = vsel %vm368, %v367, %v365
  %370 = vrot.lane.b32.xlu0 %v369, 64
  %v371 = vpop.permute.xlu0 %370
  %vm372 = vcmask 654848
  %s373 = scalar_lea.vmem %s1, 40
  %374 = vst.msk [vmem:[%s373] sm:$0xff] %vm372, %v371
  %s375 = scalar_lea.vmem %s0, 132
  %v376 = vld [vmem:[%s375] ss:$8 sm:$0xf]
  %s377 = scalar_lea.vmem %s0, 132
  %v378 = vld [vmem:[%s377] ss:$8 sm:$0xf0]
  %vm379 = vcmask 1047556
  %v380 = vsel %vm379, %v378, %v376
  %381 = vrot.lane.b32.xlu0 %v380, 64
  %v382 = vpop.permute.xlu0 %381
  %vm383 = vcmask 654848
  %s384 = scalar_lea.vmem %s1, 16
  %385 = vst.msk [vmem:[%s384] sm:$0xff] %vm383, %v382
  %s386 = scalar_lea.vmem %s0, 388
  %v387 = vld [vmem:[%s386] ss:$8 sm:$0xf]
  %s388 = scalar_lea.vmem %s0, 388
  %v389 = vld [vmem:[%s388] ss:$8 sm:$0xf0]
  %vm390 = vcmask 1047556
  %v391 = vsel %vm390, %v389, %v387
  %392 = vrot.lane.b32.xlu0 %v391, 64
  %v393 = vpop.permute.xlu0 %392
  %vm394 = vcmask 654848
  %s395 = scalar_lea.vmem %s1, 48
  %396 = vst.msk [vmem:[%s395] sm:$0xff] %vm394, %v393
  %s397 = scalar_lea.vmem %s0, 196
  %v398 = vld [vmem:[%s397] ss:$8 sm:$0xf]
  %s399 = scalar_lea.vmem %s0, 196
  %v400 = vld [vmem:[%s399] ss:$8 sm:$0xf0]
  %vm401 = vcmask 1047556
  %v402 = vsel %vm401, %v400, %v398
  %403 = vrot.lane.b32.xlu0 %v402, 64
  %v404 = vpop.permute.xlu0 %403
  %vm405 = vcmask 654848
  %s406 = scalar_lea.vmem %s1, 24
  %407 = vst.msk [vmem:[%s406] sm:$0xff] %vm405, %v404
  %s408 = scalar_lea.vmem %s0, 452
  %v409 = vld [vmem:[%s408] ss:$8 sm:$0xf]
  %s410 = scalar_lea.vmem %s0, 452
  %v411 = vld [vmem:[%s410] ss:$8 sm:$0xf0]
  %vm412 = vcmask 1047556
  %v413 = vsel %vm412, %v411, %v409
  %414 = vrot.lane.b32.xlu0 %v413, 64
  %v415 = vpop.permute.xlu0 %414
  %vm416 = vcmask 654848
  %s417 = scalar_lea.vmem %s1, 56
  %418 = vst.msk [vmem:[%s417] sm:$0xff] %vm416, %v415
  %s419 = scalar_lea.vmem %s0, 3
  %v420 = vld [vmem:[%s419] ss:$8 sm:$0xf]
  %s421 = scalar_lea.vmem %s0, 3
  %v422 = vld [vmem:[%s421] ss:$8 sm:$0xf0]
  %vm423 = vcmask 1047556
  %v424 = vsel %vm423, %v422, %v420
  %425 = vrot.lane.b32.xlu0 %v424, 48
  %v426 = vpop.permute.xlu0 %425
  %vm427 = vcmask 523648
  %428 = vst.msk [vmem:[%s1] sm:$0xff] %vm427, %v426
  %s429 = scalar_lea.vmem %s0, 259
  %v430 = vld [vmem:[%s429] ss:$8 sm:$0xf]
  %s431 = scalar_lea.vmem %s0, 259
  %v432 = vld [vmem:[%s431] ss:$8 sm:$0xf0]
  %vm433 = vcmask 1047556
  %v434 = vsel %vm433, %v432, %v430
  %435 = vrot.lane.b32.xlu0 %v434, 48
  %v436 = vpop.permute.xlu0 %435
  %vm437 = vcmask 523648
  %s438 = scalar_lea.vmem %s1, 32
  %439 = vst.msk [vmem:[%s438] sm:$0xff] %vm437, %v436
  %s440 = scalar_lea.vmem %s0, 67
  %v441 = vld [vmem:[%s440] ss:$8 sm:$0xf]
  %s442 = scalar_lea.vmem %s0, 67
  %v443 = vld [vmem:[%s442] ss:$8 sm:$0xf0]
  %vm444 = vcmask 1047556
  %v445 = vsel %vm444, %v443, %v441
  %446 = vrot.lane.b32.xlu0 %v445, 48
  %v447 = vpop.permute.xlu0 %446
  %vm448 = vcmask 523648
  %s449 = scalar_lea.vmem %s1, 8
  %450 = vst.msk [vmem:[%s449] sm:$0xff] %vm448, %v447
  %s451 = scalar_lea.vmem %s0, 323
  %v452 = vld [vmem:[%s451] ss:$8 sm:$0xf]
  %s453 = scalar_lea.vmem %s0, 323
  %v454 = vld [vmem:[%s453] ss:$8 sm:$0xf0]
  %vm455 = vcmask 1047556
  %v456 = vsel %vm455, %v454, %v452
  %457 = vrot.lane.b32.xlu0 %v456, 48
  %v458 = vpop.permute.xlu0 %457
  %vm459 = vcmask 523648
  %s460 = scalar_lea.vmem %s1, 40
  %461 = vst.msk [vmem:[%s460] sm:$0xff] %vm459, %v458
  %s462 = scalar_lea.vmem %s0, 131
  %v463 = vld [vmem:[%s462] ss:$8 sm:$0xf]
  %s464 = scalar_lea.vmem %s0, 131
  %v465 = vld [vmem:[%s464] ss:$8 sm:$0xf0]
  %vm466 = vcmask 1047556
  %v467 = vsel %vm466, %v465, %v463
  %468 = vrot.lane.b32.xlu0 %v467, 48
  %v469 = vpop.permute.xlu0 %468
  %vm470 = vcmask 523648
  %s471 = scalar_lea.vmem %s1, 16
  %472 = vst.msk [vmem:[%s471] sm:$0xff] %vm470, %v469
  %s473 = scalar_lea.vmem %s0, 387
  %v474 = vld [vmem:[%s473] ss:$8 sm:$0xf]
  %s475 = scalar_lea.vmem %s0, 387
  %v476 = vld [vmem:[%s475] ss:$8 sm:$0xf0]
  %vm477 = vcmask 1047556
  %v478 = vsel %vm477, %v476, %v474
  %479 = vrot.lane.b32.xlu0 %v478, 48
  %v480 = vpop.permute.xlu0 %479
  %vm481 = vcmask 523648
  %s482 = scalar_lea.vmem %s1, 48
  %483 = vst.msk [vmem:[%s482] sm:$0xff] %vm481, %v480
  %s484 = scalar_lea.vmem %s0, 195
  %v485 = vld [vmem:[%s484] ss:$8 sm:$0xf]
  %s486 = scalar_lea.vmem %s0, 195
  %v487 = vld [vmem:[%s486] ss:$8 sm:$0xf0]
  %vm488 = vcmask 1047556
  %v489 = vsel %vm488, %v487, %v485
  %490 = vrot.lane.b32.xlu0 %v489, 48
  %v491 = vpop.permute.xlu0 %490
  %vm492 = vcmask 523648
  %s493 = scalar_lea.vmem %s1, 24
  %494 = vst.msk [vmem:[%s493] sm:$0xff] %vm492, %v491
  %s495 = scalar_lea.vmem %s0, 451
  %v496 = vld [vmem:[%s495] ss:$8 sm:$0xf]
  %s497 = scalar_lea.vmem %s0, 451
  %v498 = vld [vmem:[%s497] ss:$8 sm:$0xf0]
  %vm499 = vcmask 1047556
  %v500 = vsel %vm499, %v498, %v496
  %501 = vrot.lane.b32.xlu0 %v500, 48
  %v502 = vpop.permute.xlu0 %501
  %vm503 = vcmask 523648
  %s504 = scalar_lea.vmem %s1, 56
  %505 = vst.msk [vmem:[%s504] sm:$0xff] %vm503, %v502
  %s506 = scalar_lea.vmem %s0, 2
  %v507 = vld [vmem:[%s506] ss:$8 sm:$0xf]
  %s508 = scalar_lea.vmem %s0, 2
  %v509 = vld [vmem:[%s508] ss:$8 sm:$0xf0]
  %vm510 = vcmask 1047556
  %v511 = vsel %vm510, %v509, %v507
  %512 = vrot.lane.b32.xlu0 %v511, 32
  %v513 = vpop.permute.xlu0 %512
  %vm514 = vcmask 392448
  %515 = vst.msk [vmem:[%s1] sm:$0xff] %vm514, %v513
  %s516 = scalar_lea.vmem %s0, 258
  %v517 = vld [vmem:[%s516] ss:$8 sm:$0xf]
  %s518 = scalar_lea.vmem %s0, 258
  %v519 = vld [vmem:[%s518] ss:$8 sm:$0xf0]
  %vm520 = vcmask 1047556
  %v521 = vsel %vm520, %v519, %v517
  %522 = vrot.lane.b32.xlu0 %v521, 32
  %v523 = vpop.permute.xlu0 %522
  %vm524 = vcmask 392448
  %s525 = scalar_lea.vmem %s1, 32
  %526 = vst.msk [vmem:[%s525] sm:$0xff] %vm524, %v523
  %s527 = scalar_lea.vmem %s0, 66
  %v528 = vld [vmem:[%s527] ss:$8 sm:$0xf]
  %s529 = scalar_lea.vmem %s0, 66
  %v530 = vld [vmem:[%s529] ss:$8 sm:$0xf0]
  %vm531 = vcmask 1047556
  %v532 = vsel %vm531, %v530, %v528
  %533 = vrot.lane.b32.xlu0 %v532, 32
  %v534 = vpop.permute.xlu0 %533
  %vm535 = vcmask 392448
  %s536 = scalar_lea.vmem %s1, 8
  %537 = vst.msk [vmem:[%s536] sm:$0xff] %vm535, %v534
  %s538 = scalar_lea.vmem %s0, 322
  %v539 = vld [vmem:[%s538] ss:$8 sm:$0xf]
  %s540 = scalar_lea.vmem %s0, 322
  %v541 = vld [vmem:[%s540] ss:$8 sm:$0xf0]
  %vm542 = vcmask 1047556
  %v543 = vsel %vm542, %v541, %v539
  %544 = vrot.lane.b32.xlu0 %v543, 32
  %v545 = vpop.permute.xlu0 %544
  %vm546 = vcmask 392448
  %s547 = scalar_lea.vmem %s1, 40
  %548 = vst.msk [vmem:[%s547] sm:$0xff] %vm546, %v545
  %s549 = scalar_lea.vmem %s0, 130
  %v550 = vld [vmem:[%s549] ss:$8 sm:$0xf]
  %s551 = scalar_lea.vmem %s0, 130
  %v552 = vld [vmem:[%s551] ss:$8 sm:$0xf0]
  %vm553 = vcmask 1047556
  %v554 = vsel %vm553, %v552, %v550
  %555 = vrot.lane.b32.xlu0 %v554, 32
  %v556 = vpop.permute.xlu0 %555
  %vm557 = vcmask 392448
  %s558 = scalar_lea.vmem %s1, 16
  %559 = vst.msk [vmem:[%s558] sm:$0xff] %vm557, %v556
  %s560 = scalar_lea.vmem %s0, 386
  %v561 = vld [vmem:[%s560] ss:$8 sm:$0xf]
  %s562 = scalar_lea.vmem %s0, 386
  %v563 = vld [vmem:[%s562] ss:$8 sm:$0xf0]
  %vm564 = vcmask 1047556
  %v565 = vsel %vm564, %v563, %v561
  %566 = vrot.lane.b32.xlu0 %v565, 32
  %v567 = vpop.permute.xlu0 %566
  %vm568 = vcmask 392448
  %s569 = scalar_lea.vmem %s1, 48
  %570 = vst.msk [vmem:[%s569] sm:$0xff] %vm568, %v567
  %s571 = scalar_lea.vmem %s0, 194
  %v572 = vld [vmem:[%s571] ss:$8 sm:$0xf]
  %s573 = scalar_lea.vmem %s0, 194
  %v574 = vld [vmem:[%s573] ss:$8 sm:$0xf0]
  %vm575 = vcmask 1047556
  %v576 = vsel %vm575, %v574, %v572
  %577 = vrot.lane.b32.xlu0 %v576, 32
  %v578 = vpop.permute.xlu0 %577
  %vm579 = vcmask 392448
  %s580 = scalar_lea.vmem %s1, 24
  %581 = vst.msk [vmem:[%s580] sm:$0xff] %vm579, %v578
  %s582 = scalar_lea.vmem %s0, 450
  %v583 = vld [vmem:[%s582] ss:$8 sm:$0xf]
  %s584 = scalar_lea.vmem %s0, 450
  %v585 = vld [vmem:[%s584] ss:$8 sm:$0xf0]
  %vm586 = vcmask 1047556
  %v587 = vsel %vm586, %v585, %v583
  %588 = vrot.lane.b32.xlu0 %v587, 32
  %v589 = vpop.permute.xlu0 %588
  %vm590 = vcmask 392448
  %s591 = scalar_lea.vmem %s1, 56
  %592 = vst.msk [vmem:[%s591] sm:$0xff] %vm590, %v589
  %s593 = scalar_lea.vmem %s0, 1
  %v594 = vld [vmem:[%s593] ss:$8 sm:$0xf]
  %s595 = scalar_lea.vmem %s0, 1
  %v596 = vld [vmem:[%s595] ss:$8 sm:$0xf0]
  %vm597 = vcmask 1047556
  %v598 = vsel %vm597, %v596, %v594
  %599 = vrot.lane.b32.xlu0 %v598, 16
  %v600 = vpop.permute.xlu0 %599
  %vm601 = vcmask 261248
  %602 = vst.msk [vmem:[%s1] sm:$0xff] %vm601, %v600
  %s603 = scalar_lea.vmem %s0, 257
  %v604 = vld [vmem:[%s603] ss:$8 sm:$0xf]
  %s605 = scalar_lea.vmem %s0, 257
  %v606 = vld [vmem:[%s605] ss:$8 sm:$0xf0]
  %vm607 = vcmask 1047556
  %v608 = vsel %vm607, %v606, %v604
  %609 = vrot.lane.b32.xlu0 %v608, 16
  %v610 = vpop.permute.xlu0 %609
  %vm611 = vcmask 261248
  %s612 = scalar_lea.vmem %s1, 32
  %613 = vst.msk [vmem:[%s612] sm:$0xff] %vm611, %v610
  %s614 = scalar_lea.vmem %s0, 65
  %v615 = vld [vmem:[%s614] ss:$8 sm:$0xf]
  %s616 = scalar_lea.vmem %s0, 65
  %v617 = vld [vmem:[%s616] ss:$8 sm:$0xf0]
  %vm618 = vcmask 1047556
  %v619 = vsel %vm618, %v617, %v615
  %620 = vrot.lane.b32.xlu0 %v619, 16
  %v621 = vpop.permute.xlu0 %620
  %vm622 = vcmask 261248
  %s623 = scalar_lea.vmem %s1, 8
  %624 = vst.msk [vmem:[%s623] sm:$0xff] %vm622, %v621
  %s625 = scalar_lea.vmem %s0, 321
  %v626 = vld [vmem:[%s625] ss:$8 sm:$0xf]
  %s627 = scalar_lea.vmem %s0, 321
  %v628 = vld [vmem:[%s627] ss:$8 sm:$0xf0]
  %vm629 = vcmask 1047556
  %v630 = vsel %vm629, %v628, %v626
  %631 = vrot.lane.b32.xlu0 %v630, 16
  %v632 = vpop.permute.xlu0 %631
  %vm633 = vcmask 261248
  %s634 = scalar_lea.vmem %s1, 40
  %635 = vst.msk [vmem:[%s634] sm:$0xff] %vm633, %v632
  %s636 = scalar_lea.vmem %s0, 129
  %v637 = vld [vmem:[%s636] ss:$8 sm:$0xf]
  %s638 = scalar_lea.vmem %s0, 129
  %v639 = vld [vmem:[%s638] ss:$8 sm:$0xf0]
  %vm640 = vcmask 1047556
  %v641 = vsel %vm640, %v639, %v637
  %642 = vrot.lane.b32.xlu0 %v641, 16
  %v643 = vpop.permute.xlu0 %642
  %vm644 = vcmask 261248
  %s645 = scalar_lea.vmem %s1, 16
  %646 = vst.msk [vmem:[%s645] sm:$0xff] %vm644, %v643
  %s647 = scalar_lea.vmem %s0, 385
  %v648 = vld [vmem:[%s647] ss:$8 sm:$0xf]
  %s649 = scalar_lea.vmem %s0, 385
  %v650 = vld [vmem:[%s649] ss:$8 sm:$0xf0]
  %vm651 = vcmask 1047556
  %v652 = vsel %vm651, %v650, %v648
  %653 = vrot.lane.b32.xlu0 %v652, 16
  %v654 = vpop.permute.xlu0 %653
  %vm655 = vcmask 261248
  %s656 = scalar_lea.vmem %s1, 48
  %657 = vst.msk [vmem:[%s656] sm:$0xff] %vm655, %v654
  %s658 = scalar_lea.vmem %s0, 193
  %v659 = vld [vmem:[%s658] ss:$8 sm:$0xf]
  %s660 = scalar_lea.vmem %s0, 193
  %v661 = vld [vmem:[%s660] ss:$8 sm:$0xf0]
  %vm662 = vcmask 1047556
  %v663 = vsel %vm662, %v661, %v659
  %664 = vrot.lane.b32.xlu0 %v663, 16
  %v665 = vpop.permute.xlu0 %664
  %vm666 = vcmask 261248
  %s667 = scalar_lea.vmem %s1, 24
  %668 = vst.msk [vmem:[%s667] sm:$0xff] %vm666, %v665
  %s669 = scalar_lea.vmem %s0, 449
  %v670 = vld [vmem:[%s669] ss:$8 sm:$0xf]
  %s671 = scalar_lea.vmem %s0, 449
  %v672 = vld [vmem:[%s671] ss:$8 sm:$0xf0]
  %vm673 = vcmask 1047556
  %v674 = vsel %vm673, %v672, %v670
  %675 = vrot.lane.b32.xlu0 %v674, 16
  %v676 = vpop.permute.xlu0 %675
  %vm677 = vcmask 261248
  %s678 = scalar_lea.vmem %s1, 56
  %679 = vst.msk [vmem:[%s678] sm:$0xff] %vm677, %v676

// kernel: forward.3
$region0: #{forward.3}
  #allocation0 [shape = 'u32[]', space=smem, size = 0x4, offset = 0x4, fixed_abs, tag = 'smem constant byte address 0x4 - core index']
  #allocation1 [shape = 'u32[144,128]{1,0:T(1,128)}', space=vmem, size = 0x12000, scoped, tag = 'internal scratch']
  %s0 = inlined_call_operand.vmem [shape: f32[1,64,128], index: 0, kind: input, shape index: {}]
  %s1 = inlined_call_operand.vmem [shape: f32[3,64,128], index: 1, kind: input, shape index: {}]
  %s2 = inlined_call_operand.vmem [shape: f32[8,1], index: 2, kind: input, shape index: {}]
  %s3 = inlined_call_operand.vmem [shape: f32[8], index: 3, kind: input, shape index: {}]
  %s4 = inlined_call_operand.vmem [shape: f32[8,8], index: 4, kind: input, shape index: {}]
  %s5 = inlined_call_operand.vmem [shape: f32[8], index: 5, kind: input, shape index: {}]
  %s6 = inlined_call_operand.vmem [shape: f32[3,8], index: 6, kind: input, shape index: {}]
  %s7 = inlined_call_operand.vmem [shape: f32[3], index: 7, kind: input, shape index: {}]
  %s8 = inlined_call_operand.vmem [shape: f32[3,3], index: 8, kind: input, shape index: {}]
  %s9 = inlined_call_operand.vmem [shape: f32[3,3], index: 9, kind: input, shape index: {}]
  %s10 = inlined_call_operand.vmem [shape: f32[3], index: 10, kind: input, shape index: {}]
  %s11 = inlined_call_operand.vmem [shape: f32[3,64,128], index: 11, kind: output, shape index: {0}]
  %s12 = inlined_call_operand.vmem [shape: f32[3,64,128], index: 12, kind: output, shape index: {1}]
  %13 = xla_tuple %s11, %s12
  %s14 = sld [smem:[#allocation0]]
  $region98: #{forward.3} parent=0
    _
  %s16 = ssub.s32 1, %s14
  %s17 = scalar_select 0, %s16, %s14
  $region1: #{forward.3} parent=0
    #allocation2 [shape = 'u8[4096]{0}', space=smem, size = 0x1000, scoped, tag = 'input window, operand 2, single buffered']
    #allocation3 [shape = 's32[1]{0}', space=sflag, size = 0x4, scoped, tag = 'scoped memory for forward.3']
    #allocation4 [shape = 'u8[512]{0}', space=smem, size = 0x200, scoped, tag = 'input window, operand 3, single buffered']
    #allocation5 [shape = 's32[1]{0}', space=sflag, size = 0x4, scoped, tag = 'scoped memory for forward.3']
    #allocation6 [shape = 'u8[4096]{0}', space=smem, size = 0x1000, scoped, tag = 'input window, operand 4, single buffered']
    #allocation7 [shape = 'u8[512]{0}', space=smem, size = 0x200, scoped, tag = 'input window, operand 5, single buffered']
    #allocation8 [shape = 's32[1]{0}', space=sflag, size = 0x4, scoped, tag = 'scoped memory for forward.3']
    #allocation9 [shape = 'u8[2048]{0}', space=smem, size = 0x800, scoped, tag = 'input window, operand 6, single buffered']
    #allocation10 [shape = 'u8[512]{0}', space=smem, size = 0x200, scoped, tag = 'input window, operand 7, single buffered']
    #allocation11 [shape = 's32[1]{0}', space=sflag, size = 0x4, scoped, tag = 'scoped memory for forward.3']
    #allocation12 [shape = 'u8[2048]{0}', space=smem, size = 0x800, scoped, tag = 'input window, operand 8, single buffered']
    #allocation13 [shape = 'u8[2048]{0}', space=smem, size = 0x800, scoped, tag = 'input window, operand 9, single buffered']
    #allocation14 [shape = 's32[1]{0}', space=sflag, size = 0x4, scoped, tag = 'scoped memory for forward.3']
    #allocation15 [shape = 'u8[512]{0}', space=smem, size = 0x200, scoped, tag = 'input window, operand 10, single buffered']
    %18 = vsyncpa [#allocation3], 0
    %19 = vsyncpa [#allocation5], 0
    %20 = vsyncpa [#allocation8], 0
    %21 = vsyncpa [#allocation11], 0
    %22 = vsyncpa [#allocation14], 0
    // Predicated region
    $region2: #{forward.3} parent=1 // pred_check
      _
    $region3: #{forward.3} parent=1 // pred_check_branch
      %24 = sbr.rel (0) target = $region5
    $region4: #{forward.3} parent=1 // pred_region
      _
    $region5: #{forward.3} parent=1 // pred_fallthru
      _
    // Predicated region
    $region6: #{forward.3} parent=1 // pred_check
      _
    $region7: #{forward.3} parent=1 // pred_check_branch
      %26 = sbr.rel (0) target = $region9
    $region8: #{forward.3} parent=1 // pred_region
      _
    $region9: #{forward.3} parent=1 // pred_fallthru
      _
    // Predicated region
    $region10: #{forward.3} parent=1 // pred_check
      _
    $region11: #{forward.3} parent=1 // pred_check_branch
      %28 = sbr.rel (0) target = $region13
    $region12: #{forward.3} parent=1 // pred_region
      %s30 = ssub.s32 128, 128
      %31 = vsyncadd [#allocation3], %s30
      %s33 = sshll.u32 %s2, 4
      %s34 = int_to_ptr.vmem [resolvable:$true] %s33
      %36 = dma.vmem_to_smem %s34, 128, [#allocation2], [#allocation3]
    $region13: #{forward.3} parent=1 // pred_fallthru
      _
    // Predicated region
    $region14: #{forward.3} parent=1 // pred_check
      _
    $region15: #{forward.3} parent=1 // pred_check_branch
      %38 = sbr.rel (0) target = $region17
    $region16: #{forward.3} parent=1 // pred_region
      %s40 = ssub.s32 16, 16
      %41 = vsyncadd [#allocation5], %s40
      %s43 = sshll.u32 %s3, 4
      %s44 = int_to_ptr.vmem [resolvable:$true] %s43
      %46 = dma.vmem_to_smem %s44, 16, [#allocation4], [#allocation5]
    $region17: #{forward.3} parent=1 // pred_fallthru
      _
    // Predicated region
    $region18: #{forward.3} parent=1 // pred_check
      _
    $region19: #{forward.3} parent=1 // pred_check_branch
      %48 = sbr.rel (0) target = $region21
    $region20: #{forward.3} parent=1 // pred_region
      %s50 = ssub.s32 128, 128
      %51 = vsyncadd [#allocation5], %s50
      %s53 = sshll.u32 %s4, 4
      %s54 = int_to_ptr.vmem [resolvable:$true] %s53
      %56 = dma.vmem_to_smem %s54, 128, [#allocation6], [#allocation5]
    $region21: #{forward.3} parent=1 // pred_fallthru
      _
    // Predicated region
    $region22: #{forward.3} parent=1 // pred_check
      _
    $region23: #{forward.3} parent=1 // pred_check_branch
      %58 = sbr.rel (0) target = $region25
    $region24: #{forward.3} parent=1 // pred_region
      %s60 = ssub.s32 16, 16
      %61 = vsyncadd [#allocation8], %s60
      %s63 = sshll.u32 %s5, 4
      %s64 = int_to_ptr.vmem [resolvable:$true] %s63
      %66 = dma.vmem_to_smem %s64, 16, [#allocation7], [#allocation8]
    $region25: #{forward.3} parent=1 // pred_fallthru
      _
    // Predicated region
    $region26: #{forward.3} parent=1 // pred_check
      _
    $region27: #{forward.3} parent=1 // pred_check_branch
      %68 = sbr.rel (0) target = $region29
    $region28: #{forward.3} parent=1 // pred_region
      %s70 = ssub.s32 64, 64
      %71 = vsyncadd [#allocation8], %s70
      %s73 = sshll.u32 %s6, 4
      %s74 = int_to_ptr.vmem [resolvable:$true] %s73
      %76 = dma.vmem_to_smem %s74, 64, [#allocation9], [#allocation8]
    $region29: #{forward.3} parent=1 // pred_fallthru
      _
    // Predicated region
    $region30: #{forward.3} parent=1 // pred_check
      _
    $region31: #{forward.3} parent=1 // pred_check_branch
      %78 = sbr.rel (0) target = $region33
    $region32: #{forward.3} parent=1 // pred_region
      %s80 = ssub.s32 16, 16
      %81 = vsyncadd [#allocation11], %s80
      %s83 = sshll.u32 %s7, 4
      %s84 = int_to_ptr.vmem [resolvable:$true] %s83
      %86 = dma.vmem_to_smem %s84, 16, [#allocation10], [#allocation11]
    $region33: #{forward.3} parent=1 // pred_fallthru
      _
    // Predicated region
    $region34: #{forward.3} parent=1 // pred_check
      _
    $region35: #{forward.3} parent=1 // pred_check_branch
      %88 = sbr.rel (0) target = $region37
    $region36: #{forward.3} parent=1 // pred_region
      %s90 = ssub.s32 64, 64
      %91 = vsyncadd [#allocation11], %s90
      %s93 = sshll.u32 %s8, 4
      %s94 = int_to_ptr.vmem [resolvable:$true] %s93
      %96 = dma.vmem_to_smem %s94, 64, [#allocation12], [#allocation11]
    $region37: #{forward.3} parent=1 // pred_fallthru
      _
    // Predicated region
    $region38: #{forward.3} parent=1 // pred_check
      _
    $region39: #{forward.3} parent=1 // pred_check_branch
      %98 = sbr.rel (0) target = $region41
    $region40: #{forward.3} parent=1 // pred_region
      %s100 = ssub.s32 64, 64
      %101 = vsyncadd [#allocation14], %s100
      %s103 = sshll.u32 %s9, 4
      %s104 = int_to_ptr.vmem [resolvable:$true] %s103
      %106 = dma.vmem_to_smem %s104, 64, [#allocation13], [#allocation14]
    $region41: #{forward.3} parent=1 // pred_fallthru
      _
    // Predicated region
    $region42: #{forward.3} parent=1 // pred_check
      _
    $region43: #{forward.3} parent=1 // pred_check_branch
      %108 = sbr.rel (0) target = $region45
    $region44: #{forward.3} parent=1 // pred_region
      %s110 = ssub.s32 16, 16
      %111 = vsyncadd [#allocation14], %s110
      %s113 = sshll.u32 %s10, 4
      %s114 = int_to_ptr.vmem [resolvable:$true] %s113
      %116 = dma.vmem_to_smem %s114, 16, [#allocation15], [#allocation14]
    $region45: #{forward.3} parent=1 // pred_fallthru
      _
    // Predicated region
    $region46: #{forward.3} parent=1 // pred_check
      _
    $region47: #{forward.3} parent=1 // pred_check_branch
      %118 = sbr.rel (0) target = $region49
    $region48: #{forward.3} parent=1 // pred_region
      %119 = dma.done [#allocation3], 128
    $region49: #{forward.3} parent=1 // pred_fallthru
      _
    // Predicated region
    $region50: #{forward.3} parent=1 // pred_check
      _
    $region51: #{forward.3} parent=1 // pred_check_branch
      %121 = sbr.rel (0) target = $region53
    $region52: #{forward.3} parent=1 // pred_region
      %122 = dma.done [#allocation5], 16
    $region53: #{forward.3} parent=1 // pred_fallthru
      _
    // Predicated region
    $region54: #{forward.3} parent=1 // pred_check
      _
    $region55: #{forward.3} parent=1 // pred_check_branch
      %124 = sbr.rel (0) target = $region57
    $region56: #{forward.3} parent=1 // pred_region
      %125 = dma.done [#allocation5], 128
    $region57: #{forward.3} parent=1 // pred_fallthru
      _
    // Predicated region
    $region58: #{forward.3} parent=1 // pred_check
      _
    $region59: #{forward.3} parent=1 // pred_check_branch
      %127 = sbr.rel (0) target = $region61
    $region60: #{forward.3} parent=1 // pred_region
      %128 = dma.done [#allocation8], 16
    $region61: #{forward.3} parent=1 // pred_fallthru
      _
    // Predicated region
    $region62: #{forward.3} parent=1 // pred_check
      _
    $region63: #{forward.3} parent=1 // pred_check_branch
      %130 = sbr.rel (0) target = $region65
    $region64: #{forward.3} parent=1 // pred_region
      %131 = dma.done [#allocation8], 64
    $region65: #{forward.3} parent=1 // pred_fallthru
      _
    // Predicated region
    $region66: #{forward.3} parent=1 // pred_check
      _
    $region67: #{forward.3} parent=1 // pred_check_branch
      %133 = sbr.rel (0) target = $region69
    $region68: #{forward.3} parent=1 // pred_region
      %134 = dma.done [#allocation11], 16
    $region69: #{forward.3} parent=1 // pred_fallthru
      _
    // Predicated region
    $region70: #{forward.3} parent=1 // pred_check
      _
    $region71: #{forward.3} parent=1 // pred_check_branch
      %136 = sbr.rel (0) target = $region73
    $region72: #{forward.3} parent=1 // pred_region
      %137 = dma.done [#allocation11], 64
    $region73: #{forward.3} parent=1 // pred_fallthru
      _
    // Predicated region
    $region74: #{forward.3} parent=1 // pred_check
      _
    $region75: #{forward.3} parent=1 // pred_check_branch
      %139 = sbr.rel (0) target = $region77
    $region76: #{forward.3} parent=1 // pred_region
      %140 = dma.done [#allocation14], 64
    $region77: #{forward.3} parent=1 // pred_fallthru
      _
    // Predicated region
    $region78: #{forward.3} parent=1 // pred_check
      _
    $region79: #{forward.3} parent=1 // pred_check_branch
      %142 = sbr.rel (0) target = $region81
    $region80: #{forward.3} parent=1 // pred_region
      %143 = dma.done [#allocation14], 16
    $region81: #{forward.3} parent=1 // pred_fallthru
      _
    %144 = sfence
    %v145 = vld [vmem:[%s0] sm:$0xff]
    %v146 = vld [vmem:[%s0 + $0x8] sm:$0xff]
    %v147 = vld [vmem:[%s0 + $0x10] sm:$0xff]
    %v148 = vld [vmem:[%s0 + $0x18] sm:$0xff]
    %v149 = vld [vmem:[%s0 + $0x20] sm:$0xff]
    %v150 = vld [vmem:[%s0 + $0x28] sm:$0xff]
    %v151 = vld [vmem:[%s0 + $0x30] sm:$0xff]
    %v152 = vld [vmem:[%s0 + $0x38] sm:$0xff]
    %s153 = sld [smem:[#allocation2]]
    %v154 = vstv %s153
    %v155 = vmul.f32 %v145, %v154
    %v156 = vmul.f32 %v146, %v154
    %v157 = vmul.f32 %v147, %v154
    %v158 = vmul.f32 %v148, %v154
    %v159 = vmul.f32 %v149, %v154
    %v160 = vmul.f32 %v150, %v154
    %v161 = vmul.f32 %v151, %v154
    %v162 = vmul.f32 %v152, %v154
    %s163 = sld [smem:[#allocation4]]
    %v164 = vstv %s163
    %v165 = vadd.f32 %v155, %v164
    %v166 = vadd.f32 %v156, %v164
    %v167 = vadd.f32 %v157, %v164
    %v168 = vadd.f32 %v158, %v164
    %v169 = vadd.f32 %v159, %v164
    %v170 = vadd.f32 %v160, %v164
    %v171 = vadd.f32 %v161, %v164
    %v172 = vadd.f32 %v162, %v164
    %v173 = vmax.f32 %v165, 0.0
    %v174 = vmax.f32 %v166, 0.0
    %v175 = vmax.f32 %v167, 0.0
    %v176 = vmax.f32 %v168, 0.0
    %v177 = vmax.f32 %v169, 0.0
    %v178 = vmax.f32 %v170, 0.0
    %v179 = vmax.f32 %v171, 0.0
    %v180 = vmax.f32 %v172, 0.0
    %s181 = sld [smem:[#allocation2 + $0x80]]
    %v182 = vstv %s181
    %v183 = vmul.f32 %v145, %v182
    %v184 = vmul.f32 %v146, %v182
    %v185 = vmul.f32 %v147, %v182
    %v186 = vmul.f32 %v148, %v182
    %v187 = vmul.f32 %v149, %v182
    %v188 = vmul.f32 %v150, %v182
    %v189 = vmul.f32 %v151, %v182
    %v190 = vmul.f32 %v152, %v182
    %s191 = sld [smem:[#allocation4 + $0x1]]
    %v192 = vstv %s191
    %v193 = vadd.f32 %v183, %v192
    %v194 = vadd.f32 %v184, %v192
    %v195 = vadd.f32 %v185, %v192
    %v196 = vadd.f32 %v186, %v192
    %v197 = vadd.f32 %v187, %v192
    %v198 = vadd.f32 %v188, %v192
    %v199 = vadd.f32 %v189, %v192
    %v200 = vadd.f32 %v190, %v192
    %v201 = vmax.f32 %v193, 0.0
    %v202 = vmax.f32 %v194, 0.0
    %v203 = vmax.f32 %v195, 0.0
    %v204 = vmax.f32 %v196, 0.0
    %v205 = vmax.f32 %v197, 0.0
    %v206 = vmax.f32 %v198, 0.0
    %v207 = vmax.f32 %v199, 0.0
    %v208 = vmax.f32 %v200, 0.0
    %s209 = sld [smem:[#allocation2 + $0x100]]
    %v210 = vstv %s209
    %v211 = vmul.f32 %v145, %v210
    %v212 = vmul.f32 %v146, %v210
    %v213 = vmul.f32 %v147, %v210
    %v214 = vmul.f32 %v148, %v210
    %v215 = vmul.f32 %v149, %v210
    %v216 = vmul.f32 %v150, %v210
    %v217 = vmul.f32 %v151, %v210
    %v218 = vmul.f32 %v152, %v210
    %s219 = sld [smem:[#allocation4 + $0x2]]
    %v220 = vstv %s219
    %v221 = vadd.f32 %v211, %v220
    %v222 = vadd.f32 %v212, %v220
    %v223 = vadd.f32 %v213, %v220
    %v224 = vadd.f32 %v214, %v220
    %v225 = vadd.f32 %v215, %v220
    %v226 = vadd.f32 %v216, %v220
    %v227 = vadd.f32 %v217, %v220
    %v228 = vadd.f32 %v218, %v220
    %v229 = vmax.f32 %v221, 0.0
    %v230 = vmax.f32 %v222, 0.0
    %v231 = vmax.f32 %v223, 0.0
    %v232 = vmax.f32 %v224, 0.0
    %v233 = vmax.f32 %v225, 0.0
    %v234 = vmax.f32 %v226, 0.0
    %v235 = vmax.f32 %v227, 0.0
    %v236 = vmax.f32 %v228, 0.0
    %s237 = sld [smem:[#allocation2 + $0x180]]
    %v238 = vstv %s237
    %v239 = vmul.f32 %v145, %v238
    %v240 = vmul.f32 %v146, %v238
    %v241 = vmul.f32 %v147, %v238
    %v242 = vmul.f32 %v148, %v238
    %v243 = vmul.f32 %v149, %v238
    %v244 = vmul.f32 %v150, %v238
    %v245 = vmul.f32 %v151, %v238
    %v246 = vmul.f32 %v152, %v238
    %s247 = sld [smem:[#allocation4 + $0x3]]
    %v248 = vstv %s247
    %v249 = vadd.f32 %v239, %v248
    %v250 = vadd.f32 %v240, %v248
    %v251 = vadd.f32 %v241, %v248
    %v252 = vadd.f32 %v242, %v248
    %v253 = vadd.f32 %v243, %v248
    %v254 = vadd.f32 %v244, %v248
    %v255 = vadd.f32 %v245, %v248
    %v256 = vadd.f32 %v246, %v248
    %v257 = vmax.f32 %v249, 0.0
    %v258 = vmax.f32 %v250, 0.0
    %v259 = vmax.f32 %v251, 0.0
    %v260 = vmax.f32 %v252, 0.0
    %v261 = vmax.f32 %v253, 0.0
    %v262 = vmax.f32 %v254, 0.0
    %v263 = vmax.f32 %v255, 0.0
    %v264 = vmax.f32 %v256, 0.0
    %s265 = sld [smem:[#allocation2 + $0x200]]
    %v266 = vstv %s265
    %v267 = vmul.f32 %v145, %v266
    %v268 = vmul.f32 %v146, %v266
    %v269 = vmul.f32 %v147, %v266
    %v270 = vmul.f32 %v148, %v266
    %v271 = vmul.f32 %v149, %v266
    %v272 = vmul.f32 %v150, %v266
    %v273 = vmul.f32 %v151, %v266
    %v274 = vmul.f32 %v152, %v266
    %s275 = sld [smem:[#allocation4 + $0x4]]
    %v276 = vstv %s275
    %v277 = vadd.f32 %v267, %v276
    %v278 = vadd.f32 %v268, %v276
    %v279 = vadd.f32 %v269, %v276
    %v280 = vadd.f32 %v270, %v276
    %v281 = vadd.f32 %v271, %v276
    %v282 = vadd.f32 %v272, %v276
    %v283 = vadd.f32 %v273, %v276
    %v284 = vadd.f32 %v274, %v276
    %v285 = vmax.f32 %v277, 0.0
    %v286 = vmax.f32 %v278, 0.0
    %v287 = vmax.f32 %v279, 0.0
    %v288 = vmax.f32 %v280, 0.0
    %v289 = vmax.f32 %v281, 0.0
    %v290 = vmax.f32 %v282, 0.0
    %v291 = vmax.f32 %v283, 0.0
    %v292 = vmax.f32 %v284, 0.0
    %s293 = sld [smem:[#allocation2 + $0x280]]
    %v294 = vstv %s293
    %v295 = vmul.f32 %v145, %v294
    %v296 = vmul.f32 %v146, %v294
    %v297 = vmul.f32 %v147, %v294
    %v298 = vmul.f32 %v148, %v294
    %v299 = vmul.f32 %v149, %v294
    %v300 = vmul.f32 %v150, %v294
    %v301 = vmul.f32 %v151, %v294
    %v302 = vmul.f32 %v152, %v294
    %s303 = sld [smem:[#allocation4 + $0x5]]
    %v304 = vstv %s303
    %v305 = vadd.f32 %v295, %v304
    %v306 = vadd.f32 %v296, %v304
    %v307 = vadd.f32 %v297, %v304
    %v308 = vadd.f32 %v298, %v304
    %v309 = vadd.f32 %v299, %v304
    %v310 = vadd.f32 %v300, %v304
    %v311 = vadd.f32 %v301, %v304
    %v312 = vadd.f32 %v302, %v304
    %v313 = vmax.f32 %v305, 0.0
    %v314 = vmax.f32 %v306, 0.0
    %v315 = vmax.f32 %v307, 0.0
    %v316 = vmax.f32 %v308, 0.0
    %v317 = vmax.f32 %v309, 0.0
    %v318 = vmax.f32 %v310, 0.0
    %v319 = vmax.f32 %v311, 0.0
    %v320 = vmax.f32 %v312, 0.0
    %s321 = sld [smem:[#allocation2 + $0x300]]
    %v322 = vstv %s321
    %v323 = vmul.f32 %v145, %v322
    %v324 = vmul.f32 %v146, %v322
    %v325 = vmul.f32 %v147, %v322
    %v326 = vmul.f32 %v148, %v322
    %v327 = vmul.f32 %v149, %v322
    %v328 = vmul.f32 %v150, %v322
    %v329 = vmul.f32 %v151, %v322
    %v330 = vmul.f32 %v152, %v322
    %s331 = sld [smem:[#allocation4 + $0x6]]
    %v332 = vstv %s331
    %v333 = vadd.f32 %v323, %v332
    %v334 = vadd.f32 %v324, %v332
    %v335 = vadd.f32 %v325, %v332
    %v336 = vadd.f32 %v326, %v332
    %v337 = vadd.f32 %v327, %v332
    %v338 = vadd.f32 %v328, %v332
    %v339 = vadd.f32 %v329, %v332
    %v340 = vadd.f32 %v330, %v332
    %v341 = vmax.f32 %v333, 0.0
    %v342 = vmax.f32 %v334, 0.0
    %v343 = vmax.f32 %v335, 0.0
    %v344 = vmax.f32 %v336, 0.0
    %v345 = vmax.f32 %v337, 0.0
    %v346 = vmax.f32 %v338, 0.0
    %v347 = vmax.f32 %v339, 0.0
    %v348 = vmax.f32 %v340, 0.0
    %s349 = sld [smem:[#allocation2 + $0x380]]
    %v350 = vstv %s349
    %v351 = vmul.f32 %v145, %v350
    %v352 = vmul.f32 %v146, %v350
    %v353 = vmul.f32 %v147, %v350
    %v354 = vmul.f32 %v148, %v350
    %v355 = vmul.f32 %v149, %v350
    %v356 = vmul.f32 %v150, %v350
    %v357 = vmul.f32 %v151, %v350
    %v358 = vmul.f32 %v152, %v350
    %s359 = sld [smem:[#allocation4 + $0x7]]
    %v360 = vstv %s359
    %v361 = vadd.f32 %v351, %v360
    %v362 = vadd.f32 %v352, %v360
    %v363 = vadd.f32 %v353, %v360
    %v364 = vadd.f32 %v354, %v360
    %v365 = vadd.f32 %v355, %v360
    %v366 = vadd.f32 %v356, %v360
    %v367 = vadd.f32 %v357, %v360
    %v368 = vadd.f32 %v358, %v360
    %v369 = vmax.f32 %v361, 0.0
    %v370 = vmax.f32 %v362, 0.0
    %v371 = vmax.f32 %v363, 0.0
    %v372 = vmax.f32 %v364, 0.0
    %v373 = vmax.f32 %v365, 0.0
    %v374 = vmax.f32 %v366, 0.0
    %v375 = vmax.f32 %v367, 0.0
    %v376 = vmax.f32 %v368, 0.0
    %s377 = sld [smem:[#allocation6]]
    %v378 = vstv %s377
    %v379 = vmul.f32 %v173, %v378
    %v380 = vmul.f32 %v174, %v378
    %v381 = vmul.f32 %v175, %v378
    %v382 = vmul.f32 %v176, %v378
    %v383 = vmul.f32 %v177, %v378
    %v384 = vmul.f32 %v178, %v378
    %v385 = vmul.f32 %v179, %v378
    %v386 = vmul.f32 %v180, %v378
    %s387 = sld [smem:[#allocation7]]
    %v388 = vstv %s387
    %v389 = vadd.f32 %v379, %v388
    %v390 = vadd.f32 %v380, %v388
    %v391 = vadd.f32 %v381, %v388
    %v392 = vadd.f32 %v382, %v388
    %v393 = vadd.f32 %v383, %v388
    %v394 = vadd.f32 %v384, %v388
    %v395 = vadd.f32 %v385, %v388
    %v396 = vadd.f32 %v386, %v388
    %s397 = sld [smem:[#allocation6 + $0x1]]
    %v398 = vstv %s397
    %v399 = vmul.f32 %v201, %v398
    %v400 = vmul.f32 %v202, %v398
    %v401 = vmul.f32 %v203, %v398
    %v402 = vmul.f32 %v204, %v398
    %v403 = vmul.f32 %v205, %v398
    %v404 = vmul.f32 %v206, %v398
    %v405 = vmul.f32 %v207, %v398
    %v406 = vmul.f32 %v208, %v398
    %v407 = vadd.f32 %v389, %v399
    %v408 = vadd.f32 %v390, %v400
    %v409 = vadd.f32 %v391, %v401
    %v410 = vadd.f32 %v392, %v402
    %v411 = vadd.f32 %v393, %v403
    %v412 = vadd.f32 %v394, %v404
    %v413 = vadd.f32 %v395, %v405
    %v414 = vadd.f32 %v396, %v406
    %s415 = sld [smem:[#allocation6 + $0x2]]
    %v416 = vstv %s415
    %v417 = vmul.f32 %v229, %v416
    %v418 = vmul.f32 %v230, %v416
    %v419 = vmul.f32 %v231, %v416
    %v420 = vmul.f32 %v232, %v416
    %v421 = vmul.f32 %v233, %v416
    %v422 = vmul.f32 %v234, %v416
    %v423 = vmul.f32 %v235, %v416
    %v424 = vmul.f32 %v236, %v416
    %v425 = vadd.f32 %v407, %v417
    %v426 = vadd.f32 %v408, %v418
    %v427 = vadd.f32 %v409, %v419
    %v428 = vadd.f32 %v410, %v420
    %v429 = vadd.f32 %v411, %v421
    %v430 = vadd.f32 %v412, %v422
    %v431 = vadd.f32 %v413, %v423
    %v432 = vadd.f32 %v414, %v424
    %s433 = sld [smem:[#allocation6 + $0x3]]
    %v434 = vstv %s433
    %v435 = vmul.f32 %v257, %v434
    %v436 = vmul.f32 %v258, %v434
    %v437 = vmul.f32 %v259, %v434
    %v438 = vmul.f32 %v260, %v434
    %v439 = vmul.f32 %v261, %v434
    %v440 = vmul.f32 %v262, %v434
    %v441 = vmul.f32 %v263, %v434
    %v442 = vmul.f32 %v264, %v434
    %v443 = vadd.f32 %v425, %v435
    %v444 = vadd.f32 %v426, %v436
    %v445 = vadd.f32 %v427, %v437
    %v446 = vadd.f32 %v428, %v438
    %v447 = vadd.f32 %v429, %v439
    %v448 = vadd.f32 %v430, %v440
    %v449 = vadd.f32 %v431, %v441
    %v450 = vadd.f32 %v432, %v442
    %s451 = sld [smem:[#allocation6 + $0x4]]
    %v452 = vstv %s451
    %v453 = vmul.f32 %v285, %v452
    %v454 = vmul.f32 %v286, %v452
    %v455 = vmul.f32 %v287, %v452
    %v456 = vmul.f32 %v288, %v452
    %v457 = vmul.f32 %v289, %v452
    %v458 = vmul.f32 %v290, %v452
    %v459 = vmul.f32 %v291, %v452
    %v460 = vmul.f32 %v292, %v452
    %v461 = vadd.f32 %v443, %v453
    %v462 = vadd.f32 %v444, %v454
    %v463 = vadd.f32 %v445, %v455
    %v464 = vadd.f32 %v446, %v456
    %v465 = vadd.f32 %v447, %v457
    %v466 = vadd.f32 %v448, %v458
    %v467 = vadd.f32 %v449, %v459
    %v468 = vadd.f32 %v450, %v460
    %s469 = sld [smem:[#allocation6 + $0x5]]
    %v470 = vstv %s469
    %v471 = vmul.f32 %v313, %v470
    %v472 = vmul.f32 %v314, %v470
    %v473 = vmul.f32 %v315, %v470
    %v474 = vmul.f32 %v316, %v470
    %v475 = vmul.f32 %v317, %v470
    %v476 = vmul.f32 %v318, %v470
    %v477 = vmul.f32 %v319, %v470
    %v478 = vmul.f32 %v320, %v470
    %v479 = vadd.f32 %v461, %v471
    %v480 = vadd.f32 %v462, %v472
    %v481 = vadd.f32 %v463, %v473
    %v482 = vadd.f32 %v464, %v474
    %v483 = vadd.f32 %v465, %v475
    %v484 = vadd.f32 %v466, %v476
    %v485 = vadd.f32 %v467, %v477
    %v486 = vadd.f32 %v468, %v478
    %s487 = sld [smem:[#allocation6 + $0x6]]
    %v488 = vstv %s487
    %v489 = vmul.f32 %v341, %v488
    %v490 = vmul.f32 %v342, %v488
    %v491 = vmul.f32 %v343, %v488
    %v492 = vmul.f32 %v344, %v488
    %v493 = vmul.f32 %v345, %v488
    %v494 = vmul.f32 %v346, %v488
    %v495 = vmul.f32 %v347, %v488
    %v496 = vmul.f32 %v348, %v488
    %v497 = vadd.f32 %v479, %v489
    %v498 = vadd.f32 %v480, %v490
    %v499 = vadd.f32 %v481, %v491
    %v500 = vadd.f32 %v482, %v492
    %v501 = vadd.f32 %v483, %v493
    %v502 = vadd.f32 %v484, %v494
    %v503 = vadd.f32 %v485, %v495
    %v504 = vadd.f32 %v486, %v496
    %s505 = sld [smem:[#allocation6 + $0x7]]
    %v506 = vstv %s505
    %v507 = vmul.f32 %v369, %v506
    %v508 = vmul.f32 %v370, %v506
    %v509 = vmul.f32 %v371, %v506
    %v510 = vmul.f32 %v372, %v506
    %v511 = vmul.f32 %v373, %v506
    %v512 = vmul.f32 %v374, %v506
    %v513 = vmul.f32 %v375, %v506
    %v514 = vmul.f32 %v376, %v506
    %v515 = vadd.f32 %v497, %v507
    %v516 = vadd.f32 %v498, %v508
    %v517 = vadd.f32 %v499, %v509
    %v518 = vadd.f32 %v500, %v510
    %v519 = vadd.f32 %v501, %v511
    %v520 = vadd.f32 %v502, %v512
    %v521 = vadd.f32 %v503, %v513
    %v522 = vadd.f32 %v504, %v514
    %v523 = vmax.f32 %v515, 0.0
    %v524 = vmax.f32 %v516, 0.0
    %v525 = vmax.f32 %v517, 0.0
    %v526 = vmax.f32 %v518, 0.0
    %v527 = vmax.f32 %v519, 0.0
    %v528 = vmax.f32 %v520, 0.0
    %v529 = vmax.f32 %v521, 0.0
    %v530 = vmax.f32 %v522, 0.0
    %s531 = sld [smem:[#allocation6 + $0x80]]
    %v532 = vstv %s531
    %v533 = vmul.f32 %v173, %v532
    %v534 = vmul.f32 %v174, %v532
    %v535 = vmul.f32 %v175, %v532
    %v536 = vmul.f32 %v176, %v532
    %v537 = vmul.f32 %v177, %v532
    %v538 = vmul.f32 %v178, %v532
    %v539 = vmul.f32 %v179, %v532
    %v540 = vmul.f32 %v180, %v532
    %s541 = sld [smem:[#allocation7 + $0x1]]
    %v542 = vstv %s541
    %v543 = vadd.f32 %v533, %v542
    %v544 = vadd.f32 %v534, %v542
    %v545 = vadd.f32 %v535, %v542
    %v546 = vadd.f32 %v536, %v542
    %v547 = vadd.f32 %v537, %v542
    %v548 = vadd.f32 %v538, %v542
    %v549 = vadd.f32 %v539, %v542
    %v550 = vadd.f32 %v540, %v542
    %s551 = sld [smem:[#allocation6 + $0x81]]
    %v552 = vstv %s551
    %v553 = vmul.f32 %v201, %v552
    %v554 = vmul.f32 %v202, %v552
    %v555 = vmul.f32 %v203, %v552
    %v556 = vmul.f32 %v204, %v552
    %v557 = vmul.f32 %v205, %v552
    %v558 = vmul.f32 %v206, %v552
    %v559 = vmul.f32 %v207, %v552
    %v560 = vmul.f32 %v208, %v552
    %v561 = vadd.f32 %v543, %v553
    %v562 = vadd.f32 %v544, %v554
    %v563 = vadd.f32 %v545, %v555
    %v564 = vadd.f32 %v546, %v556
    %v565 = vadd.f32 %v547, %v557
    %v566 = vadd.f32 %v548, %v558
    %v567 = vadd.f32 %v549, %v559
    %v568 = vadd.f32 %v550, %v560
    %s569 = sld [smem:[#allocation6 + $0x82]]
    %v570 = vstv %s569
    %v571 = vmul.f32 %v229, %v570
    %v572 = vmul.f32 %v230, %v570
    %v573 = vmul.f32 %v231, %v570
    %v574 = vmul.f32 %v232, %v570
    %v575 = vmul.f32 %v233, %v570
    %v576 = vmul.f32 %v234, %v570
    %v577 = vmul.f32 %v235, %v570
    %v578 = vmul.f32 %v236, %v570
    %v579 = vadd.f32 %v561, %v571
    %v580 = vadd.f32 %v562, %v572
    %v581 = vadd.f32 %v563, %v573
    %v582 = vadd.f32 %v564, %v574
    %v583 = vadd.f32 %v565, %v575
    %v584 = vadd.f32 %v566, %v576
    %v585 = vadd.f32 %v567, %v577
    %v586 = vadd.f32 %v568, %v578
    %s587 = sld [smem:[#allocation6 + $0x83]]
    %v588 = vstv %s587
    %v589 = vmul.f32 %v257, %v588
    %v590 = vmul.f32 %v258, %v588
    %v591 = vmul.f32 %v259, %v588
    %v592 = vmul.f32 %v260, %v588
    %v593 = vmul.f32 %v261, %v588
    %v594 = vmul.f32 %v262, %v588
    %v595 = vmul.f32 %v263, %v588
    %v596 = vmul.f32 %v264, %v588
    %v597 = vadd.f32 %v579, %v589
    %v598 = vadd.f32 %v580, %v590
    %v599 = vadd.f32 %v581, %v591
    %v600 = vadd.f32 %v582, %v592
    %v601 = vadd.f32 %v583, %v593
    %v602 = vadd.f32 %v584, %v594
    %v603 = vadd.f32 %v585, %v595
    %v604 = vadd.f32 %v586, %v596
    %s605 = sld [smem:[#allocation6 + $0x84]]
    %v606 = vstv %s605
    %v607 = vmul.f32 %v285, %v606
    %v608 = vmul.f32 %v286, %v606
    %v609 = vmul.f32 %v287, %v606
    %v610 = vmul.f32 %v288, %v606
    %v611 = vmul.f32 %v289, %v606
    %v612 = vmul.f32 %v290, %v606
    %v613 = vmul.f32 %v291, %v606
    %v614 = vmul.f32 %v292, %v606
    %v615 = vadd.f32 %v597, %v607
    %v616 = vadd.f32 %v598, %v608
    %v617 = vadd.f32 %v599, %v609
    %v618 = vadd.f32 %v600, %v610
    %v619 = vadd.f32 %v601, %v611
    %v620 = vadd.f32 %v602, %v612
    %v621 = vadd.f32 %v603, %v613
    %v622 = vadd.f32 %v604, %v614
    %s623 = sld [smem:[#allocation6 + $0x85]]
    %v624 = vstv %s623
    %v625 = vmul.f32 %v313, %v624
    %v626 = vmul.f32 %v314, %v624
    %v627 = vmul.f32 %v315, %v624
    %v628 = vmul.f32 %v316, %v624
    %v629 = vmul.f32 %v317, %v624
    %v630 = vmul.f32 %v318, %v624
    %v631 = vmul.f32 %v319, %v624
    %v632 = vmul.f32 %v320, %v624
    %v633 = vadd.f32 %v615, %v625
    %v634 = vadd.f32 %v616, %v626
    %v635 = vadd.f32 %v617, %v627
    %v636 = vadd.f32 %v618, %v628
    %v637 = vadd.f32 %v619, %v629
    %v638 = vadd.f32 %v620, %v630
    %v639 = vadd.f32 %v621, %v631
    %v640 = vadd.f32 %v622, %v632
    %s641 = sld [smem:[#allocation6 + $0x86]]
    %v642 = vstv %s641
    %v643 = vmul.f32 %v341, %v642
    %v644 = vmul.f32 %v342, %v642
    %v645 = vmul.f32 %v343, %v642
    %v646 = vmul.f32 %v344, %v642
    %v647 = vmul.f32 %v345, %v642
    %v648 = vmul.f32 %v346, %v642
    %v649 = vmul.f32 %v347, %v642
    %v650 = vmul.f32 %v348, %v642
    %v651 = vadd.f32 %v633, %v643
    %v652 = vadd.f32 %v634, %v644
    %v653 = vadd.f32 %v635, %v645
    %v654 = vadd.f32 %v636, %v646
    %v655 = vadd.f32 %v637, %v647
    %v656 = vadd.f32 %v638, %v648
    %v657 = vadd.f32 %v639, %v649
    %v658 = vadd.f32 %v640, %v650
    %s659 = sld [smem:[#allocation6 + $0x87]]
    %v660 = vstv %s659
    %v661 = vmul.f32 %v369, %v660
    %v662 = vmul.f32 %v370, %v660
    %v663 = vmul.f32 %v371, %v660
    %v664 = vmul.f32 %v372, %v660
    %v665 = vmul.f32 %v373, %v660
    %v666 = vmul.f32 %v374, %v660
    %v667 = vmul.f32 %v375, %v660
    %v668 = vmul.f32 %v376, %v660
    %v669 = vadd.f32 %v651, %v661
    %v670 = vadd.f32 %v652, %v662
    %v671 = vadd.f32 %v653, %v663
    %v672 = vadd.f32 %v654, %v664
    %v673 = vadd.f32 %v655, %v665
    %v674 = vadd.f32 %v656, %v666
    %v675 = vadd.f32 %v657, %v667
    %v676 = vadd.f32 %v658, %v668
    %v677 = vmax.f32 %v669, 0.0
    %v678 = vmax.f32 %v670, 0.0
    %v679 = vmax.f32 %v671, 0.0
    %v680 = vmax.f32 %v672, 0.0
    %v681 = vmax.f32 %v673, 0.0
    %v682 = vmax.f32 %v674, 0.0
    %v683 = vmax.f32 %v675, 0.0
    %v684 = vmax.f32 %v676, 0.0
    %s685 = sld [smem:[#allocation6 + $0x100]]
    %v686 = vstv %s685
    %v687 = vmul.f32 %v173, %v686
    %v688 = vmul.f32 %v174, %v686
    %v689 = vmul.f32 %v175, %v686
    %v690 = vmul.f32 %v176, %v686
    %v691 = vmul.f32 %v177, %v686
    %v692 = vmul.f32 %v178, %v686
    %v693 = vmul.f32 %v179, %v686
    %v694 = vmul.f32 %v180, %v686
    %s695 = sld [smem:[#allocation7 + $0x2]]
    %v696 = vstv %s695
    %v697 = vadd.f32 %v687, %v696
    %v698 = vadd.f32 %v688, %v696
    %v699 = vadd.f32 %v689, %v696
    %v700 = vadd.f32 %v690, %v696
    %v701 = vadd.f32 %v691, %v696
    %v702 = vadd.f32 %v692, %v696
    %v703 = vadd.f32 %v693, %v696
    %v704 = vadd.f32 %v694, %v696
    %s705 = sld [smem:[#allocation6 + $0x101]]
    %v706 = vstv %s705
    %v707 = vmul.f32 %v201, %v706
    %v708 = vmul.f32 %v202, %v706
    %v709 = vmul.f32 %v203, %v706
    %v710 = vmul.f32 %v204, %v706
    %v711 = vmul.f32 %v205, %v706
    %v712 = vmul.f32 %v206, %v706
    %v713 = vmul.f32 %v207, %v706
    %v714 = vmul.f32 %v208, %v706
    %v715 = vadd.f32 %v697, %v707
    %v716 = vadd.f32 %v698, %v708
    %v717 = vadd.f32 %v699, %v709
    %v718 = vadd.f32 %v700, %v710
    %v719 = vadd.f32 %v701, %v711
    %v720 = vadd.f32 %v702, %v712
    %v721 = vadd.f32 %v703, %v713
    %v722 = vadd.f32 %v704, %v714
    %s723 = sld [smem:[#allocation6 + $0x102]]
    %v724 = vstv %s723
    %v725 = vmul.f32 %v229, %v724
    %v726 = vmul.f32 %v230, %v724
    %v727 = vmul.f32 %v231, %v724
    %v728 = vmul.f32 %v232, %v724
    %v729 = vmul.f32 %v233, %v724
    %v730 = vmul.f32 %v234, %v724
    %v731 = vmul.f32 %v235, %v724
    %v732 = vmul.f32 %v236, %v724
    %v733 = vadd.f32 %v715, %v725
    %v734 = vadd.f32 %v716, %v726
    %v735 = vadd.f32 %v717, %v727
    %v736 = vadd.f32 %v718, %v728
    %v737 = vadd.f32 %v719, %v729
    %v738 = vadd.f32 %v720, %v730
    %v739 = vadd.f32 %v721, %v731
    %v740 = vadd.f32 %v722, %v732
    %s741 = sld [smem:[#allocation6 + $0x103]]
    %v742 = vstv %s741
    %v743 = vmul.f32 %v257, %v742
    %v744 = vmul.f32 %v258, %v742
    %v745 = vmul.f32 %v259, %v742
    %v746 = vmul.f32 %v260, %v742
    %v747 = vmul.f32 %v261, %v742
    %v748 = vmul.f32 %v262, %v742
    %v749 = vmul.f32 %v263, %v742
    %v750 = vmul.f32 %v264, %v742
    %v751 = vadd.f32 %v733, %v743
    %v752 = vadd.f32 %v734, %v744
    %v753 = vadd.f32 %v735, %v745
    %v754 = vadd.f32 %v736, %v746
    %v755 = vadd.f32 %v737, %v747
    %v756 = vadd.f32 %v738, %v748
    %v757 = vadd.f32 %v739, %v749
    %v758 = vadd.f32 %v740, %v750
    %s759 = sld [smem:[#allocation6 + $0x104]]
    %v760 = vstv %s759
    %v761 = vmul.f32 %v285, %v760
    %v762 = vmul.f32 %v286, %v760
    %v763 = vmul.f32 %v287, %v760
    %v764 = vmul.f32 %v288, %v760
    %v765 = vmul.f32 %v289, %v760
    %v766 = vmul.f32 %v290, %v760
    %v767 = vmul.f32 %v291, %v760
    %v768 = vmul.f32 %v292, %v760
    %v769 = vadd.f32 %v751, %v761
    %v770 = vadd.f32 %v752, %v762
    %v771 = vadd.f32 %v753, %v763
    %v772 = vadd.f32 %v754, %v764
    %v773 = vadd.f32 %v755, %v765
    %v774 = vadd.f32 %v756, %v766
    %v775 = vadd.f32 %v757, %v767
    %v776 = vadd.f32 %v758, %v768
    %s777 = sld [smem:[#allocation6 + $0x105]]
    %v778 = vstv %s777
    %v779 = vmul.f32 %v313, %v778
    %v780 = vmul.f32 %v314, %v778
    %v781 = vmul.f32 %v315, %v778
    %v782 = vmul.f32 %v316, %v778
    %v783 = vmul.f32 %v317, %v778
    %v784 = vmul.f32 %v318, %v778
    %v785 = vmul.f32 %v319, %v778
    %v786 = vmul.f32 %v320, %v778
    %v787 = vadd.f32 %v769, %v779
    %v788 = vadd.f32 %v770, %v780
    %v789 = vadd.f32 %v771, %v781
    %v790 = vadd.f32 %v772, %v782
    %v791 = vadd.f32 %v773, %v783
    %v792 = vadd.f32 %v774, %v784
    %v793 = vadd.f32 %v775, %v785
    %v794 = vadd.f32 %v776, %v786
    %s795 = sld [smem:[#allocation6 + $0x106]]
    %v796 = vstv %s795
    %v797 = vmul.f32 %v341, %v796
    %v798 = vmul.f32 %v342, %v796
    %v799 = vmul.f32 %v343, %v796
    %v800 = vmul.f32 %v344, %v796
    %v801 = vmul.f32 %v345, %v796
    %v802 = vmul.f32 %v346, %v796
    %v803 = vmul.f32 %v347, %v796
    %v804 = vmul.f32 %v348, %v796
    %v805 = vadd.f32 %v787, %v797
    %v806 = vadd.f32 %v788, %v798
    %v807 = vadd.f32 %v789, %v799
    %v808 = vadd.f32 %v790, %v800
    %v809 = vadd.f32 %v791, %v801
    %v810 = vadd.f32 %v792, %v802
    %v811 = vadd.f32 %v793, %v803
    %v812 = vadd.f32 %v794, %v804
    %s813 = sld [smem:[#allocation6 + $0x107]]
    %v814 = vstv %s813
    %v815 = vmul.f32 %v369, %v814
    %v816 = vmul.f32 %v370, %v814
    %v817 = vmul.f32 %v371, %v814
    %v818 = vmul.f32 %v372, %v814
    %v819 = vmul.f32 %v373, %v814
    %v820 = vmul.f32 %v374, %v814
    %v821 = vmul.f32 %v375, %v814
    %v822 = vmul.f32 %v376, %v814
    %v823 = vadd.f32 %v805, %v815
    %v824 = vadd.f32 %v806, %v816
    %v825 = vadd.f32 %v807, %v817
    %v826 = vadd.f32 %v808, %v818
    %v827 = vadd.f32 %v809, %v819
    %v828 = vadd.f32 %v810, %v820
    %v829 = vadd.f32 %v811, %v821
    %v830 = vadd.f32 %v812, %v822
    %v831 = vmax.f32 %v823, 0.0
    %v832 = vmax.f32 %v824, 0.0
    %v833 = vmax.f32 %v825, 0.0
    %v834 = vmax.f32 %v826, 0.0
    %v835 = vmax.f32 %v827, 0.0
    %v836 = vmax.f32 %v828, 0.0
    %v837 = vmax.f32 %v829, 0.0
    %v838 = vmax.f32 %v830, 0.0
    %s839 = sld [smem:[#allocation6 + $0x180]]
    %v840 = vstv %s839
    %v841 = vmul.f32 %v173, %v840
    %v842 = vmul.f32 %v174, %v840
    %v843 = vmul.f32 %v175, %v840
    %v844 = vmul.f32 %v176, %v840
    %v845 = vmul.f32 %v177, %v840
    %v846 = vmul.f32 %v178, %v840
    %v847 = vmul.f32 %v179, %v840
    %v848 = vmul.f32 %v180, %v840
    %s849 = sld [smem:[#allocation7 + $0x3]]
    %v850 = vstv %s849
    %v851 = vadd.f32 %v841, %v850
    %v852 = vadd.f32 %v842, %v850
    %v853 = vadd.f32 %v843, %v850
    %v854 = vadd.f32 %v844, %v850
    %v855 = vadd.f32 %v845, %v850
    %v856 = vadd.f32 %v846, %v850
    %v857 = vadd.f32 %v847, %v850
    %v858 = vadd.f32 %v848, %v850
    %s859 = sld [smem:[#allocation6 + $0x181]]
    %v860 = vstv %s859
    %v861 = vmul.f32 %v201, %v860
    %v862 = vmul.f32 %v202, %v860
    %v863 = vmul.f32 %v203, %v860
    %v864 = vmul.f32 %v204, %v860
    %v865 = vmul.f32 %v205, %v860
    %v866 = vmul.f32 %v206, %v860
    %v867 = vmul.f32 %v207, %v860
    %v868 = vmul.f32 %v208, %v860
    %v869 = vadd.f32 %v851, %v861
    %v870 = vadd.f32 %v852, %v862
    %v871 = vadd.f32 %v853, %v863
    %v872 = vadd.f32 %v854, %v864
    %v873 = vadd.f32 %v855, %v865
    %v874 = vadd.f32 %v856, %v866
    %v875 = vadd.f32 %v857, %v867
    %v876 = vadd.f32 %v858, %v868
    %s877 = sld [smem:[#allocation6 + $0x182]]
    %v878 = vstv %s877
    %v879 = vmul.f32 %v229, %v878
    %v880 = vmul.f32 %v230, %v878
    %v881 = vmul.f32 %v231, %v878
    %v882 = vmul.f32 %v232, %v878
    %v883 = vmul.f32 %v233, %v878
    %v884 = vmul.f32 %v234, %v878
    %v885 = vmul.f32 %v235, %v878
    %v886 = vmul.f32 %v236, %v878
    %v887 = vadd.f32 %v869, %v879
    %v888 = vadd.f32 %v870, %v880
    %v889 = vadd.f32 %v871, %v881
    %v890 = vadd.f32 %v872, %v882
    %v891 = vadd.f32 %v873, %v883
    %v892 = vadd.f32 %v874, %v884
    %v893 = vadd.f32 %v875, %v885
    %v894 = vadd.f32 %v876, %v886
    %s895 = sld [smem:[#allocation6 + $0x183]]
    %v896 = vstv %s895
    %v897 = vmul.f32 %v257, %v896
    %v898 = vmul.f32 %v258, %v896
    %v899 = vmul.f32 %v259, %v896
    %v900 = vmul.f32 %v260, %v896
    %v901 = vmul.f32 %v261, %v896
    %v902 = vmul.f32 %v262, %v896
    %v903 = vmul.f32 %v263, %v896
    %v904 = vmul.f32 %v264, %v896
    %v905 = vadd.f32 %v887, %v897
    %v906 = vadd.f32 %v888, %v898
    %v907 = vadd.f32 %v889, %v899
    %v908 = vadd.f32 %v890, %v900
    %v909 = vadd.f32 %v891, %v901
    %v910 = vadd.f32 %v892, %v902
    %v911 = vadd.f32 %v893, %v903
    %v912 = vadd.f32 %v894, %v904
    %s913 = sld [smem:[#allocation6 + $0x184]]
    %v914 = vstv %s913
    %v915 = vmul.f32 %v285, %v914
    %v916 = vmul.f32 %v286, %v914
    %v917 = vmul.f32 %v287, %v914
    %v918 = vmul.f32 %v288, %v914
    %v919 = vmul.f32 %v289, %v914
    %v920 = vmul.f32 %v290, %v914
    %v921 = vmul.f32 %v291, %v914
    %v922 = vmul.f32 %v292, %v914
    %v923 = vadd.f32 %v905, %v915
    %v924 = vadd.f32 %v906, %v916
    %v925 = vadd.f32 %v907, %v917
    %v926 = vadd.f32 %v908, %v918
    %v927 = vadd.f32 %v909, %v919
    %v928 = vadd.f32 %v910, %v920
    %v929 = vadd.f32 %v911, %v921
    %v930 = vadd.f32 %v912, %v922
    %s931 = sld [smem:[#allocation6 + $0x185]]
    %v932 = vstv %s931
    %v933 = vmul.f32 %v313, %v932
    %v934 = vmul.f32 %v314, %v932
    %v935 = vmul.f32 %v315, %v932
    %v936 = vmul.f32 %v316, %v932
    %v937 = vmul.f32 %v317, %v932
    %v938 = vmul.f32 %v318, %v932
    %v939 = vmul.f32 %v319, %v932
    %v940 = vmul.f32 %v320, %v932
    %v941 = vadd.f32 %v923, %v933
    %v942 = vadd.f32 %v924, %v934
    %v943 = vadd.f32 %v925, %v935
    %v944 = vadd.f32 %v926, %v936
    %v945 = vadd.f32 %v927, %v937
    %v946 = vadd.f32 %v928, %v938
    %v947 = vadd.f32 %v929, %v939
    %v948 = vadd.f32 %v930, %v940
    %s949 = sld [smem:[#allocation6 + $0x186]]
    %v950 = vstv %s949
    %v951 = vmul.f32 %v341, %v950
    %v952 = vmul.f32 %v342, %v950
    %v953 = vmul.f32 %v343, %v950
    %v954 = vmul.f32 %v344, %v950
    %v955 = vmul.f32 %v345, %v950
    %v956 = vmul.f32 %v346, %v950
    %v957 = vmul.f32 %v347, %v950
    %v958 = vmul.f32 %v348, %v950
    %v959 = vadd.f32 %v941, %v951
    %v960 = vadd.f32 %v942, %v952
    %v961 = vadd.f32 %v943, %v953
    %v962 = vadd.f32 %v944, %v954
    %v963 = vadd.f32 %v945, %v955
    %v964 = vadd.f32 %v946, %v956
    %v965 = vadd.f32 %v947, %v957
    %v966 = vadd.f32 %v948, %v958
    %s967 = sld [smem:[#allocation6 + $0x187]]
    %v968 = vstv %s967
    %v969 = vmul.f32 %v369, %v968
    %v970 = vmul.f32 %v370, %v968
    %v971 = vmul.f32 %v371, %v968
    %v972 = vmul.f32 %v372, %v968
    %v973 = vmul.f32 %v373, %v968
    %v974 = vmul.f32 %v374, %v968
    %v975 = vmul.f32 %v375, %v968
    %v976 = vmul.f32 %v376, %v968
    %v977 = vadd.f32 %v959, %v969
    %v978 = vadd.f32 %v960, %v970
    %v979 = vadd.f32 %v961, %v971
    %v980 = vadd.f32 %v962, %v972
    %v981 = vadd.f32 %v963, %v973
    %v982 = vadd.f32 %v964, %v974
    %v983 = vadd.f32 %v965, %v975
    %v984 = vadd.f32 %v966, %v976
    %v985 = vmax.f32 %v977, 0.0
    %v986 = vmax.f32 %v978, 0.0
    %v987 = vmax.f32 %v979, 0.0
    %v988 = vmax.f32 %v980, 0.0
    %v989 = vmax.f32 %v981, 0.0
    %v990 = vmax.f32 %v982, 0.0
    %v991 = vmax.f32 %v983, 0.0
    %v992 = vmax.f32 %v984, 0.0
    %s993 = sld [smem:[#allocation6 + $0x200]]
    %v994 = vstv %s993
    %v995 = vmul.f32 %v173, %v994
    %v996 = vmul.f32 %v174, %v994
    %v997 = vmul.f32 %v175, %v994
    %v998 = vmul.f32 %v176, %v994
    %v999 = vmul.f32 %v177, %v994
    %v1000 = vmul.f32 %v178, %v994
    %v1001 = vmul.f32 %v179, %v994
    %v1002 = vmul.f32 %v180, %v994
    %s1003 = sld [smem:[#allocation7 + $0x4]]
    %v1004 = vstv %s1003
    %v1005 = vadd.f32 %v995, %v1004
    %v1006 = vadd.f32 %v996, %v1004
    %v1007 = vadd.f32 %v997, %v1004
    %v1008 = vadd.f32 %v998, %v1004
    %v1009 = vadd.f32 %v999, %v1004
    %v1010 = vadd.f32 %v1000, %v1004
    %v1011 = vadd.f32 %v1001, %v1004
    %v1012 = vadd.f32 %v1002, %v1004
    %s1013 = sld [smem:[#allocation6 + $0x201]]
    %v1014 = vstv %s1013
    %v1015 = vmul.f32 %v201, %v1014
    %v1016 = vmul.f32 %v202, %v1014
    %v1017 = vmul.f32 %v203, %v1014
    %v1018 = vmul.f32 %v204, %v1014
    %v1019 = vmul.f32 %v205, %v1014
    %v1020 = vmul.f32 %v206, %v1014
    %v1021 = vmul.f32 %v207, %v1014
    %v1022 = vmul.f32 %v208, %v1014
    %v1023 = vadd.f32 %v1005, %v1015
    %v1024 = vadd.f32 %v1006, %v1016
    %v1025 = vadd.f32 %v1007, %v1017
    %v1026 = vadd.f32 %v1008, %v1018
    %v1027 = vadd.f32 %v1009, %v1019
    %v1028 = vadd.f32 %v1010, %v1020
    %v1029 = vadd.f32 %v1011, %v1021
    %v1030 = vadd.f32 %v1012, %v1022
    %s1031 = sld [smem:[#allocation6 + $0x202]]
    %v1032 = vstv %s1031
    %v1033 = vmul.f32 %v229, %v1032
    %v1034 = vmul.f32 %v230, %v1032
    %v1035 = vmul.f32 %v231, %v1032
    %v1036 = vmul.f32 %v232, %v1032
    %v1037 = vmul.f32 %v233, %v1032
    %v1038 = vmul.f32 %v234, %v1032
    %v1039 = vmul.f32 %v235, %v1032
    %v1040 = vmul.f32 %v236, %v1032
    %v1041 = vadd.f32 %v1023, %v1033
    %v1042 = vadd.f32 %v1024, %v1034
    %v1043 = vadd.f32 %v1025, %v1035
    %v1044 = vadd.f32 %v1026, %v1036
    %v1045 = vadd.f32 %v1027, %v1037
    %v1046 = vadd.f32 %v1028, %v1038
    %v1047 = vadd.f32 %v1029, %v1039
    %v1048 = vadd.f32 %v1030, %v1040
    %s1049 = sld [smem:[#allocation6 + $0x203]]
    %v1050 = vstv %s1049
    %v1051 = vmul.f32 %v257, %v1050
    %v1052 = vmul.f32 %v258, %v1050
    %v1053 = vmul.f32 %v259, %v1050
    %v1054 = vmul.f32 %v260, %v1050
    %v1055 = vmul.f32 %v261, %v1050
    %v1056 = vmul.f32 %v262, %v1050
    %v1057 = vmul.f32 %v263, %v1050
    %v1058 = vmul.f32 %v264, %v1050
    %v1059 = vadd.f32 %v1041, %v1051
    %v1060 = vadd.f32 %v1042, %v1052
    %v1061 = vadd.f32 %v1043, %v1053
    %v1062 = vadd.f32 %v1044, %v1054
    %v1063 = vadd.f32 %v1045, %v1055
    %v1064 = vadd.f32 %v1046, %v1056
    %v1065 = vadd.f32 %v1047, %v1057
    %v1066 = vadd.f32 %v1048, %v1058
    %s1067 = sld [smem:[#allocation6 + $0x204]]
    %v1068 = vstv %s1067
    %v1069 = vmul.f32 %v285, %v1068
    %v1070 = vmul.f32 %v286, %v1068
    %v1071 = vmul.f32 %v287, %v1068
    %v1072 = vmul.f32 %v288, %v1068
    %v1073 = vmul.f32 %v289, %v1068
    %v1074 = vmul.f32 %v290, %v1068
    %v1075 = vmul.f32 %v291, %v1068
    %v1076 = vmul.f32 %v292, %v1068
    %v1077 = vadd.f32 %v1059, %v1069
    %v1078 = vadd.f32 %v1060, %v1070
    %v1079 = vadd.f32 %v1061, %v1071
    %v1080 = vadd.f32 %v1062, %v1072
    %v1081 = vadd.f32 %v1063, %v1073
    %v1082 = vadd.f32 %v1064, %v1074
    %v1083 = vadd.f32 %v1065, %v1075
    %v1084 = vadd.f32 %v1066, %v1076
    %s1085 = sld [smem:[#allocation6 + $0x205]]
    %v1086 = vstv %s1085
    %v1087 = vmul.f32 %v313, %v1086
    %v1088 = vmul.f32 %v314, %v1086
    %v1089 = vmul.f32 %v315, %v1086
    %v1090 = vmul.f32 %v316, %v1086
    %v1091 = vmul.f32 %v317, %v1086
    %v1092 = vmul.f32 %v318, %v1086
    %v1093 = vmul.f32 %v319, %v1086
    %v1094 = vmul.f32 %v320, %v1086
    %v1095 = vadd.f32 %v1077, %v1087
    %v1096 = vadd.f32 %v1078, %v1088
    %v1097 = vadd.f32 %v1079, %v1089
    %v1098 = vadd.f32 %v1080, %v1090
    %v1099 = vadd.f32 %v1081, %v1091
    %v1100 = vadd.f32 %v1082, %v1092
    %v1101 = vadd.f32 %v1083, %v1093
    %v1102 = vadd.f32 %v1084, %v1094
    %s1103 = sld [smem:[#allocation6 + $0x206]]
    %v1104 = vstv %s1103
    %v1105 = vmul.f32 %v341, %v1104
    %v1106 = vmul.f32 %v342, %v1104
    %v1107 = vmul.f32 %v343, %v1104
    %v1108 = vmul.f32 %v344, %v1104
    %v1109 = vmul.f32 %v345, %v1104
    %v1110 = vmul.f32 %v346, %v1104
    %v1111 = vmul.f32 %v347, %v1104
    %v1112 = vmul.f32 %v348, %v1104
    %v1113 = vadd.f32 %v1095, %v1105
    %v1114 = vadd.f32 %v1096, %v1106
    %v1115 = vadd.f32 %v1097, %v1107
    %v1116 = vadd.f32 %v1098, %v1108
    %v1117 = vadd.f32 %v1099, %v1109
    %v1118 = vadd.f32 %v1100, %v1110
    %v1119 = vadd.f32 %v1101, %v1111
    %v1120 = vadd.f32 %v1102, %v1112
    %s1121 = sld [smem:[#allocation6 + $0x207]]
    %v1122 = vstv %s1121
    %v1123 = vmul.f32 %v369, %v1122
    %v1124 = vmul.f32 %v370, %v1122
    %v1125 = vmul.f32 %v371, %v1122
    %v1126 = vmul.f32 %v372, %v1122
    %v1127 = vmul.f32 %v373, %v1122
    %v1128 = vmul.f32 %v374, %v1122
    %v1129 = vmul.f32 %v375, %v1122
    %v1130 = vmul.f32 %v376, %v1122
    %v1131 = vadd.f32 %v1113, %v1123
    %v1132 = vadd.f32 %v1114, %v1124
    %v1133 = vadd.f32 %v1115, %v1125
    %v1134 = vadd.f32 %v1116, %v1126
    %v1135 = vadd.f32 %v1117, %v1127
    %v1136 = vadd.f32 %v1118, %v1128
    %v1137 = vadd.f32 %v1119, %v1129
    %v1138 = vadd.f32 %v1120, %v1130
    %v1139 = vmax.f32 %v1131, 0.0
    %v1140 = vmax.f32 %v1132, 0.0
    %v1141 = vmax.f32 %v1133, 0.0
    %v1142 = vmax.f32 %v1134, 0.0
    %v1143 = vmax.f32 %v1135, 0.0
    %v1144 = vmax.f32 %v1136, 0.0
    %v1145 = vmax.f32 %v1137, 0.0
    %v1146 = vmax.f32 %v1138, 0.0
    %s1147 = sld [smem:[#allocation6 + $0x280]]
    %v1148 = vstv %s1147
    %v1149 = vmul.f32 %v173, %v1148
    %v1150 = vmul.f32 %v174, %v1148
    %v1151 = vmul.f32 %v175, %v1148
    %v1152 = vmul.f32 %v176, %v1148
    %v1153 = vmul.f32 %v177, %v1148
    %v1154 = vmul.f32 %v178, %v1148
    %v1155 = vmul.f32 %v179, %v1148
    %v1156 = vmul.f32 %v180, %v1148
    %s1157 = sld [smem:[#allocation7 + $0x5]]
    %v1158 = vstv %s1157
    %v1159 = vadd.f32 %v1149, %v1158
    %v1160 = vadd.f32 %v1150, %v1158
    %v1161 = vadd.f32 %v1151, %v1158
    %v1162 = vadd.f32 %v1152, %v1158
    %v1163 = vadd.f32 %v1153, %v1158
    %v1164 = vadd.f32 %v1154, %v1158
    %v1165 = vadd.f32 %v1155, %v1158
    %v1166 = vadd.f32 %v1156, %v1158
    %s1167 = sld [smem:[#allocation6 + $0x281]]
    %v1168 = vstv %s1167
    %v1169 = vmul.f32 %v201, %v1168
    %v1170 = vmul.f32 %v202, %v1168
    %v1171 = vmul.f32 %v203, %v1168
    %v1172 = vmul.f32 %v204, %v1168
    %v1173 = vmul.f32 %v205, %v1168
    %v1174 = vmul.f32 %v206, %v1168
    %v1175 = vmul.f32 %v207, %v1168
    %v1176 = vmul.f32 %v208, %v1168
    %v1177 = vadd.f32 %v1159, %v1169
    %v1178 = vadd.f32 %v1160, %v1170
    %v1179 = vadd.f32 %v1161, %v1171
    %v1180 = vadd.f32 %v1162, %v1172
    %v1181 = vadd.f32 %v1163, %v1173
    %v1182 = vadd.f32 %v1164, %v1174
    %v1183 = vadd.f32 %v1165, %v1175
    %v1184 = vadd.f32 %v1166, %v1176
    %s1185 = sld [smem:[#allocation6 + $0x282]]
    %v1186 = vstv %s1185
    %v1187 = vmul.f32 %v229, %v1186
    %v1188 = vmul.f32 %v230, %v1186
    %v1189 = vmul.f32 %v231, %v1186
    %v1190 = vmul.f32 %v232, %v1186
    %v1191 = vmul.f32 %v233, %v1186
    %v1192 = vmul.f32 %v234, %v1186
    %v1193 = vmul.f32 %v235, %v1186
    %v1194 = vmul.f32 %v236, %v1186
    %v1195 = vadd.f32 %v1177, %v1187
    %v1196 = vadd.f32 %v1178, %v1188
    %v1197 = vadd.f32 %v1179, %v1189
    %v1198 = vadd.f32 %v1180, %v1190
    %v1199 = vadd.f32 %v1181, %v1191
    %v1200 = vadd.f32 %v1182, %v1192
    %v1201 = vadd.f32 %v1183, %v1193
    %v1202 = vadd.f32 %v1184, %v1194
    %s1203 = sld [smem:[#allocation6 + $0x283]]
    %v1204 = vstv %s1203
    %v1205 = vmul.f32 %v257, %v1204
    %v1206 = vmul.f32 %v258, %v1204
    %v1207 = vmul.f32 %v259, %v1204
    %v1208 = vmul.f32 %v260, %v1204
    %v1209 = vmul.f32 %v261, %v1204
    %v1210 = vmul.f32 %v262, %v1204
    %v1211 = vmul.f32 %v263, %v1204
    %v1212 = vmul.f32 %v264, %v1204
    %v1213 = vadd.f32 %v1195, %v1205
    %v1214 = vadd.f32 %v1196, %v1206
    %v1215 = vadd.f32 %v1197, %v1207
    %v1216 = vadd.f32 %v1198, %v1208
    %v1217 = vadd.f32 %v1199, %v1209
    %v1218 = vadd.f32 %v1200, %v1210
    %v1219 = vadd.f32 %v1201, %v1211
    %v1220 = vadd.f32 %v1202, %v1212
    %s1221 = sld [smem:[#allocation6 + $0x284]]
    %v1222 = vstv %s1221
    %v1223 = vmul.f32 %v285, %v1222
    %v1224 = vmul.f32 %v286, %v1222
    %v1225 = vmul.f32 %v287, %v1222
    %v1226 = vmul.f32 %v288, %v1222
    %v1227 = vmul.f32 %v289, %v1222
    %v1228 = vmul.f32 %v290, %v1222
    %v1229 = vmul.f32 %v291, %v1222
    %v1230 = vmul.f32 %v292, %v1222
    %v1231 = vadd.f32 %v1213, %v1223
    %v1232 = vadd.f32 %v1214, %v1224
    %v1233 = vadd.f32 %v1215, %v1225
    %v1234 = vadd.f32 %v1216, %v1226
    %v1235 = vadd.f32 %v1217, %v1227
    %v1236 = vadd.f32 %v1218, %v1228
    %v1237 = vadd.f32 %v1219, %v1229
    %v1238 = vadd.f32 %v1220, %v1230
    %s1239 = sld [smem:[#allocation6 + $0x285]]
    %v1240 = vstv %s1239
    %v1241 = vmul.f32 %v313, %v1240
    %v1242 = vmul.f32 %v314, %v1240
    %v1243 = vmul.f32 %v315, %v1240
    %v1244 = vmul.f32 %v316, %v1240
    %v1245 = vmul.f32 %v317, %v1240
    %v1246 = vmul.f32 %v318, %v1240
    %v1247 = vmul.f32 %v319, %v1240
    %v1248 = vmul.f32 %v320, %v1240
    %v1249 = vadd.f32 %v1231, %v1241
    %v1250 = vadd.f32 %v1232, %v1242
    %v1251 = vadd.f32 %v1233, %v1243
    %v1252 = vadd.f32 %v1234, %v1244
    %v1253 = vadd.f32 %v1235, %v1245
    %v1254 = vadd.f32 %v1236, %v1246
    %v1255 = vadd.f32 %v1237, %v1247
    %v1256 = vadd.f32 %v1238, %v1248
    %s1257 = sld [smem:[#allocation6 + $0x286]]
    %v1258 = vstv %s1257
    %v1259 = vmul.f32 %v341, %v1258
    %v1260 = vmul.f32 %v342, %v1258
    %v1261 = vmul.f32 %v343, %v1258
    %v1262 = vmul.f32 %v344, %v1258
    %v1263 = vmul.f32 %v345, %v1258
    %v1264 = vmul.f32 %v346, %v1258
    %v1265 = vmul.f32 %v347, %v1258
    %v1266 = vmul.f32 %v348, %v1258
    %v1267 = vadd.f32 %v1249, %v1259
    %v1268 = vadd.f32 %v1250, %v1260
    %v1269 = vadd.f32 %v1251, %v1261
    %v1270 = vadd.f32 %v1252, %v1262
    %v1271 = vadd.f32 %v1253, %v1263
    %v1272 = vadd.f32 %v1254, %v1264
    %v1273 = vadd.f32 %v1255, %v1265
    %v1274 = vadd.f32 %v1256, %v1266
    %s1275 = sld [smem:[#allocation6 + $0x287]]
    %v1276 = vstv %s1275
    %v1277 = vmul.f32 %v369, %v1276
    %v1278 = vmul.f32 %v370, %v1276
    %v1279 = vmul.f32 %v371, %v1276
    %v1280 = vmul.f32 %v372, %v1276
    %v1281 = vmul.f32 %v373, %v1276
    %v1282 = vmul.f32 %v374, %v1276
    %v1283 = vmul.f32 %v375, %v1276
    %v1284 = vmul.f32 %v376, %v1276
    %v1285 = vadd.f32 %v1267, %v1277
    %v1286 = vadd.f32 %v1268, %v1278
    %v1287 = vadd.f32 %v1269, %v1279
    %v1288 = vadd.f32 %v1270, %v1280
    %v1289 = vadd.f32 %v1271, %v1281
    %v1290 = vadd.f32 %v1272, %v1282
    %v1291 = vadd.f32 %v1273, %v1283
    %v1292 = vadd.f32 %v1274, %v1284
    %v1293 = vmax.f32 %v1285, 0.0
    %v1294 = vmax.f32 %v1286, 0.0
    %v1295 = vmax.f32 %v1287, 0.0
    %v1296 = vmax.f32 %v1288, 0.0
    %v1297 = vmax.f32 %v1289, 0.0
    %v1298 = vmax.f32 %v1290, 0.0
    %v1299 = vmax.f32 %v1291, 0.0
    %v1300 = vmax.f32 %v1292, 0.0
    %s1301 = sld [smem:[#allocation6 + $0x300]]
    %v1302 = vstv %s1301
    %v1303 = vmul.f32 %v173, %v1302
    %v1304 = vmul.f32 %v174, %v1302
    %v1305 = vmul.f32 %v175, %v1302
    %v1306 = vmul.f32 %v176, %v1302
    %v1307 = vmul.f32 %v177, %v1302
    %v1308 = vmul.f32 %v178, %v1302
    %v1309 = vmul.f32 %v179, %v1302
    %v1310 = vmul.f32 %v180, %v1302
    %s1311 = sld [smem:[#allocation7 + $0x6]]
    %v1312 = vstv %s1311
    %v1313 = vadd.f32 %v1303, %v1312
    %v1314 = vadd.f32 %v1304, %v1312
    %v1315 = vadd.f32 %v1305, %v1312
    %v1316 = vadd.f32 %v1306, %v1312
    %v1317 = vadd.f32 %v1307, %v1312
    %v1318 = vadd.f32 %v1308, %v1312
    %v1319 = vadd.f32 %v1309, %v1312
    %v1320 = vadd.f32 %v1310, %v1312
    %s1321 = sld [smem:[#allocation6 + $0x301]]
    %v1322 = vstv %s1321
    %v1323 = vmul.f32 %v201, %v1322
    %v1324 = vmul.f32 %v202, %v1322
    %v1325 = vmul.f32 %v203, %v1322
    %v1326 = vmul.f32 %v204, %v1322
    %v1327 = vmul.f32 %v205, %v1322
    %v1328 = vmul.f32 %v206, %v1322
    %v1329 = vmul.f32 %v207, %v1322
    %v1330 = vmul.f32 %v208, %v1322
    %v1331 = vadd.f32 %v1313, %v1323
    %v1332 = vadd.f32 %v1314, %v1324
    %v1333 = vadd.f32 %v1315, %v1325
    %v1334 = vadd.f32 %v1316, %v1326
    %v1335 = vadd.f32 %v1317, %v1327
    %v1336 = vadd.f32 %v1318, %v1328
    %v1337 = vadd.f32 %v1319, %v1329
    %v1338 = vadd.f32 %v1320, %v1330
    %s1339 = sld [smem:[#allocation6 + $0x302]]
    %v1340 = vstv %s1339
    %v1341 = vmul.f32 %v229, %v1340
    %v1342 = vmul.f32 %v230, %v1340
    %v1343 = vmul.f32 %v231, %v1340
    %v1344 = vmul.f32 %v232, %v1340
    %v1345 = vmul.f32 %v233, %v1340
    %v1346 = vmul.f32 %v234, %v1340
    %v1347 = vmul.f32 %v235, %v1340
    %v1348 = vmul.f32 %v236, %v1340
    %v1349 = vadd.f32 %v1331, %v1341
    %v1350 = vadd.f32 %v1332, %v1342
    %v1351 = vadd.f32 %v1333, %v1343
    %v1352 = vadd.f32 %v1334, %v1344
    %v1353 = vadd.f32 %v1335, %v1345
    %v1354 = vadd.f32 %v1336, %v1346
    %v1355 = vadd.f32 %v1337, %v1347
    %v1356 = vadd.f32 %v1338, %v1348
    %s1357 = sld [smem:[#allocation6 + $0x303]]
    %v1358 = vstv %s1357
    %v1359 = vmul.f32 %v257, %v1358
    %v1360 = vmul.f32 %v258, %v1358
    %v1361 = vmul.f32 %v259, %v1358
    %v1362 = vmul.f32 %v260, %v1358
    %v1363 = vmul.f32 %v261, %v1358
    %v1364 = vmul.f32 %v262, %v1358
    %v1365 = vmul.f32 %v263, %v1358
    %v1366 = vmul.f32 %v264, %v1358
    %v1367 = vadd.f32 %v1349, %v1359
    %v1368 = vadd.f32 %v1350, %v1360
    %v1369 = vadd.f32 %v1351, %v1361
    %v1370 = vadd.f32 %v1352, %v1362
    %v1371 = vadd.f32 %v1353, %v1363
    %v1372 = vadd.f32 %v1354, %v1364
    %v1373 = vadd.f32 %v1355, %v1365
    %v1374 = vadd.f32 %v1356, %v1366
    %s1375 = sld [smem:[#allocation6 + $0x304]]
    %v1376 = vstv %s1375
    %v1377 = vmul.f32 %v285, %v1376
    %v1378 = vmul.f32 %v286, %v1376
    %v1379 = vmul.f32 %v287, %v1376
    %v1380 = vmul.f32 %v288, %v1376
    %v1381 = vmul.f32 %v289, %v1376
    %v1382 = vmul.f32 %v290, %v1376
    %v1383 = vmul.f32 %v291, %v1376
    %v1384 = vmul.f32 %v292, %v1376
    %v1385 = vadd.f32 %v1367, %v1377
    %v1386 = vadd.f32 %v1368, %v1378
    %v1387 = vadd.f32 %v1369, %v1379
    %v1388 = vadd.f32 %v1370, %v1380
    %v1389 = vadd.f32 %v1371, %v1381
    %v1390 = vadd.f32 %v1372, %v1382
    %v1391 = vadd.f32 %v1373, %v1383
    %v1392 = vadd.f32 %v1374, %v1384
    %s1393 = sld [smem:[#allocation6 + $0x305]]
    %v1394 = vstv %s1393
    %v1395 = vmul.f32 %v313, %v1394
    %v1396 = vmul.f32 %v314, %v1394
    %v1397 = vmul.f32 %v315, %v1394
    %v1398 = vmul.f32 %v316, %v1394
    %v1399 = vmul.f32 %v317, %v1394
    %v1400 = vmul.f32 %v318, %v1394
    %v1401 = vmul.f32 %v319, %v1394
    %v1402 = vmul.f32 %v320, %v1394
    %v1403 = vadd.f32 %v1385, %v1395
    %v1404 = vadd.f32 %v1386, %v1396
    %v1405 = vadd.f32 %v1387, %v1397
    %v1406 = vadd.f32 %v1388, %v1398
    %v1407 = vadd.f32 %v1389, %v1399
    %v1408 = vadd.f32 %v1390, %v1400
    %v1409 = vadd.f32 %v1391, %v1401
    %v1410 = vadd.f32 %v1392, %v1402
    %s1411 = sld [smem:[#allocation6 + $0x306]]
    %v1412 = vstv %s1411
    %v1413 = vmul.f32 %v341, %v1412
    %v1414 = vmul.f32 %v342, %v1412
    %v1415 = vmul.f32 %v343, %v1412
    %v1416 = vmul.f32 %v344, %v1412
    %v1417 = vmul.f32 %v345, %v1412
    %v1418 = vmul.f32 %v346, %v1412
    %v1419 = vmul.f32 %v347, %v1412
    %v1420 = vmul.f32 %v348, %v1412
    %v1421 = vadd.f32 %v1403, %v1413
    %v1422 = vadd.f32 %v1404, %v1414
    %v1423 = vadd.f32 %v1405, %v1415
    %v1424 = vadd.f32 %v1406, %v1416
    %v1425 = vadd.f32 %v1407, %v1417
    %v1426 = vadd.f32 %v1408, %v1418
    %v1427 = vadd.f32 %v1409, %v1419
    %v1428 = vadd.f32 %v1410, %v1420
    %s1429 = sld [smem:[#allocation6 + $0x307]]
    %v1430 = vstv %s1429
    %v1431 = vmul.f32 %v369, %v1430
    %v1432 = vmul.f32 %v370, %v1430
    %v1433 = vmul.f32 %v371, %v1430
    %v1434 = vmul.f32 %v372, %v1430
    %v1435 = vmul.f32 %v373, %v1430
    %v1436 = vmul.f32 %v374, %v1430
    %v1437 = vmul.f32 %v375, %v1430
    %v1438 = vmul.f32 %v376, %v1430
    %v1439 = vadd.f32 %v1421, %v1431
    %v1440 = vadd.f32 %v1422, %v1432
    %v1441 = vadd.f32 %v1423, %v1433
    %v1442 = vadd.f32 %v1424, %v1434
    %v1443 = vadd.f32 %v1425, %v1435
    %v1444 = vadd.f32 %v1426, %v1436
    %v1445 = vadd.f32 %v1427, %v1437
    %v1446 = vadd.f32 %v1428, %v1438
    %v1447 = vmax.f32 %v1439, 0.0
    %v1448 = vmax.f32 %v1440, 0.0
    %v1449 = vmax.f32 %v1441, 0.0
    %v1450 = vmax.f32 %v1442, 0.0
    %v1451 = vmax.f32 %v1443, 0.0
    %v1452 = vmax.f32 %v1444, 0.0
    %v1453 = vmax.f32 %v1445, 0.0
    %v1454 = vmax.f32 %v1446, 0.0
    %s1455 = sld [smem:[#allocation6 + $0x380]]
    %v1456 = vstv %s1455
    %v1457 = vmul.f32 %v173, %v1456
    %v1458 = vmul.f32 %v174, %v1456
    %v1459 = vmul.f32 %v175, %v1456
    %v1460 = vmul.f32 %v176, %v1456
    %v1461 = vmul.f32 %v177, %v1456
    %v1462 = vmul.f32 %v178, %v1456
    %v1463 = vmul.f32 %v179, %v1456
    %v1464 = vmul.f32 %v180, %v1456
    %s1465 = sld [smem:[#allocation7 + $0x7]]
    %v1466 = vstv %s1465
    %v1467 = vadd.f32 %v1457, %v1466
    %v1468 = vadd.f32 %v1458, %v1466
    %v1469 = vadd.f32 %v1459, %v1466
    %v1470 = vadd.f32 %v1460, %v1466
    %v1471 = vadd.f32 %v1461, %v1466
    %v1472 = vadd.f32 %v1462, %v1466
    %v1473 = vadd.f32 %v1463, %v1466
    %v1474 = vadd.f32 %v1464, %v1466
    %s1475 = sld [smem:[#allocation6 + $0x381]]
    %v1476 = vstv %s1475
    %v1477 = vmul.f32 %v201, %v1476
    %v1478 = vmul.f32 %v202, %v1476
    %v1479 = vmul.f32 %v203, %v1476
    %v1480 = vmul.f32 %v204, %v1476
    %v1481 = vmul.f32 %v205, %v1476
    %v1482 = vmul.f32 %v206, %v1476
    %v1483 = vmul.f32 %v207, %v1476
    %v1484 = vmul.f32 %v208, %v1476
    %v1485 = vadd.f32 %v1467, %v1477
    %v1486 = vadd.f32 %v1468, %v1478
    %v1487 = vadd.f32 %v1469, %v1479
    %v1488 = vadd.f32 %v1470, %v1480
    %v1489 = vadd.f32 %v1471, %v1481
    %v1490 = vadd.f32 %v1472, %v1482
    %v1491 = vadd.f32 %v1473, %v1483
    %v1492 = vadd.f32 %v1474, %v1484
    %s1493 = sld [smem:[#allocation6 + $0x382]]
    %v1494 = vstv %s1493
    %v1495 = vmul.f32 %v229, %v1494
    %v1496 = vmul.f32 %v230, %v1494
    %v1497 = vmul.f32 %v231, %v1494
    %v1498 = vmul.f32 %v232, %v1494
    %v1499 = vmul.f32 %v233, %v1494
    %v1500 = vmul.f32 %v234, %v1494
    %v1501 = vmul.f32 %v235, %v1494
    %v1502 = vmul.f32 %v236, %v1494
    %v1503 = vadd.f32 %v1485, %v1495
    %v1504 = vadd.f32 %v1486, %v1496
    %v1505 = vadd.f32 %v1487, %v1497
    %v1506 = vadd.f32 %v1488, %v1498
    %v1507 = vadd.f32 %v1489, %v1499
    %v1508 = vadd.f32 %v1490, %v1500
    %v1509 = vadd.f32 %v1491, %v1501
    %v1510 = vadd.f32 %v1492, %v1502
    %s1511 = sld [smem:[#allocation6 + $0x383]]
    %v1512 = vstv %s1511
    %v1513 = vmul.f32 %v257, %v1512
    %v1514 = vmul.f32 %v258, %v1512
    %v1515 = vmul.f32 %v259, %v1512
    %v1516 = vmul.f32 %v260, %v1512
    %v1517 = vmul.f32 %v261, %v1512
    %v1518 = vmul.f32 %v262, %v1512
    %v1519 = vmul.f32 %v263, %v1512
    %v1520 = vmul.f32 %v264, %v1512
    %v1521 = vadd.f32 %v1503, %v1513
    %v1522 = vadd.f32 %v1504, %v1514
    %v1523 = vadd.f32 %v1505, %v1515
    %v1524 = vadd.f32 %v1506, %v1516
    %v1525 = vadd.f32 %v1507, %v1517
    %v1526 = vadd.f32 %v1508, %v1518
    %v1527 = vadd.f32 %v1509, %v1519
    %v1528 = vadd.f32 %v1510, %v1520
    %s1529 = sld [smem:[#allocation6 + $0x384]]
    %v1530 = vstv %s1529
    %v1531 = vmul.f32 %v285, %v1530
    %v1532 = vmul.f32 %v286, %v1530
    %v1533 = vmul.f32 %v287, %v1530
    %v1534 = vmul.f32 %v288, %v1530
    %v1535 = vmul.f32 %v289, %v1530
    %v1536 = vmul.f32 %v290, %v1530
    %v1537 = vmul.f32 %v291, %v1530
    %v1538 = vmul.f32 %v292, %v1530
    %v1539 = vadd.f32 %v1521, %v1531
    %v1540 = vadd.f32 %v1522, %v1532
    %v1541 = vadd.f32 %v1523, %v1533
    %v1542 = vadd.f32 %v1524, %v1534
    %v1543 = vadd.f32 %v1525, %v1535
    %v1544 = vadd.f32 %v1526, %v1536
    %v1545 = vadd.f32 %v1527, %v1537
    %v1546 = vadd.f32 %v1528, %v1538
    %s1547 = sld [smem:[#allocation6 + $0x385]]
    %v1548 = vstv %s1547
    %v1549 = vmul.f32 %v313, %v1548
    %v1550 = vmul.f32 %v314, %v1548
    %v1551 = vmul.f32 %v315, %v1548
    %v1552 = vmul.f32 %v316, %v1548
    %v1553 = vmul.f32 %v317, %v1548
    %v1554 = vmul.f32 %v318, %v1548
    %v1555 = vmul.f32 %v319, %v1548
    %v1556 = vmul.f32 %v320, %v1548
    %v1557 = vadd.f32 %v1539, %v1549
    %v1558 = vadd.f32 %v1540, %v1550
    %v1559 = vadd.f32 %v1541, %v1551
    %v1560 = vadd.f32 %v1542, %v1552
    %v1561 = vadd.f32 %v1543, %v1553
    %v1562 = vadd.f32 %v1544, %v1554
    %v1563 = vadd.f32 %v1545, %v1555
    %v1564 = vadd.f32 %v1546, %v1556
    %s1565 = sld [smem:[#allocation6 + $0x386]]
    %v1566 = vstv %s1565
    %v1567 = vmul.f32 %v341, %v1566
    %v1568 = vmul.f32 %v342, %v1566
    %v1569 = vmul.f32 %v343, %v1566
    %v1570 = vmul.f32 %v344, %v1566
    %v1571 = vmul.f32 %v345, %v1566
    %v1572 = vmul.f32 %v346, %v1566
    %v1573 = vmul.f32 %v347, %v1566
    %v1574 = vmul.f32 %v348, %v1566
    %v1575 = vadd.f32 %v1557, %v1567
    %v1576 = vadd.f32 %v1558, %v1568
    %v1577 = vadd.f32 %v1559, %v1569
    %v1578 = vadd.f32 %v1560, %v1570
    %v1579 = vadd.f32 %v1561, %v1571
    %v1580 = vadd.f32 %v1562, %v1572
    %v1581 = vadd.f32 %v1563, %v1573
    %v1582 = vadd.f32 %v1564, %v1574
    %s1583 = sld [smem:[#allocation6 + $0x387]]
    %v1584 = vstv %s1583
    %v1585 = vmul.f32 %v369, %v1584
    %v1586 = vmul.f32 %v370, %v1584
    %v1587 = vmul.f32 %v371, %v1584
    %v1588 = vmul.f32 %v372, %v1584
    %v1589 = vmul.f32 %v373, %v1584
    %v1590 = vmul.f32 %v374, %v1584
    %v1591 = vmul.f32 %v375, %v1584
    %v1592 = vmul.f32 %v376, %v1584
    %v1593 = vadd.f32 %v1575, %v1585
    %v1594 = vadd.f32 %v1576, %v1586
    %v1595 = vadd.f32 %v1577, %v1587
    %v1596 = vadd.f32 %v1578, %v1588
    %v1597 = vadd.f32 %v1579, %v1589
    %v1598 = vadd.f32 %v1580, %v1590
    %v1599 = vadd.f32 %v1581, %v1591
    %v1600 = vadd.f32 %v1582, %v1592
    %v1601 = vmax.f32 %v1593, 0.0
    %v1602 = vmax.f32 %v1594, 0.0
    %v1603 = vmax.f32 %v1595, 0.0
    %v1604 = vmax.f32 %v1596, 0.0
    %v1605 = vmax.f32 %v1597, 0.0
    %v1606 = vmax.f32 %v1598, 0.0
    %v1607 = vmax.f32 %v1599, 0.0
    %v1608 = vmax.f32 %v1600, 0.0
    %s1609 = sld [smem:[#allocation9]]
    %v1610 = vstv %s1609
    %v1611 = vmul.f32 %v523, %v1610
    %v1612 = vmul.f32 %v524, %v1610
    %v1613 = vmul.f32 %v525, %v1610
    %v1614 = vmul.f32 %v526, %v1610
    %v1615 = vmul.f32 %v527, %v1610
    %v1616 = vmul.f32 %v528, %v1610
    %v1617 = vmul.f32 %v529, %v1610
    %v1618 = vmul.f32 %v530, %v1610
    %s1619 = sld [smem:[#allocation10]]
    %v1620 = vstv %s1619
    %v1621 = vadd.f32 %v1611, %v1620
    %v1622 = vadd.f32 %v1612, %v1620
    %v1623 = vadd.f32 %v1613, %v1620
    %v1624 = vadd.f32 %v1614, %v1620
    %v1625 = vadd.f32 %v1615, %v1620
    %v1626 = vadd.f32 %v1616, %v1620
    %v1627 = vadd.f32 %v1617, %v1620
    %v1628 = vadd.f32 %v1618, %v1620
    %s1629 = sld [smem:[#allocation9 + $0x1]]
    %v1630 = vstv %s1629
    %v1631 = vmul.f32 %v677, %v1630
    %v1632 = vmul.f32 %v678, %v1630
    %v1633 = vmul.f32 %v679, %v1630
    %v1634 = vmul.f32 %v680, %v1630
    %v1635 = vmul.f32 %v681, %v1630
    %v1636 = vmul.f32 %v682, %v1630
    %v1637 = vmul.f32 %v683, %v1630
    %v1638 = vmul.f32 %v684, %v1630
    %v1639 = vadd.f32 %v1621, %v1631
    %v1640 = vadd.f32 %v1622, %v1632
    %v1641 = vadd.f32 %v1623, %v1633
    %v1642 = vadd.f32 %v1624, %v1634
    %v1643 = vadd.f32 %v1625, %v1635
    %v1644 = vadd.f32 %v1626, %v1636
    %v1645 = vadd.f32 %v1627, %v1637
    %v1646 = vadd.f32 %v1628, %v1638
    %s1647 = sld [smem:[#allocation9 + $0x2]]
    %v1648 = vstv %s1647
    %v1649 = vmul.f32 %v831, %v1648
    %v1650 = vmul.f32 %v832, %v1648
    %v1651 = vmul.f32 %v833, %v1648
    %v1652 = vmul.f32 %v834, %v1648
    %v1653 = vmul.f32 %v835, %v1648
    %v1654 = vmul.f32 %v836, %v1648
    %v1655 = vmul.f32 %v837, %v1648
    %v1656 = vmul.f32 %v838, %v1648
    %v1657 = vadd.f32 %v1639, %v1649
    %v1658 = vadd.f32 %v1640, %v1650
    %v1659 = vadd.f32 %v1641, %v1651
    %v1660 = vadd.f32 %v1642, %v1652
    %v1661 = vadd.f32 %v1643, %v1653
    %v1662 = vadd.f32 %v1644, %v1654
    %v1663 = vadd.f32 %v1645, %v1655
    %v1664 = vadd.f32 %v1646, %v1656
    %s1665 = sld [smem:[#allocation9 + $0x3]]
    %v1666 = vstv %s1665
    %v1667 = vmul.f32 %v985, %v1666
    %v1668 = vmul.f32 %v986, %v1666
    %v1669 = vmul.f32 %v987, %v1666
    %v1670 = vmul.f32 %v988, %v1666
    %v1671 = vmul.f32 %v989, %v1666
    %v1672 = vmul.f32 %v990, %v1666
    %v1673 = vmul.f32 %v991, %v1666
    %v1674 = vmul.f32 %v992, %v1666
    %v1675 = vadd.f32 %v1657, %v1667
    %v1676 = vadd.f32 %v1658, %v1668
    %v1677 = vadd.f32 %v1659, %v1669
    %v1678 = vadd.f32 %v1660, %v1670
    %v1679 = vadd.f32 %v1661, %v1671
    %v1680 = vadd.f32 %v1662, %v1672
    %v1681 = vadd.f32 %v1663, %v1673
    %v1682 = vadd.f32 %v1664, %v1674
    %s1683 = sld [smem:[#allocation9 + $0x4]]
    %v1684 = vstv %s1683
    %v1685 = vmul.f32 %v1139, %v1684
    %v1686 = vmul.f32 %v1140, %v1684
    %v1687 = vmul.f32 %v1141, %v1684
    %v1688 = vmul.f32 %v1142, %v1684
    %v1689 = vmul.f32 %v1143, %v1684
    %v1690 = vmul.f32 %v1144, %v1684
    %v1691 = vmul.f32 %v1145, %v1684
    %v1692 = vmul.f32 %v1146, %v1684
    %v1693 = vadd.f32 %v1675, %v1685
    %v1694 = vadd.f32 %v1676, %v1686
    %v1695 = vadd.f32 %v1677, %v1687
    %v1696 = vadd.f32 %v1678, %v1688
    %v1697 = vadd.f32 %v1679, %v1689
    %v1698 = vadd.f32 %v1680, %v1690
    %v1699 = vadd.f32 %v1681, %v1691
    %v1700 = vadd.f32 %v1682, %v1692
    %s1701 = sld [smem:[#allocation9 + $0x5]]
    %v1702 = vstv %s1701
    %v1703 = vmul.f32 %v1293, %v1702
    %v1704 = vmul.f32 %v1294, %v1702
    %v1705 = vmul.f32 %v1295, %v1702
    %v1706 = vmul.f32 %v1296, %v1702
    %v1707 = vmul.f32 %v1297, %v1702
    %v1708 = vmul.f32 %v1298, %v1702
    %v1709 = vmul.f32 %v1299, %v1702
    %v1710 = vmul.f32 %v1300, %v1702
    %v1711 = vadd.f32 %v1693, %v1703
    %v1712 = vadd.f32 %v1694, %v1704
    %v1713 = vadd.f32 %v1695, %v1705
    %v1714 = vadd.f32 %v1696, %v1706
    %v1715 = vadd.f32 %v1697, %v1707
    %v1716 = vadd.f32 %v1698, %v1708
    %v1717 = vadd.f32 %v1699, %v1709
    %v1718 = vadd.f32 %v1700, %v1710
    %s1719 = sld [smem:[#allocation9 + $0x6]]
    %v1720 = vstv %s1719
    %v1721 = vmul.f32 %v1447, %v1720
    %v1722 = vmul.f32 %v1448, %v1720
    %v1723 = vmul.f32 %v1449, %v1720
    %v1724 = vmul.f32 %v1450, %v1720
    %v1725 = vmul.f32 %v1451, %v1720
    %v1726 = vmul.f32 %v1452, %v1720
    %v1727 = vmul.f32 %v1453, %v1720
    %v1728 = vmul.f32 %v1454, %v1720
    %v1729 = vadd.f32 %v1711, %v1721
    %v1730 = vadd.f32 %v1712, %v1722
    %v1731 = vadd.f32 %v1713, %v1723
    %v1732 = vadd.f32 %v1714, %v1724
    %v1733 = vadd.f32 %v1715, %v1725
    %v1734 = vadd.f32 %v1716, %v1726
    %v1735 = vadd.f32 %v1717, %v1727
    %v1736 = vadd.f32 %v1718, %v1728
    %s1737 = sld [smem:[#allocation9 + $0x7]]
    %v1738 = vstv %s1737
    %v1739 = vmul.f32 %v1601, %v1738
    %v1740 = vmul.f32 %v1602, %v1738
    %v1741 = vmul.f32 %v1603, %v1738
    %v1742 = vmul.f32 %v1604, %v1738
    %v1743 = vmul.f32 %v1605, %v1738
    %v1744 = vmul.f32 %v1606, %v1738
    %v1745 = vmul.f32 %v1607, %v1738
    %v1746 = vmul.f32 %v1608, %v1738
    %v1747 = vadd.f32 %v1729, %v1739
    %v1748 = vadd.f32 %v1730, %v1740
    %v1749 = vadd.f32 %v1731, %v1741
    %v1750 = vadd.f32 %v1732, %v1742
    %v1751 = vadd.f32 %v1733, %v1743
    %v1752 = vadd.f32 %v1734, %v1744
    %v1753 = vadd.f32 %v1735, %v1745
    %v1754 = vadd.f32 %v1736, %v1746
    %s1755 = sld [smem:[#allocation9 + $0x80]]
    %v1756 = vstv %s1755
    %v1757 = vmul.f32 %v523, %v1756
    %v1758 = vmul.f32 %v524, %v1756
    %v1759 = vmul.f32 %v525, %v1756
    %v1760 = vmul.f32 %v526, %v1756
    %v1761 = vmul.f32 %v527, %v1756
    %v1762 = vmul.f32 %v528, %v1756
    %v1763 = vmul.f32 %v529, %v1756
    %v1764 = vmul.f32 %v530, %v1756
    %s1765 = sld [smem:[#allocation10 + $0x1]]
    %v1766 = vstv %s1765
    %v1767 = vadd.f32 %v1757, %v1766
    %v1768 = vadd.f32 %v1758, %v1766
    %v1769 = vadd.f32 %v1759, %v1766
    %v1770 = vadd.f32 %v1760, %v1766
    %v1771 = vadd.f32 %v1761, %v1766
    %v1772 = vadd.f32 %v1762, %v1766
    %v1773 = vadd.f32 %v1763, %v1766
    %v1774 = vadd.f32 %v1764, %v1766
    %s1775 = sld [smem:[#allocation9 + $0x81]]
    %v1776 = vstv %s1775
    %v1777 = vmul.f32 %v677, %v1776
    %v1778 = vmul.f32 %v678, %v1776
    %v1779 = vmul.f32 %v679, %v1776
    %v1780 = vmul.f32 %v680, %v1776
    %v1781 = vmul.f32 %v681, %v1776
    %v1782 = vmul.f32 %v682, %v1776
    %v1783 = vmul.f32 %v683, %v1776
    %v1784 = vmul.f32 %v684, %v1776
    %v1785 = vadd.f32 %v1767, %v1777
    %v1786 = vadd.f32 %v1768, %v1778
    %v1787 = vadd.f32 %v1769, %v1779
    %v1788 = vadd.f32 %v1770, %v1780
    %v1789 = vadd.f32 %v1771, %v1781
    %v1790 = vadd.f32 %v1772, %v1782
    %v1791 = vadd.f32 %v1773, %v1783
    %v1792 = vadd.f32 %v1774, %v1784
    %s1793 = sld [smem:[#allocation9 + $0x82]]
    %v1794 = vstv %s1793
    %v1795 = vmul.f32 %v831, %v1794
    %v1796 = vmul.f32 %v832, %v1794
    %v1797 = vmul.f32 %v833, %v1794
    %v1798 = vmul.f32 %v834, %v1794
    %v1799 = vmul.f32 %v835, %v1794
    %v1800 = vmul.f32 %v836, %v1794
    %v1801 = vmul.f32 %v837, %v1794
    %v1802 = vmul.f32 %v838, %v1794
    %v1803 = vadd.f32 %v1785, %v1795
    %v1804 = vadd.f32 %v1786, %v1796
    %v1805 = vadd.f32 %v1787, %v1797
    %v1806 = vadd.f32 %v1788, %v1798
    %v1807 = vadd.f32 %v1789, %v1799
    %v1808 = vadd.f32 %v1790, %v1800
    %v1809 = vadd.f32 %v1791, %v1801
    %v1810 = vadd.f32 %v1792, %v1802
    %s1811 = sld [smem:[#allocation9 + $0x83]]
    %v1812 = vstv %s1811
    %v1813 = vmul.f32 %v985, %v1812
    %v1814 = vmul.f32 %v986, %v1812
    %v1815 = vmul.f32 %v987, %v1812
    %v1816 = vmul.f32 %v988, %v1812
    %v1817 = vmul.f32 %v989, %v1812
    %v1818 = vmul.f32 %v990, %v1812
    %v1819 = vmul.f32 %v991, %v1812
    %v1820 = vmul.f32 %v992, %v1812
    %v1821 = vadd.f32 %v1803, %v1813
    %v1822 = vadd.f32 %v1804, %v1814
    %v1823 = vadd.f32 %v1805, %v1815
    %v1824 = vadd.f32 %v1806, %v1816
    %v1825 = vadd.f32 %v1807, %v1817
    %v1826 = vadd.f32 %v1808, %v1818
    %v1827 = vadd.f32 %v1809, %v1819
    %v1828 = vadd.f32 %v1810, %v1820
    %s1829 = sld [smem:[#allocation9 + $0x84]]
    %v1830 = vstv %s1829
    %v1831 = vmul.f32 %v1139, %v1830
    %v1832 = vmul.f32 %v1140, %v1830
    %v1833 = vmul.f32 %v1141, %v1830
    %v1834 = vmul.f32 %v1142, %v1830
    %v1835 = vmul.f32 %v1143, %v1830
    %v1836 = vmul.f32 %v1144, %v1830
    %v1837 = vmul.f32 %v1145, %v1830
    %v1838 = vmul.f32 %v1146, %v1830
    %v1839 = vadd.f32 %v1821, %v1831
    %v1840 = vadd.f32 %v1822, %v1832
    %v1841 = vadd.f32 %v1823, %v1833
    %v1842 = vadd.f32 %v1824, %v1834
    %v1843 = vadd.f32 %v1825, %v1835
    %v1844 = vadd.f32 %v1826, %v1836
    %v1845 = vadd.f32 %v1827, %v1837
    %v1846 = vadd.f32 %v1828, %v1838
    %s1847 = sld [smem:[#allocation9 + $0x85]]
    %v1848 = vstv %s1847
    %v1849 = vmul.f32 %v1293, %v1848
    %v1850 = vmul.f32 %v1294, %v1848
    %v1851 = vmul.f32 %v1295, %v1848
    %v1852 = vmul.f32 %v1296, %v1848
    %v1853 = vmul.f32 %v1297, %v1848
    %v1854 = vmul.f32 %v1298, %v1848
    %v1855 = vmul.f32 %v1299, %v1848
    %v1856 = vmul.f32 %v1300, %v1848
    %v1857 = vadd.f32 %v1839, %v1849
    %v1858 = vadd.f32 %v1840, %v1850
    %v1859 = vadd.f32 %v1841, %v1851
    %v1860 = vadd.f32 %v1842, %v1852
    %v1861 = vadd.f32 %v1843, %v1853
    %v1862 = vadd.f32 %v1844, %v1854
    %v1863 = vadd.f32 %v1845, %v1855
    %v1864 = vadd.f32 %v1846, %v1856
    %s1865 = sld [smem:[#allocation9 + $0x86]]
    %v1866 = vstv %s1865
    %v1867 = vmul.f32 %v1447, %v1866
    %v1868 = vmul.f32 %v1448, %v1866
    %v1869 = vmul.f32 %v1449, %v1866
    %v1870 = vmul.f32 %v1450, %v1866
    %v1871 = vmul.f32 %v1451, %v1866
    %v1872 = vmul.f32 %v1452, %v1866
    %v1873 = vmul.f32 %v1453, %v1866
    %v1874 = vmul.f32 %v1454, %v1866
    %v1875 = vadd.f32 %v1857, %v1867
    %v1876 = vadd.f32 %v1858, %v1868
    %v1877 = vadd.f32 %v1859, %v1869
    %v1878 = vadd.f32 %v1860, %v1870
    %v1879 = vadd.f32 %v1861, %v1871
    %v1880 = vadd.f32 %v1862, %v1872
    %v1881 = vadd.f32 %v1863, %v1873
    %v1882 = vadd.f32 %v1864, %v1874
    %s1883 = sld [smem:[#allocation9 + $0x87]]
    %v1884 = vstv %s1883
    %v1885 = vmul.f32 %v1601, %v1884
    %v1886 = vmul.f32 %v1602, %v1884
    %v1887 = vmul.f32 %v1603, %v1884
    %v1888 = vmul.f32 %v1604, %v1884
    %v1889 = vmul.f32 %v1605, %v1884
    %v1890 = vmul.f32 %v1606, %v1884
    %v1891 = vmul.f32 %v1607, %v1884
    %v1892 = vmul.f32 %v1608, %v1884
    %v1893 = vadd.f32 %v1875, %v1885
    %v1894 = vadd.f32 %v1876, %v1886
    %v1895 = vadd.f32 %v1877, %v1887
    %v1896 = vadd.f32 %v1878, %v1888
    %v1897 = vadd.f32 %v1879, %v1889
    %v1898 = vadd.f32 %v1880, %v1890
    %v1899 = vadd.f32 %v1881, %v1891
    %v1900 = vadd.f32 %v1882, %v1892
    %s1901 = sld [smem:[#allocation9 + $0x100]]
    %v1902 = vstv %s1901
    %v1903 = vmul.f32 %v523, %v1902
    %v1904 = vmul.f32 %v524, %v1902
    %v1905 = vmul.f32 %v525, %v1902
    %v1906 = vmul.f32 %v526, %v1902
    %v1907 = vmul.f32 %v527, %v1902
    %v1908 = vmul.f32 %v528, %v1902
    %v1909 = vmul.f32 %v529, %v1902
    %v1910 = vmul.f32 %v530, %v1902
    %s1911 = sld [smem:[#allocation10 + $0x2]]
    %v1912 = vstv %s1911
    %v1913 = vadd.f32 %v1903, %v1912
    %v1914 = vadd.f32 %v1904, %v1912
    %v1915 = vadd.f32 %v1905, %v1912
    %v1916 = vadd.f32 %v1906, %v1912
    %v1917 = vadd.f32 %v1907, %v1912
    %v1918 = vadd.f32 %v1908, %v1912
    %v1919 = vadd.f32 %v1909, %v1912
    %v1920 = vadd.f32 %v1910, %v1912
    %s1921 = sld [smem:[#allocation9 + $0x101]]
    %v1922 = vstv %s1921
    %v1923 = vmul.f32 %v677, %v1922
    %v1924 = vmul.f32 %v678, %v1922
    %v1925 = vmul.f32 %v679, %v1922
    %v1926 = vmul.f32 %v680, %v1922
    %v1927 = vmul.f32 %v681, %v1922
    %v1928 = vmul.f32 %v682, %v1922
    %v1929 = vmul.f32 %v683, %v1922
    %v1930 = vmul.f32 %v684, %v1922
    %v1931 = vadd.f32 %v1913, %v1923
    %v1932 = vadd.f32 %v1914, %v1924
    %v1933 = vadd.f32 %v1915, %v1925
    %v1934 = vadd.f32 %v1916, %v1926
    %v1935 = vadd.f32 %v1917, %v1927
    %v1936 = vadd.f32 %v1918, %v1928
    %v1937 = vadd.f32 %v1919, %v1929
    %v1938 = vadd.f32 %v1920, %v1930
    %s1939 = sld [smem:[#allocation9 + $0x102]]
    %v1940 = vstv %s1939
    %v1941 = vmul.f32 %v831, %v1940
    %v1942 = vmul.f32 %v832, %v1940
    %v1943 = vmul.f32 %v833, %v1940
    %v1944 = vmul.f32 %v834, %v1940
    %v1945 = vmul.f32 %v835, %v1940
    %v1946 = vmul.f32 %v836, %v1940
    %v1947 = vmul.f32 %v837, %v1940
    %v1948 = vmul.f32 %v838, %v1940
    %v1949 = vadd.f32 %v1931, %v1941
    %v1950 = vadd.f32 %v1932, %v1942
    %v1951 = vadd.f32 %v1933, %v1943
    %v1952 = vadd.f32 %v1934, %v1944
    %v1953 = vadd.f32 %v1935, %v1945
    %v1954 = vadd.f32 %v1936, %v1946
    %v1955 = vadd.f32 %v1937, %v1947
    %v1956 = vadd.f32 %v1938, %v1948
    %s1957 = sld [smem:[#allocation9 + $0x103]]
    %v1958 = vstv %s1957
    %v1959 = vmul.f32 %v985, %v1958
    %v1960 = vmul.f32 %v986, %v1958
    %v1961 = vmul.f32 %v987, %v1958
    %v1962 = vmul.f32 %v988, %v1958
    %v1963 = vmul.f32 %v989, %v1958
    %v1964 = vmul.f32 %v990, %v1958
    %v1965 = vmul.f32 %v991, %v1958
    %v1966 = vmul.f32 %v992, %v1958
    %v1967 = vadd.f32 %v1949, %v1959
    %v1968 = vadd.f32 %v1950, %v1960
    %v1969 = vadd.f32 %v1951, %v1961
    %v1970 = vadd.f32 %v1952, %v1962
    %v1971 = vadd.f32 %v1953, %v1963
    %v1972 = vadd.f32 %v1954, %v1964
    %v1973 = vadd.f32 %v1955, %v1965
    %v1974 = vadd.f32 %v1956, %v1966
    %s1975 = sld [smem:[#allocation9 + $0x104]]
    %v1976 = vstv %s1975
    %v1977 = vmul.f32 %v1139, %v1976
    %v1978 = vmul.f32 %v1140, %v1976
    %v1979 = vmul.f32 %v1141, %v1976
    %v1980 = vmul.f32 %v1142, %v1976
    %v1981 = vmul.f32 %v1143, %v1976
    %v1982 = vmul.f32 %v1144, %v1976
    %v1983 = vmul.f32 %v1145, %v1976
    %v1984 = vmul.f32 %v1146, %v1976
    %v1985 = vadd.f32 %v1967, %v1977
    %v1986 = vadd.f32 %v1968, %v1978
    %v1987 = vadd.f32 %v1969, %v1979
    %v1988 = vadd.f32 %v1970, %v1980
    %v1989 = vadd.f32 %v1971, %v1981
    %v1990 = vadd.f32 %v1972, %v1982
    %v1991 = vadd.f32 %v1973, %v1983
    %v1992 = vadd.f32 %v1974, %v1984
    %s1993 = sld [smem:[#allocation9 + $0x105]]
    %v1994 = vstv %s1993
    %v1995 = vmul.f32 %v1293, %v1994
    %v1996 = vmul.f32 %v1294, %v1994
    %v1997 = vmul.f32 %v1295, %v1994
    %v1998 = vmul.f32 %v1296, %v1994
    %v1999 = vmul.f32 %v1297, %v1994
    %v2000 = vmul.f32 %v1298, %v1994
    %v2001 = vmul.f32 %v1299, %v1994
    %v2002 = vmul.f32 %v1300, %v1994
    %v2003 = vadd.f32 %v1985, %v1995
    %v2004 = vadd.f32 %v1986, %v1996
    %v2005 = vadd.f32 %v1987, %v1997
    %v2006 = vadd.f32 %v1988, %v1998
    %v2007 = vadd.f32 %v1989, %v1999
    %v2008 = vadd.f32 %v1990, %v2000
    %v2009 = vadd.f32 %v1991, %v2001
    %v2010 = vadd.f32 %v1992, %v2002
    %s2011 = sld [smem:[#allocation9 + $0x106]]
    %v2012 = vstv %s2011
    %v2013 = vmul.f32 %v1447, %v2012
    %v2014 = vmul.f32 %v1448, %v2012
    %v2015 = vmul.f32 %v1449, %v2012
    %v2016 = vmul.f32 %v1450, %v2012
    %v2017 = vmul.f32 %v1451, %v2012
    %v2018 = vmul.f32 %v1452, %v2012
    %v2019 = vmul.f32 %v1453, %v2012
    %v2020 = vmul.f32 %v1454, %v2012
    %v2021 = vadd.f32 %v2003, %v2013
    %v2022 = vadd.f32 %v2004, %v2014
    %v2023 = vadd.f32 %v2005, %v2015
    %v2024 = vadd.f32 %v2006, %v2016
    %v2025 = vadd.f32 %v2007, %v2017
    %v2026 = vadd.f32 %v2008, %v2018
    %v2027 = vadd.f32 %v2009, %v2019
    %v2028 = vadd.f32 %v2010, %v2020
    %s2029 = sld [smem:[#allocation9 + $0x107]]
    %v2030 = vstv %s2029
    %v2031 = vmul.f32 %v1601, %v2030
    %v2032 = vmul.f32 %v1602, %v2030
    %v2033 = vmul.f32 %v1603, %v2030
    %v2034 = vmul.f32 %v1604, %v2030
    %v2035 = vmul.f32 %v1605, %v2030
    %v2036 = vmul.f32 %v1606, %v2030
    %v2037 = vmul.f32 %v1607, %v2030
    %v2038 = vmul.f32 %v1608, %v2030
    %v2039 = vadd.f32 %v2021, %v2031
    %v2040 = vadd.f32 %v2022, %v2032
    %v2041 = vadd.f32 %v2023, %v2033
    %v2042 = vadd.f32 %v2024, %v2034
    %v2043 = vadd.f32 %v2025, %v2035
    %v2044 = vadd.f32 %v2026, %v2036
    %v2045 = vadd.f32 %v2027, %v2037
    %v2046 = vadd.f32 %v2028, %v2038
    %v2047 = vld [vmem:[%s1] sm:$0xff]
    %v2048 = vld [vmem:[%s1 + $0x8] sm:$0xff]
    %v2049 = vld [vmem:[%s1 + $0x10] sm:$0xff]
    %v2050 = vld [vmem:[%s1 + $0x18] sm:$0xff]
    %v2051 = vld [vmem:[%s1 + $0x20] sm:$0xff]
    %v2052 = vld [vmem:[%s1 + $0x28] sm:$0xff]
    %v2053 = vld [vmem:[%s1 + $0x30] sm:$0xff]
    %v2054 = vld [vmem:[%s1 + $0x38] sm:$0xff]
    %s2055 = scalar_lea.vmem %s1, 64
    %v2056 = vld [vmem:[%s2055] sm:$0xff]
    %v2057 = vld [vmem:[%s2055 + $0x8] sm:$0xff]
    %v2058 = vld [vmem:[%s2055 + $0x10] sm:$0xff]
    %v2059 = vld [vmem:[%s2055 + $0x18] sm:$0xff]
    %v2060 = vld [vmem:[%s2055 + $0x20] sm:$0xff]
    %v2061 = vld [vmem:[%s2055 + $0x28] sm:$0xff]
    %v2062 = vld [vmem:[%s2055 + $0x30] sm:$0xff]
    %v2063 = vld [vmem:[%s2055 + $0x38] sm:$0xff]
    %s2064 = scalar_lea.vmem %s1, 128
    %v2065 = vld [vmem:[%s2064] sm:$0xff]
    %v2066 = vld [vmem:[%s2064 + $0x8] sm:$0xff]
    %v2067 = vld [vmem:[%s2064 + $0x10] sm:$0xff]
    %v2068 = vld [vmem:[%s2064 + $0x18] sm:$0xff]
    %v2069 = vld [vmem:[%s2064 + $0x20] sm:$0xff]
    %v2070 = vld [vmem:[%s2064 + $0x28] sm:$0xff]
    %v2071 = vld [vmem:[%s2064 + $0x30] sm:$0xff]
    %v2072 = vld [vmem:[%s2064 + $0x38] sm:$0xff]
    %2073 = vst [vmem:[%s11] sm:$0xff] %v1747
    %2074 = vst [vmem:[%s11 + $0x8] sm:$0xff] %v1748
    %2075 = vst [vmem:[%s11 + $0x10] sm:$0xff] %v1749
    %2076 = vst [vmem:[%s11 + $0x18] sm:$0xff] %v1750
    %2077 = vst [vmem:[%s11 + $0x20] sm:$0xff] %v1751
    %2078 = vst [vmem:[%s11 + $0x28] sm:$0xff] %v1752
    %2079 = vst [vmem:[%s11 + $0x30] sm:$0xff] %v1753
    %2080 = vst [vmem:[%s11 + $0x38] sm:$0xff] %v1754
    %s2081 = scalar_lea.vmem %s11, 64
    %2082 = vst [vmem:[%s2081] sm:$0xff] %v1893
    %2083 = vst [vmem:[%s2081 + $0x8] sm:$0xff] %v1894
    %2084 = vst [vmem:[%s2081 + $0x10] sm:$0xff] %v1895
    %2085 = vst [vmem:[%s2081 + $0x18] sm:$0xff] %v1896
    %2086 = vst [vmem:[%s2081 + $0x20] sm:$0xff] %v1897
    %2087 = vst [vmem:[%s2081 + $0x28] sm:$0xff] %v1898
    %2088 = vst [vmem:[%s2081 + $0x30] sm:$0xff] %v1899
    %2089 = vst [vmem:[%s2081 + $0x38] sm:$0xff] %v1900
    %s2090 = scalar_lea.vmem %s11, 128
    %2091 = vst [vmem:[%s2090] sm:$0xff] %v2039
    %2092 = vst [vmem:[%s2090 + $0x8] sm:$0xff] %v2040
    %2093 = vst [vmem:[%s2090 + $0x10] sm:$0xff] %v2041
    %2094 = vst [vmem:[%s2090 + $0x18] sm:$0xff] %v2042
    %2095 = vst [vmem:[%s2090 + $0x20] sm:$0xff] %v2043
    %2096 = vst [vmem:[%s2090 + $0x28] sm:$0xff] %v2044
    %2097 = vst [vmem:[%s2090 + $0x30] sm:$0xff] %v2045
    %2098 = vst [vmem:[%s2090 + $0x38] sm:$0xff] %v2046
    %s2099 = sld [smem:[#allocation12]]
    %v2100 = vstv %s2099
    %v2101 = vmul.f32 %v2047, %v2100
    %v2102 = vmul.f32 %v2048, %v2100
    %v2103 = vmul.f32 %v2049, %v2100
    %v2104 = vmul.f32 %v2050, %v2100
    %v2105 = vmul.f32 %v2051, %v2100
    %v2106 = vmul.f32 %v2052, %v2100
    %v2107 = vmul.f32 %v2053, %v2100
    %v2108 = vmul.f32 %v2054, %v2100
    %s2109 = sld [smem:[#allocation15]]
    %v2110 = vstv %s2109
    %v2111 = vadd.f32 %v2101, %v2110
    %v2112 = vadd.f32 %v2102, %v2110
    %v2113 = vadd.f32 %v2103, %v2110
    %v2114 = vadd.f32 %v2104, %v2110
    %v2115 = vadd.f32 %v2105, %v2110
    %v2116 = vadd.f32 %v2106, %v2110
    %v2117 = vadd.f32 %v2107, %v2110
    %v2118 = vadd.f32 %v2108, %v2110
    %s2119 = sld [smem:[#allocation12 + $0x1]]
    %v2120 = vstv %s2119
    %v2121 = vmul.f32 %v2056, %v2120
    %v2122 = vmul.f32 %v2057, %v2120
    %v2123 = vmul.f32 %v2058, %v2120
    %v2124 = vmul.f32 %v2059, %v2120
    %v2125 = vmul.f32 %v2060, %v2120
    %v2126 = vmul.f32 %v2061, %v2120
    %v2127 = vmul.f32 %v2062, %v2120
    %v2128 = vmul.f32 %v2063, %v2120
    %v2129 = vadd.f32 %v2111, %v2121
    %v2130 = vadd.f32 %v2112, %v2122
    %v2131 = vadd.f32 %v2113, %v2123
    %v2132 = vadd.f32 %v2114, %v2124
    %v2133 = vadd.f32 %v2115, %v2125
    %v2134 = vadd.f32 %v2116, %v2126
    %v2135 = vadd.f32 %v2117, %v2127
    %v2136 = vadd.f32 %v2118, %v2128
    %s2137 = sld [smem:[#allocation12 + $0x2]]
    %v2138 = vstv %s2137
    %v2139 = vmul.f32 %v2065, %v2138
    %v2140 = vmul.f32 %v2066, %v2138
    %v2141 = vmul.f32 %v2067, %v2138
    %v2142 = vmul.f32 %v2068, %v2138
    %v2143 = vmul.f32 %v2069, %v2138
    %v2144 = vmul.f32 %v2070, %v2138
    %v2145 = vmul.f32 %v2071, %v2138
    %v2146 = vmul.f32 %v2072, %v2138
    %v2147 = vadd.f32 %v2129, %v2139
    %v2148 = vadd.f32 %v2130, %v2140
    %v2149 = vadd.f32 %v2131, %v2141
    %v2150 = vadd.f32 %v2132, %v2142
    %v2151 = vadd.f32 %v2133, %v2143
    %v2152 = vadd.f32 %v2134, %v2144
    %v2153 = vadd.f32 %v2135, %v2145
    %v2154 = vadd.f32 %v2136, %v2146
    %s2155 = sld [smem:[#allocation13]]
    %v2156 = vstv %s2155
    %v2157 = vmul.f32 %v1747, %v2156
    %v2158 = vmul.f32 %v1748, %v2156
    %v2159 = vmul.f32 %v1749, %v2156
    %v2160 = vmul.f32 %v1750, %v2156
    %v2161 = vmul.f32 %v1751, %v2156
    %v2162 = vmul.f32 %v1752, %v2156
    %v2163 = vmul.f32 %v1753, %v2156
    %v2164 = vmul.f32 %v1754, %v2156
    %v2165 = vadd.f32 %v2147, %v2157
    %v2166 = vadd.f32 %v2148, %v2158
    %v2167 = vadd.f32 %v2149, %v2159
    %v2168 = vadd.f32 %v2150, %v2160
    %v2169 = vadd.f32 %v2151, %v2161
    %v2170 = vadd.f32 %v2152, %v2162
    %v2171 = vadd.f32 %v2153, %v2163
    %v2172 = vadd.f32 %v2154, %v2164
    %s2173 = sld [smem:[#allocation13 + $0x1]]
    %v2174 = vstv %s2173
    %v2175 = vmul.f32 %v1893, %v2174
    %v2176 = vmul.f32 %v1894, %v2174
    %v2177 = vmul.f32 %v1895, %v2174
    %v2178 = vmul.f32 %v1896, %v2174
    %v2179 = vmul.f32 %v1897, %v2174
    %v2180 = vmul.f32 %v1898, %v2174
    %v2181 = vmul.f32 %v1899, %v2174
    %v2182 = vmul.f32 %v1900, %v2174
    %v2183 = vadd.f32 %v2165, %v2175
    %v2184 = vadd.f32 %v2166, %v2176
    %v2185 = vadd.f32 %v2167, %v2177
    %v2186 = vadd.f32 %v2168, %v2178
    %v2187 = vadd.f32 %v2169, %v2179
    %v2188 = vadd.f32 %v2170, %v2180
    %v2189 = vadd.f32 %v2171, %v2181
    %v2190 = vadd.f32 %v2172, %v2182
    %s2191 = sld [smem:[#allocation13 + $0x2]]
    %v2192 = vstv %s2191
    %v2193 = vmul.f32 %v2039, %v2192
    %v2194 = vmul.f32 %v2040, %v2192
    %v2195 = vmul.f32 %v2041, %v2192
    %v2196 = vmul.f32 %v2042, %v2192
    %v2197 = vmul.f32 %v2043, %v2192
    %v2198 = vmul.f32 %v2044, %v2192
    %v2199 = vmul.f32 %v2045, %v2192
    %v2200 = vmul.f32 %v2046, %v2192
    %v2201 = vadd.f32 %v2183, %v2193
    %v2202 = vadd.f32 %v2184, %v2194
    %v2203 = vadd.f32 %v2185, %v2195
    %v2204 = vadd.f32 %v2186, %v2196
    %v2205 = vadd.f32 %v2187, %v2197
    %v2206 = vadd.f32 %v2188, %v2198
    %v2207 = vadd.f32 %v2189, %v2199
    %v2208 = vadd.f32 %v2190, %v2200
    %2209 = vst [vmem:[%s12] sm:$0xff] %v2201
    %2210 = vst [vmem:[%s12 + $0x8] sm:$0xff] %v2202
    %2211 = vst [vmem:[%s12 + $0x10] sm:$0xff] %v2203
    %2212 = vst [vmem:[%s12 + $0x18] sm:$0xff] %v2204
    %2213 = vst [vmem:[%s12 + $0x20] sm:$0xff] %v2205
    %2214 = vst [vmem:[%s12 + $0x28] sm:$0xff] %v2206
    %2215 = vst [vmem:[%s12 + $0x30] sm:$0xff] %v2207
    %2216 = vst [vmem:[%s12 + $0x38] sm:$0xff] %v2208
    %s2217 = sld [smem:[#allocation12 + $0x80]]
    %v2218 = vstv %s2217
    %v2219 = vmul.f32 %v2047, %v2218
    %v2220 = vmul.f32 %v2048, %v2218
    %v2221 = vmul.f32 %v2049, %v2218
    %v2222 = vmul.f32 %v2050, %v2218
    %v2223 = vmul.f32 %v2051, %v2218
    %v2224 = vmul.f32 %v2052, %v2218
    %v2225 = vmul.f32 %v2053, %v2218
    %v2226 = vmul.f32 %v2054, %v2218
    %s2227 = sld [smem:[#allocation15 + $0x1]]
    %v2228 = vstv %s2227
    %v2229 = vadd.f32 %v2219, %v2228
    %v2230 = vadd.f32 %v2220, %v2228
    %v2231 = vadd.f32 %v2221, %v2228
    %v2232 = vadd.f32 %v2222, %v2228
    %v2233 = vadd.f32 %v2223, %v2228
    %v2234 = vadd.f32 %v2224, %v2228
    %v2235 = vadd.f32 %v2225, %v2228
    %v2236 = vadd.f32 %v2226, %v2228
    %s2237 = sld [smem:[#allocation12 + $0x81]]
    %v2238 = vstv %s2237
    %v2239 = vmul.f32 %v2056, %v2238
    %v2240 = vmul.f32 %v2057, %v2238
    %v2241 = vmul.f32 %v2058, %v2238
    %v2242 = vmul.f32 %v2059, %v2238
    %v2243 = vmul.f32 %v2060, %v2238
    %v2244 = vmul.f32 %v2061, %v2238
    %v2245 = vmul.f32 %v2062, %v2238
    %v2246 = vmul.f32 %v2063, %v2238
    %v2247 = vadd.f32 %v2229, %v2239
    %v2248 = vadd.f32 %v2230, %v2240
    %v2249 = vadd.f32 %v2231, %v2241
    %v2250 = vadd.f32 %v2232, %v2242
    %v2251 = vadd.f32 %v2233, %v2243
    %v2252 = vadd.f32 %v2234, %v2244
    %v2253 = vadd.f32 %v2235, %v2245
    %v2254 = vadd.f32 %v2236, %v2246
    %s2255 = sld [smem:[#allocation12 + $0x82]]
    %v2256 = vstv %s2255
    %v2257 = vmul.f32 %v2065, %v2256
    %v2258 = vmul.f32 %v2066, %v2256
    %v2259 = vmul.f32 %v2067, %v2256
    %v2260 = vmul.f32 %v2068, %v2256
    %v2261 = vmul.f32 %v2069, %v2256
    %v2262 = vmul.f32 %v2070, %v2256
    %v2263 = vmul.f32 %v2071, %v2256
    %v2264 = vmul.f32 %v2072, %v2256
    %v2265 = vadd.f32 %v2247, %v2257
    %v2266 = vadd.f32 %v2248, %v2258
    %v2267 = vadd.f32 %v2249, %v2259
    %v2268 = vadd.f32 %v2250, %v2260
    %v2269 = vadd.f32 %v2251, %v2261
    %v2270 = vadd.f32 %v2252, %v2262
    %v2271 = vadd.f32 %v2253, %v2263
    %v2272 = vadd.f32 %v2254, %v2264
    %s2273 = sld [smem:[#allocation13 + $0x80]]
    %v2274 = vstv %s2273
    %v2275 = vmul.f32 %v1747, %v2274
    %v2276 = vmul.f32 %v1748, %v2274
    %v2277 = vmul.f32 %v1749, %v2274
    %v2278 = vmul.f32 %v1750, %v2274
    %v2279 = vmul.f32 %v1751, %v2274
    %v2280 = vmul.f32 %v1752, %v2274
    %v2281 = vmul.f32 %v1753, %v2274
    %v2282 = vmul.f32 %v1754, %v2274
    %v2283 = vadd.f32 %v2265, %v2275
    %v2284 = vadd.f32 %v2266, %v2276
    %v2285 = vadd.f32 %v2267, %v2277
    %v2286 = vadd.f32 %v2268, %v2278
    %v2287 = vadd.f32 %v2269, %v2279
    %v2288 = vadd.f32 %v2270, %v2280
    %v2289 = vadd.f32 %v2271, %v2281
    %v2290 = vadd.f32 %v2272, %v2282
    %s2291 = sld [smem:[#allocation13 + $0x81]]
    %v2292 = vstv %s2291
    %v2293 = vmul.f32 %v1893, %v2292
    %v2294 = vmul.f32 %v1894, %v2292
    %v2295 = vmul.f32 %v1895, %v2292
    %v2296 = vmul.f32 %v1896, %v2292
    %v2297 = vmul.f32 %v1897, %v2292
    %v2298 = vmul.f32 %v1898, %v2292
    %v2299 = vmul.f32 %v1899, %v2292
    %v2300 = vmul.f32 %v1900, %v2292
    %v2301 = vadd.f32 %v2283, %v2293
    %v2302 = vadd.f32 %v2284, %v2294
    %v2303 = vadd.f32 %v2285, %v2295
    %v2304 = vadd.f32 %v2286, %v2296
    %v2305 = vadd.f32 %v2287, %v2297
    %v2306 = vadd.f32 %v2288, %v2298
    %v2307 = vadd.f32 %v2289, %v2299
    %v2308 = vadd.f32 %v2290, %v2300
    %s2309 = sld [smem:[#allocation13 + $0x82]]
    %v2310 = vstv %s2309
    %v2311 = vmul.f32 %v2039, %v2310
    %v2312 = vmul.f32 %v2040, %v2310
    %v2313 = vmul.f32 %v2041, %v2310
    %v2314 = vmul.f32 %v2042, %v2310
    %v2315 = vmul.f32 %v2043, %v2310
    %v2316 = vmul.f32 %v2044, %v2310
    %v2317 = vmul.f32 %v2045, %v2310
    %v2318 = vmul.f32 %v2046, %v2310
    %v2319 = vadd.f32 %v2301, %v2311
    %v2320 = vadd.f32 %v2302, %v2312
    %v2321 = vadd.f32 %v2303, %v2313
    %v2322 = vadd.f32 %v2304, %v2314
    %v2323 = vadd.f32 %v2305, %v2315
    %v2324 = vadd.f32 %v2306, %v2316
    %v2325 = vadd.f32 %v2307, %v2317
    %v2326 = vadd.f32 %v2308, %v2318
    %s2327 = scalar_lea.vmem %s12, 64
    %2328 = vst [vmem:[%s2327] sm:$0xff] %v2319
    %2329 = vst [vmem:[%s2327 + $0x8] sm:$0xff] %v2320
    %2330 = vst [vmem:[%s2327 + $0x10] sm:$0xff] %v2321
    %2331 = vst [vmem:[%s2327 + $0x18] sm:$0xff] %v2322
    %2332 = vst [vmem:[%s2327 + $0x20] sm:$0xff] %v2323
    %2333 = vst [vmem:[%s2327 + $0x28] sm:$0xff] %v2324
    %2334 = vst [vmem:[%s2327 + $0x30] sm:$0xff] %v2325
    %2335 = vst [vmem:[%s2327 + $0x38] sm:$0xff] %v2326
    %s2336 = sld [smem:[#allocation12 + $0x100]]
    %v2337 = vstv %s2336
    %v2338 = vmul.f32 %v2047, %v2337
    %v2339 = vmul.f32 %v2048, %v2337
    %v2340 = vmul.f32 %v2049, %v2337
    %v2341 = vmul.f32 %v2050, %v2337
    %v2342 = vmul.f32 %v2051, %v2337
    %v2343 = vmul.f32 %v2052, %v2337
    %v2344 = vmul.f32 %v2053, %v2337
    %v2345 = vmul.f32 %v2054, %v2337
    %s2346 = sld [smem:[#allocation15 + $0x2]]
    %v2347 = vstv %s2346
    %v2348 = vadd.f32 %v2338, %v2347
    %v2349 = vadd.f32 %v2339, %v2347
    %v2350 = vadd.f32 %v2340, %v2347
    %v2351 = vadd.f32 %v2341, %v2347
    %v2352 = vadd.f32 %v2342, %v2347
    %v2353 = vadd.f32 %v2343, %v2347
    %v2354 = vadd.f32 %v2344, %v2347
    %v2355 = vadd.f32 %v2345, %v2347
    %s2356 = sld [smem:[#allocation12 + $0x101]]
    %v2357 = vstv %s2356
    %v2358 = vmul.f32 %v2056, %v2357
    %v2359 = vmul.f32 %v2057, %v2357
    %v2360 = vmul.f32 %v2058, %v2357
    %v2361 = vmul.f32 %v2059, %v2357
    %v2362 = vmul.f32 %v2060, %v2357
    %v2363 = vmul.f32 %v2061, %v2357
    %v2364 = vmul.f32 %v2062, %v2357
    %v2365 = vmul.f32 %v2063, %v2357
    %v2366 = vadd.f32 %v2348, %v2358
    %v2367 = vadd.f32 %v2349, %v2359
    %v2368 = vadd.f32 %v2350, %v2360
    %v2369 = vadd.f32 %v2351, %v2361
    %v2370 = vadd.f32 %v2352, %v2362
    %v2371 = vadd.f32 %v2353, %v2363
    %v2372 = vadd.f32 %v2354, %v2364
    %v2373 = vadd.f32 %v2355, %v2365
    %s2374 = sld [smem:[#allocation12 + $0x102]]
    %v2375 = vstv %s2374
    %v2376 = vmul.f32 %v2065, %v2375
    %v2377 = vmul.f32 %v2066, %v2375
    %v2378 = vmul.f32 %v2067, %v2375
    %v2379 = vmul.f32 %v2068, %v2375
    %v2380 = vmul.f32 %v2069, %v2375
    %v2381 = vmul.f32 %v2070, %v2375
    %v2382 = vmul.f32 %v2071, %v2375
    %v2383 = vmul.f32 %v2072, %v2375
    %v2384 = vadd.f32 %v2366, %v2376
    %v2385 = vadd.f32 %v2367, %v2377
    %v2386 = vadd.f32 %v2368, %v2378
    %v2387 = vadd.f32 %v2369, %v2379
    %v2388 = vadd.f32 %v2370, %v2380
    %v2389 = vadd.f32 %v2371, %v2381
    %v2390 = vadd.f32 %v2372, %v2382
    %v2391 = vadd.f32 %v2373, %v2383
    %s2392 = sld [smem:[#allocation13 + $0x100]]
    %v2393 = vstv %s2392
    %v2394 = vmul.f32 %v1747, %v2393
    %v2395 = vmul.f32 %v1748, %v2393
    %v2396 = vmul.f32 %v1749, %v2393
    %v2397 = vmul.f32 %v1750, %v2393
    %v2398 = vmul.f32 %v1751, %v2393
    %v2399 = vmul.f32 %v1752, %v2393
    %v2400 = vmul.f32 %v1753, %v2393
    %v2401 = vmul.f32 %v1754, %v2393
    %v2402 = vadd.f32 %v2384, %v2394
    %v2403 = vadd.f32 %v2385, %v2395
    %v2404 = vadd.f32 %v2386, %v2396
    %v2405 = vadd.f32 %v2387, %v2397
    %v2406 = vadd.f32 %v2388, %v2398
    %v2407 = vadd.f32 %v2389, %v2399
    %v2408 = vadd.f32 %v2390, %v2400
    %v2409 = vadd.f32 %v2391, %v2401
    %s2410 = sld [smem:[#allocation13 + $0x101]]
    %v2411 = vstv %s2410
    %v2412 = vmul.f32 %v1893, %v2411
    %v2413 = vmul.f32 %v1894, %v2411
    %v2414 = vmul.f32 %v1895, %v2411
    %v2415 = vmul.f32 %v1896, %v2411
    %v2416 = vmul.f32 %v1897, %v2411
    %v2417 = vmul.f32 %v1898, %v2411
    %v2418 = vmul.f32 %v1899, %v2411
    %v2419 = vmul.f32 %v1900, %v2411
    %v2420 = vadd.f32 %v2402, %v2412
    %v2421 = vadd.f32 %v2403, %v2413
    %v2422 = vadd.f32 %v2404, %v2414
    %v2423 = vadd.f32 %v2405, %v2415
    %v2424 = vadd.f32 %v2406, %v2416
    %v2425 = vadd.f32 %v2407, %v2417
    %v2426 = vadd.f32 %v2408, %v2418
    %v2427 = vadd.f32 %v2409, %v2419
    %s2428 = sld [smem:[#allocation13 + $0x102]]
    %v2429 = vstv %s2428
    %v2430 = vmul.f32 %v2039, %v2429
    %v2431 = vmul.f32 %v2040, %v2429
    %v2432 = vmul.f32 %v2041, %v2429
    %v2433 = vmul.f32 %v2042, %v2429
    %v2434 = vmul.f32 %v2043, %v2429
    %v2435 = vmul.f32 %v2044, %v2429
    %v2436 = vmul.f32 %v2045, %v2429
    %v2437 = vmul.f32 %v2046, %v2429
    %v2438 = vadd.f32 %v2420, %v2430
    %v2439 = vadd.f32 %v2421, %v2431
    %v2440 = vadd.f32 %v2422, %v2432
    %v2441 = vadd.f32 %v2423, %v2433
    %v2442 = vadd.f32 %v2424, %v2434
    %v2443 = vadd.f32 %v2425, %v2435
    %v2444 = vadd.f32 %v2426, %v2436
    %v2445 = vadd.f32 %v2427, %v2437
    %s2446 = scalar_lea.vmem %s12, 128
    %2447 = vst [vmem:[%s2446] sm:$0xff] %v2438
    %2448 = vst [vmem:[%s2446 + $0x8] sm:$0xff] %v2439
    %2449 = vst [vmem:[%s2446 + $0x10] sm:$0xff] %v2440
    %2450 = vst [vmem:[%s2446 + $0x18] sm:$0xff] %v2441
    %2451 = vst [vmem:[%s2446 + $0x20] sm:$0xff] %v2442
    %2452 = vst [vmem:[%s2446 + $0x28] sm:$0xff] %v2443
    %2453 = vst [vmem:[%s2446 + $0x30] sm:$0xff] %v2444
    %2454 = vst [vmem:[%s2446 + $0x38] sm:$0xff] %v2445
    // Predicated region
    $region82: #{forward.3} parent=1 // pred_check
      _
    $region83: #{forward.3} parent=1 // pred_check_branch
      %2456 = sbr.rel (0) target = $region85
    $region84: #{forward.3} parent=1 // pred_region
      _
    $region85: #{forward.3} parent=1 // pred_fallthru
      _
    // Predicated region
    $region86: #{forward.3} parent=1 // pred_check
      _
    $region87: #{forward.3} parent=1 // pred_check_branch
      %2458 = sbr.rel (0) target = $region89
    $region88: #{forward.3} parent=1 // pred_region
      _
    $region89: #{forward.3} parent=1 // pred_fallthru
      _
    // Predicated region
    $region90: #{forward.3} parent=1 // pred_check
      _
    $region91: #{forward.3} parent=1 // pred_check_branch
      %2460 = sbr.rel (0) target = $region93
    $region92: #{forward.3} parent=1 // pred_region
      _
    $region93: #{forward.3} parent=1 // pred_fallthru
      _
    // Predicated region
    $region94: #{forward.3} parent=1 // pred_check
      _
    $region95: #{forward.3} parent=1 // pred_check_branch
      %2462 = sbr.rel (0) target = $region97
    $region96: #{forward.3} parent=1 // pred_region
      _
    $region97: #{forward.3} parent=1 // pred_fallthru
      _
    %2463 = vsyncpa [#allocation3], 1
    %2464 = vsyncpa [#allocation5], 1
    %2465 = vsyncpa [#allocation8], 1
    %2466 = vsyncpa [#allocation11], 1
    %2467 = vsyncpa [#allocation14], 1

</llo_original>
